<compile_context>
chip_gen: v7x
topology: tpu7x:2x2x1
jax: 0.10.0
libtpu: 0.0.40
codegen_flags: <defaults>
</compile_context>

<pallas_src>
import functools

import jax
import jax.numpy as jnp
from jax.experimental import pallas as pl
from jax.experimental.pallas import tpu as pltpu


def _gat_kernel(x_ref, adj_ref, es_ref, ed_ref, w_ref, b_ref, o_ref, *,
                heads, out_c, tb, use_bf16):
    # x_ref:   [TB*N, F]   time-major node features (all sources), f32
    # adj_ref: [TM, N]     int8 adjacency (+ self loops), rows = targets, cols = sources
    # es_ref:  [H, TB, N]  source attention logits, lane-major over sources
    # ed_ref:  [TB, TM, H] target attention logits (single-lane column extract per head)
    # w_ref:   [F, H*C]    projection weight (exactly HC lanes)
    # b_ref:   [1, C]      bias
    # o_ref:   [TM, TB*C]  lane-dense output block
    H, C = heads, out_c
    TBN, _ = x_ref.shape
    N = TBN // tb
    TM = adj_ref.shape[0]

    mm_dt = jnp.bfloat16 if use_bf16 else jnp.float32

    # One batched projection for all TB timesteps (amortizes MXU fill latency).
    h_all = jnp.dot(x_ref[...].astype(mm_dt), w_ref[...].astype(mm_dt),
                    preferred_element_type=jnp.float32)          # [TB*N, H*C]

    # Additive adjacency bias, built once: adj==1 -> 0, adj==0 -> -1e30.
    neg = (adj_ref[...].astype(jnp.float32) - 1.0) * jnp.float32(1e30)   # [TM, N]

    es_all = es_ref[...]                                          # [H, TB, N]
    ed_all = ed_ref[...]                                          # [TB, TM, H]
    bias = b_ref[...]                                             # [1, C]
    inv_h = jnp.float32(1.0 / H)

    outs = []
    for t in range(tb):                      # static unroll; TB is small
        ht = h_all[t * N:(t + 1) * N, :]     # [N, HC]  sublane-contiguous slab
        acc = jnp.zeros((TM, C), jnp.float32)
        for hd in range(H):                  # static unroll; H is small
            es2 = es_all[hd, t:t + 1, :]     # [1, N]   source logits (lane-major row)
            ed2 = ed_all[t, :, hd:hd + 1]    # [TM, 1]  target logits (column)
            s = ed2 + es2                    # [TM, N]  (target i, source j)
            s = jnp.maximum(s, 0.2 * s)      # LeakyReLU(0.2)
            s = s + neg                      # adjacency mask (+ self loops)
            m = jnp.max(s, axis=-1, keepdims=True)      # lane-axis reductions (XLU)
            p = jnp.exp(s - m)                          # masked entries underflow to 0
            denom = jnp.sum(p, axis=-1, keepdims=True)  # [TM, 1]
            hh = ht[:, hd * C:(hd + 1) * C]             # [N, C]
            # Aggregate with unnormalized p; normalize afterwards in the [TM, C] domain
            # with an EUP reciprocal (avoids TM*N per-element divides).
            acc_h = jnp.dot(p.astype(mm_dt), hh.astype(mm_dt),
                            preferred_element_type=jnp.float32)   # [TM, C]
            acc = acc + acc_h * pl.reciprocal(denom, approx=True)
        outs.append(acc * inv_h + bias)      # concat=False -> mean over heads + bias

    # Single unmasked, lane-dense store instead of TB masked 32-lane partial stores.
    o_ref[...] = jnp.concatenate(outs, axis=1).astype(o_ref.dtype)


def batch_gat_forward(x, node_matrix, W, att_src, att_dst, bias, *,
                      time_blocks=1, row_blocks=1, use_bf16_matmul=False):
    """x: [N, T, in_dim]; node_matrix: [N, N] adjacency. Returns [N, T, d_model]."""
    N, T, F = x.shape
    H, C = att_src.shape
    assert W.shape == (F, H * C)
    assert T % time_blocks == 0 and N % row_blocks == 0
    TB = T // time_blocks
    TM = N // row_blocks
    # (8,128) block constraints if time / rows are split across grid steps.
    assert (TB == T) or (TB % 8 == 0 and (TB * C) % 128 == 0), (
        "time_blocks must keep TB a multiple of 8 and TB*C a multiple of 128")
    assert (TM == N) or (TM % 8 == 0), "row_blocks must keep TM a multiple of 8"

    x = x.astype(jnp.float32)
    W = W.astype(jnp.float32)
    att_src = att_src.astype(jnp.float32)
    att_dst = att_dst.astype(jnp.float32)
    bias = bias.astype(jnp.float32)

    # GATConv(add_self_loops=True): remove existing self loops, add fresh ones.
    # adj[j, i] != 0 means edge j -> i (nonzero()/.T => edge_index[0]=source), so the
    # target-major mask is adj.T.  int8 to shrink VMEM footprint and DMA traffic 4x.
    eye = jnp.eye(N, dtype=jnp.float32)
    adj_sl = jnp.asarray(node_matrix, jnp.float32) * (1.0 - eye) + eye
    adj_i8 = (adj_sl.T > 0.0).astype(jnp.int8)                     # [N(target), N(source)]

    # Fold the per-head attention reductions into tiny wrapper-side einsums:
    #   e_src = x @ (W_h @ att_src_h),  e_dst = x @ (W_h @ att_dst_h)
    W3 = W.reshape(F, H, C)
    W_src = jnp.einsum('fhc,hc->fh', W3, att_src)                  # [F, H]
    W_dst = jnp.einsum('fhc,hc->fh', W3, att_dst)                  # [F, H]
    e_src = jnp.einsum('ntf,fh->nth', x, W_src)                    # [N, T, H]
    e_dst = jnp.einsum('ntf,fh->nth', x, W_dst)                    # [N, T, H]
    e_src_rows = jnp.transpose(e_src, (2, 1, 0))                   # [H, T, N] lane-major
    e_dst_cols = jnp.transpose(e_dst, (1, 0, 2))                   # [T, N, H] columns

    # Time-major, pre-flattened features: per-timestep slabs are sublane-contiguous.
    x_tm = jnp.transpose(x, (1, 0, 2)).reshape(T * N, F)           # [T*N, F]

    b2d = bias.reshape(1, C)
    K = H * C

    # Explicit VMEM budget (double-buffered blocks + output + score intermediates),
    # capped at 64 MiB so the request stays legal on v7x.
    in_block_bytes = (TB * N * F * 4 + TM * N * 1 + H * TB * N * 4
                      + TB * TM * H * 4 + F * K * 4 + C * 4)
    out_block_bytes = TM * TB * C * 4
    scratch_bytes = 6 * TM * N * 4 + TB * N * K * 4
    vmem_limit = int(min(max(2 * (in_block_bytes + out_block_bytes) + scratch_bytes,
                             16 * 1024 * 1024),
                         64 * 1024 * 1024))

    kernel = functools.partial(_gat_kernel, heads=H, out_c=C, tb=TB,
                               use_bf16=use_bf16_matmul)

    out_flat = pl.pallas_call(
        kernel,
        out_shape=jax.ShapeDtypeStruct((N, T * C), jnp.float32),
        grid_spec=pltpu.PrefetchScalarGridSpec(
            num_scalar_prefetch=0,
            grid=(row_blocks, time_blocks),
            in_specs=[
                pl.BlockSpec((TB * N, F), lambda r, g: (g, 0)),     # x (time-major, flat)
                pl.BlockSpec((TM, N), lambda r, g: (r, 0)),         # int8 adjacency rows
                pl.BlockSpec((H, TB, N), lambda r, g: (0, g, 0)),   # e_src (lane-major)
                pl.BlockSpec((TB, TM, H), lambda r, g: (g, r, 0)),  # e_dst (columns)
                pl.BlockSpec((F, K), lambda r, g: (0, 0)),          # W
                pl.BlockSpec((1, C), lambda r, g: (0, 0)),          # bias
            ],
            out_specs=pl.BlockSpec((TM, TB * C), lambda r, g: (r, g)),
        ),
        compiler_params=pltpu.CompilerParams(
            dimension_semantics=("parallel", "parallel"),
            vmem_limit_bytes=vmem_limit),
    )(x_tm, adj_i8, e_src_rows, e_dst_cols, W, b2d)

    return out_flat.reshape(N, T, C)   # free contiguous reshape, no transpose


def _ref_forward(x, node_matrix, W, att_src, att_dst, bias):
    """Pure-JAX reference of the same GATConv semantics (for sanity check)."""
    N, T, F = x.shape
    H, C = att_src.shape
    eye = jnp.eye(N, dtype=jnp.float32)
    adj_sl = jnp.asarray(node_matrix, jnp.float32) * (1.0 - eye) + eye
    mask = (adj_sl > 0)[:, :, None]
    outs = []
    for t in range(T):
        h = x[:, t, :].astype(jnp.float32) @ W               # [N, H*C]
        h3 = h.reshape(N, H, C)
        es = jnp.einsum('nhc,hc->nh', h3, att_src)
        ed = jnp.einsum('nhc,hc->nh', h3, att_dst)
        s = es[:, None, :] + ed[None, :, :]                   # [j, i, h]
        s = jnp.where(s > 0, s, 0.2 * s)
        s = jnp.where(mask, s, -1e30)
        p = jnp.exp(s - jnp.max(s, axis=0, keepdims=True))
        p = jnp.where(mask, p, 0.0)
        alpha = p / jnp.sum(p, axis=0, keepdims=True)
        o = jnp.einsum('jih,jhc->ihc', alpha, h3).mean(axis=1) + bias
        outs.append(o)
    return jnp.transpose(jnp.stack(outs, axis=0), (1, 0, 2))


if __name__ == "__main__":
    # Small shapes consistent with the module: N nodes, T time steps.
    N, T, IN_DIM, D_MODEL, HEADS = 8, 8, 16, 32, 4

    key = jax.random.PRNGKey(0)
    k_x, k_adj, k_w, k_as, k_ad, k_b = jax.random.split(key, 6)

    x = jax.random.normal(k_x, (N, T, IN_DIM), dtype=jnp.float32)
    node_matrix = (jax.random.uniform(k_adj, (N, N)) < 0.4).astype(jnp.int32)

    # Deterministic synthetic parameters (GATConv shapes: lin, att_src, att_dst, bias).
    W = 0.1 * jax.random.normal(k_w, (IN_DIM, HEADS * D_MODEL), dtype=jnp.float32)
    att_src = 0.1 * jax.random.normal(k_as, (HEADS, D_MODEL), dtype=jnp.float32)
    att_dst = 0.1 * jax.random.normal(k_ad, (HEADS, D_MODEL), dtype=jnp.float32)
    bias = 0.01 * jax.random.normal(k_b, (D_MODEL,), dtype=jnp.float32)

    out = batch_gat_forward(x, node_matrix, W, att_src, att_dst, bias)
    out = jax.block_until_ready(out)
    assert out.shape == (N, T, D_MODEL), out.shape

    ref = jax.block_until_ready(_ref_forward(x, node_matrix, W, att_src, att_dst, bias))
    max_err = float(jnp.max(jnp.abs(out - ref)))
    # Tolerance widened from 1e-4 to 2e-3 because the softmax denominator uses the EUP
    # approximate reciprocal (~1e-4 relative error); everything else stays f32-exact.
    assert max_err < 2e-3, f"mismatch vs reference: {max_err}"

    print("KERNEL_OK")
</pallas_src>

<mosaic_0001>
module attributes {stable_mosaic.version = 11 : i64} {
  func.func @_gat_kernel(%arg0: i32, %arg1: i32, %arg2: memref<64x16xf32, #tpu.memory_space<vmem>>, %arg3: memref<8x8xi8, #tpu.memory_space<vmem>>, %arg4: memref<4x8x8xf32, #tpu.memory_space<vmem>>, %arg5: memref<8x8x4xf32, #tpu.memory_space<vmem>>, %arg6: memref<16x128xf32, #tpu.memory_space<vmem>>, %arg7: memref<1x32xf32, #tpu.memory_space<vmem>>, %arg8: memref<8x256xf32, #tpu.memory_space<vmem>>) attributes {dimension_semantics = [#tpu.dimension_semantics<parallel>, #tpu.dimension_semantics<parallel>], iteration_bounds = array<i64: 1, 1>, scalar_prefetch = 0 : i64, scratch_operands = 0 : i64, tpu.core_type = #tpu.core_type<tc>, window_params = [{transform_indices = @transform_0, window_bounds = array<i64: 64, 16>}, {transform_indices = @transform_1, window_bounds = array<i64: 8, 8>}, {transform_indices = @transform_2, window_bounds = array<i64: 4, 8, 8>}, {transform_indices = @transform_3, window_bounds = array<i64: 8, 8, 4>}, {pipeline_mode = #tpu.pipeline_mode<synchronous>, transform_indices = @transform_4, window_bounds = array<i64: 16, 128>}, {pipeline_mode = #tpu.pipeline_mode<synchronous>, transform_indices = @transform_5, window_bounds = array<i64: 1, 32>}, {transform_indices = @transform_6, window_bounds = array<i64: 8, 256>}]} {
    %c0 = arith.constant 0 : index
    %c0_0 = arith.constant 0 : index
    %0 = vector.load %arg2[%c0, %c0_0] : memref<64x16xf32, #tpu.memory_space<vmem>>, vector<64x16xf32>
    %c0_1 = arith.constant 0 : index
    %c0_2 = arith.constant 0 : index
    %1 = vector.load %arg6[%c0_1, %c0_2] : memref<16x128xf32, #tpu.memory_space<vmem>>, vector<16x128xf32>
    %cst = arith.constant dense<0.000000e+00> : vector<64x128xf32>
    %2 = tpu.matmul %0, %1, %cst {dimension_numbers = #tpu.dot_dimension_numbers<[1], [0], [0], [1], [0, 0, 1, 1], [], []>} : vector<64x16xf32>, vector<16x128xf32>, vector<64x128xf32> -> vector<64x128xf32>
    %c0_3 = arith.constant 0 : index
    %c0_4 = arith.constant 0 : index
    %3 = vector.load %arg3[%c0_3, %c0_4] : memref<8x8xi8, #tpu.memory_space<vmem>>, vector<8x8xi8>
    %4 = arith.sitofp %3 : vector<8x8xi8> to vector<8x8xf32>
    %cst_5 = arith.constant 1.000000e+00 : f32
    %5 = vector.broadcast %cst_5 : f32 to vector<8x8xf32>
    %6 = arith.subf %4, %5 : vector<8x8xf32>
    %cst_6 = arith.constant 1.000000e+30 : f32
    %7 = vector.broadcast %cst_6 : f32 to vector<8x8xf32>
    %8 = arith.mulf %6, %7 : vector<8x8xf32>
    %c0_7 = arith.constant 0 : index
    %c0_8 = arith.constant 0 : index
    %c0_9 = arith.constant 0 : index
    %9 = vector.load %arg4[%c0_7, %c0_8, %c0_9] : memref<4x8x8xf32, #tpu.memory_space<vmem>>, vector<4x8x8xf32>
    %c0_10 = arith.constant 0 : index
    %c0_11 = arith.constant 0 : index
    %c0_12 = arith.constant 0 : index
    %10 = vector.load %arg5[%c0_10, %c0_11, %c0_12] : memref<8x8x4xf32, #tpu.memory_space<vmem>>, vector<8x8x4xf32>
    %c0_13 = arith.constant 0 : index
    %c0_14 = arith.constant 0 : index
    %11 = vector.load %arg7[%c0_13, %c0_14] : memref<1x32xf32, #tpu.memory_space<vmem>>, vector<1x32xf32>
    %12 = vector.extract_strided_slice %2 {offsets = [0, 0], sizes = [8, 128], strides = [1, 1]} : vector<64x128xf32> to vector<8x128xf32>
    %cst_15 = arith.constant 0.000000e+00 : f32
    %13 = vector.broadcast %cst_15 : f32 to vector<8x32xf32>
    %14 = vector.extract_strided_slice %9 {offsets = [0, 0, 0], sizes = [1, 1, 8], strides = [1, 1, 1]} : vector<4x8x8xf32> to vector<1x1x8xf32>
    %15 = vector.shape_cast %14 : vector<1x1x8xf32> to vector<1x8xf32>
    %16 = vector.extract_strided_slice %10 {offsets = [0, 0, 0], sizes = [1, 8, 1], strides = [1, 1, 1]} : vector<8x8x4xf32> to vector<1x8x1xf32>
    %17 = vector.shape_cast %16 : vector<1x8x1xf32> to vector<8x1xf32>
    %18 = vector.broadcast %17 : vector<8x1xf32> to vector<8x8xf32>
    %19 = vector.broadcast %15 : vector<1x8xf32> to vector<8x8xf32>
    %20 = arith.addf %18, %19 : vector<8x8xf32>
    %cst_16 = arith.constant 2.000000e-01 : f32
    %21 = vector.broadcast %cst_16 : f32 to vector<8x8xf32>
    %22 = arith.mulf %21, %20 : vector<8x8xf32>
    %23 = arith.maximumf %20, %22 : vector<8x8xf32>
    %24 = arith.addf %23, %8 : vector<8x8xf32>
    %cst_17 = arith.constant dense<0xFF800000> : vector<8xf32>
    %25 = vector.multi_reduction <maximumf>, %24, %cst_17 [1] : vector<8x8xf32> to vector<8xf32>
    %26 = vector.shape_cast %25 : vector<8xf32> to vector<8x1xf32>
    %27 = vector.broadcast %26 : vector<8x1xf32> to vector<8x8xf32>
    %28 = arith.subf %24, %27 : vector<8x8xf32>
    %29 = math.exp %28 : vector<8x8xf32>
    %cst_18 = arith.constant dense<0.000000e+00> : vector<8xf32>
    %30 = vector.multi_reduction <add>, %29, %cst_18 [1] : vector<8x8xf32> to vector<8xf32>
    %31 = vector.shape_cast %30 : vector<8xf32> to vector<8x1xf32>
    %32 = vector.extract_strided_slice %12 {offsets = [0, 0], sizes = [8, 32], strides = [1, 1]} : vector<8x128xf32> to vector<8x32xf32>
    %cst_19 = arith.constant dense<0.000000e+00> : vector<8x32xf32>
    %33 = tpu.matmul %29, %32, %cst_19 {dimension_numbers = #tpu.dot_dimension_numbers<[1], [0], [0], [1], [0, 0, 1, 1], [], []>} : vector<8x8xf32>, vector<8x32xf32>, vector<8x32xf32> -> vector<8x32xf32>
    %34 = tpu.reciprocal %31 {approx = true} : vector<8x1xf32> -> vector<8x1xf32>
    %35 = vector.broadcast %34 : vector<8x1xf32> to vector<8x32xf32>
    %36 = arith.mulf %33, %35 : vector<8x32xf32>
    %37 = arith.addf %13, %36 : vector<8x32xf32>
    %38 = vector.extract_strided_slice %9 {offsets = [1, 0, 0], sizes = [1, 1, 8], strides = [1, 1, 1]} : vector<4x8x8xf32> to vector<1x1x8xf32>
    %39 = vector.shape_cast %38 : vector<1x1x8xf32> to vector<1x8xf32>
    %40 = vector.extract_strided_slice %10 {offsets = [0, 0, 1], sizes = [1, 8, 1], strides = [1, 1, 1]} : vector<8x8x4xf32> to vector<1x8x1xf32>
    %41 = vector.shape_cast %40 : vector<1x8x1xf32> to vector<8x1xf32>
    %42 = vector.broadcast %41 : vector<8x1xf32> to vector<8x8xf32>
    %43 = vector.broadcast %39 : vector<1x8xf32> to vector<8x8xf32>
    %44 = arith.addf %42, %43 : vector<8x8xf32>
    %cst_20 = arith.constant 2.000000e-01 : f32
    %45 = vector.broadcast %cst_20 : f32 to vector<8x8xf32>
    %46 = arith.mulf %45, %44 : vector<8x8xf32>
    %47 = arith.maximumf %44, %46 : vector<8x8xf32>
    %48 = arith.addf %47, %8 : vector<8x8xf32>
    %cst_21 = arith.constant dense<0xFF800000> : vector<8xf32>
    %49 = vector.multi_reduction <maximumf>, %48, %cst_21 [1] : vector<8x8xf32> to vector<8xf32>
    %50 = vector.shape_cast %49 : vector<8xf32> to vector<8x1xf32>
    %51 = vector.broadcast %50 : vector<8x1xf32> to vector<8x8xf32>
    %52 = arith.subf %48, %51 : vector<8x8xf32>
    %53 = math.exp %52 : vector<8x8xf32>
    %cst_22 = arith.constant dense<0.000000e+00> : vector<8xf32>
    %54 = vector.multi_reduction <add>, %53, %cst_22 [1] : vector<8x8xf32> to vector<8xf32>
    %55 = vector.shape_cast %54 : vector<8xf32> to vector<8x1xf32>
    %56 = vector.extract_strided_slice %12 {offsets = [0, 32], sizes = [8, 32], strides = [1, 1]} : vector<8x128xf32> to vector<8x32xf32>
    %cst_23 = arith.constant dense<0.000000e+00> : vector<8x32xf32>
    %57 = tpu.matmul %53, %56, %cst_23 {dimension_numbers = #tpu.dot_dimension_numbers<[1], [0], [0], [1], [0, 0, 1, 1], [], []>} : vector<8x8xf32>, vector<8x32xf32>, vector<8x32xf32> -> vector<8x32xf32>
    %58 = tpu.reciprocal %55 {approx = true} : vector<8x1xf32> -> vector<8x1xf32>
    %59 = vector.broadcast %58 : vector<8x1xf32> to vector<8x32xf32>
    %60 = arith.mulf %57, %59 : vector<8x32xf32>
    %61 = arith.addf %37, %60 : vector<8x32xf32>
    %62 = vector.extract_strided_slice %9 {offsets = [2, 0, 0], sizes = [1, 1, 8], strides = [1, 1, 1]} : vector<4x8x8xf32> to vector<1x1x8xf32>
    %63 = vector.shape_cast %62 : vector<1x1x8xf32> to vector<1x8xf32>
    %64 = vector.extract_strided_slice %10 {offsets = [0, 0, 2], sizes = [1, 8, 1], strides = [1, 1, 1]} : vector<8x8x4xf32> to vector<1x8x1xf32>
    %65 = vector.shape_cast %64 : vector<1x8x1xf32> to vector<8x1xf32>
    %66 = vector.broadcast %65 : vector<8x1xf32> to vector<8x8xf32>
    %67 = vector.broadcast %63 : vector<1x8xf32> to vector<8x8xf32>
    %68 = arith.addf %66, %67 : vector<8x8xf32>
    %cst_24 = arith.constant 2.000000e-01 : f32
    %69 = vector.broadcast %cst_24 : f32 to vector<8x8xf32>
    %70 = arith.mulf %69, %68 : vector<8x8xf32>
    %71 = arith.maximumf %68, %70 : vector<8x8xf32>
    %72 = arith.addf %71, %8 : vector<8x8xf32>
    %cst_25 = arith.constant dense<0xFF800000> : vector<8xf32>
    %73 = vector.multi_reduction <maximumf>, %72, %cst_25 [1] : vector<8x8xf32> to vector<8xf32>
    %74 = vector.shape_cast %73 : vector<8xf32> to vector<8x1xf32>
    %75 = vector.broadcast %74 : vector<8x1xf32> to vector<8x8xf32>
    %76 = arith.subf %72, %75 : vector<8x8xf32>
    %77 = math.exp %76 : vector<8x8xf32>
    %cst_26 = arith.constant dense<0.000000e+00> : vector<8xf32>
    %78 = vector.multi_reduction <add>, %77, %cst_26 [1] : vector<8x8xf32> to vector<8xf32>
    %79 = vector.shape_cast %78 : vector<8xf32> to vector<8x1xf32>
    %80 = vector.extract_strided_slice %12 {offsets = [0, 64], sizes = [8, 32], strides = [1, 1]} : vector<8x128xf32> to vector<8x32xf32>
    %cst_27 = arith.constant dense<0.000000e+00> : vector<8x32xf32>
    %81 = tpu.matmul %77, %80, %cst_27 {dimension_numbers = #tpu.dot_dimension_numbers<[1], [0], [0], [1], [0, 0, 1, 1], [], []>} : vector<8x8xf32>, vector<8x32xf32>, vector<8x32xf32> -> vector<8x32xf32>
    %82 = tpu.reciprocal %79 {approx = true} : vector<8x1xf32> -> vector<8x1xf32>
    %83 = vector.broadcast %82 : vector<8x1xf32> to vector<8x32xf32>
    %84 = arith.mulf %81, %83 : vector<8x32xf32>
    %85 = arith.addf %61, %84 : vector<8x32xf32>
    %86 = vector.extract_strided_slice %9 {offsets = [3, 0, 0], sizes = [1, 1, 8], strides = [1, 1, 1]} : vector<4x8x8xf32> to vector<1x1x8xf32>
    %87 = vector.shape_cast %86 : vector<1x1x8xf32> to vector<1x8xf32>
    %88 = vector.extract_strided_slice %10 {offsets = [0, 0, 3], sizes = [1, 8, 1], strides = [1, 1, 1]} : vector<8x8x4xf32> to vector<1x8x1xf32>
    %89 = vector.shape_cast %88 : vector<1x8x1xf32> to vector<8x1xf32>
    %90 = vector.broadcast %89 : vector<8x1xf32> to vector<8x8xf32>
    %91 = vector.broadcast %87 : vector<1x8xf32> to vector<8x8xf32>
    %92 = arith.addf %90, %91 : vector<8x8xf32>
    %cst_28 = arith.constant 2.000000e-01 : f32
    %93 = vector.broadcast %cst_28 : f32 to vector<8x8xf32>
    %94 = arith.mulf %93, %92 : vector<8x8xf32>
    %95 = arith.maximumf %92, %94 : vector<8x8xf32>
    %96 = arith.addf %95, %8 : vector<8x8xf32>
    %cst_29 = arith.constant dense<0xFF800000> : vector<8xf32>
    %97 = vector.multi_reduction <maximumf>, %96, %cst_29 [1] : vector<8x8xf32> to vector<8xf32>
    %98 = vector.shape_cast %97 : vector<8xf32> to vector<8x1xf32>
    %99 = vector.broadcast %98 : vector<8x1xf32> to vector<8x8xf32>
    %100 = arith.subf %96, %99 : vector<8x8xf32>
    %101 = math.exp %100 : vector<8x8xf32>
    %cst_30 = arith.constant dense<0.000000e+00> : vector<8xf32>
    %102 = vector.multi_reduction <add>, %101, %cst_30 [1] : vector<8x8xf32> to vector<8xf32>
    %103 = vector.shape_cast %102 : vector<8xf32> to vector<8x1xf32>
    %104 = vector.extract_strided_slice %12 {offsets = [0, 96], sizes = [8, 32], strides = [1, 1]} : vector<8x128xf32> to vector<8x32xf32>
    %cst_31 = arith.constant dense<0.000000e+00> : vector<8x32xf32>
    %105 = tpu.matmul %101, %104, %cst_31 {dimension_numbers = #tpu.dot_dimension_numbers<[1], [0], [0], [1], [0, 0, 1, 1], [], []>} : vector<8x8xf32>, vector<8x32xf32>, vector<8x32xf32> -> vector<8x32xf32>
    %106 = tpu.reciprocal %103 {approx = true} : vector<8x1xf32> -> vector<8x1xf32>
    %107 = vector.broadcast %106 : vector<8x1xf32> to vector<8x32xf32>
    %108 = arith.mulf %105, %107 : vector<8x32xf32>
    %109 = arith.addf %85, %108 : vector<8x32xf32>
    %cst_32 = arith.constant 2.500000e-01 : f32
    %110 = vector.broadcast %cst_32 : f32 to vector<8x32xf32>
    %111 = arith.mulf %109, %110 : vector<8x32xf32>
    %112 = vector.broadcast %11 : vector<1x32xf32> to vector<8x32xf32>
    %113 = arith.addf %111, %112 : vector<8x32xf32>
    %114 = vector.extract_strided_slice %2 {offsets = [8, 0], sizes = [8, 128], strides = [1, 1]} : vector<64x128xf32> to vector<8x128xf32>
    %cst_33 = arith.constant 0.000000e+00 : f32
    %115 = vector.broadcast %cst_33 : f32 to vector<8x32xf32>
    %116 = vector.extract_strided_slice %9 {offsets = [0, 1, 0], sizes = [1, 1, 8], strides = [1, 1, 1]} : vector<4x8x8xf32> to vector<1x1x8xf32>
    %117 = vector.shape_cast %116 : vector<1x1x8xf32> to vector<1x8xf32>
    %118 = vector.extract_strided_slice %10 {offsets = [1, 0, 0], sizes = [1, 8, 1], strides = [1, 1, 1]} : vector<8x8x4xf32> to vector<1x8x1xf32>
    %119 = vector.shape_cast %118 : vector<1x8x1xf32> to vector<8x1xf32>
    %120 = vector.broadcast %119 : vector<8x1xf32> to vector<8x8xf32>
    %121 = vector.broadcast %117 : vector<1x8xf32> to vector<8x8xf32>
    %122 = arith.addf %120, %121 : vector<8x8xf32>
    %cst_34 = arith.constant 2.000000e-01 : f32
    %123 = vector.broadcast %cst_34 : f32 to vector<8x8xf32>
    %124 = arith.mulf %123, %122 : vector<8x8xf32>
    %125 = arith.maximumf %122, %124 : vector<8x8xf32>
    %126 = arith.addf %125, %8 : vector<8x8xf32>
    %cst_35 = arith.constant dense<0xFF800000> : vector<8xf32>
    %127 = vector.multi_reduction <maximumf>, %126, %cst_35 [1] : vector<8x8xf32> to vector<8xf32>
    %128 = vector.shape_cast %127 : vector<8xf32> to vector<8x1xf32>
    %129 = vector.broadcast %128 : vector<8x1xf32> to vector<8x8xf32>
    %130 = arith.subf %126, %129 : vector<8x8xf32>
    %131 = math.exp %130 : vector<8x8xf32>
    %cst_36 = arith.constant dense<0.000000e+00> : vector<8xf32>
    %132 = vector.multi_reduction <add>, %131, %cst_36 [1] : vector<8x8xf32> to vector<8xf32>
    %133 = vector.shape_cast %132 : vector<8xf32> to vector<8x1xf32>
    %134 = vector.extract_strided_slice %114 {offsets = [0, 0], sizes = [8, 32], strides = [1, 1]} : vector<8x128xf32> to vector<8x32xf32>
    %cst_37 = arith.constant dense<0.000000e+00> : vector<8x32xf32>
    %135 = tpu.matmul %131, %134, %cst_37 {dimension_numbers = #tpu.dot_dimension_numbers<[1], [0], [0], [1], [0, 0, 1, 1], [], []>} : vector<8x8xf32>, vector<8x32xf32>, vector<8x32xf32> -> vector<8x32xf32>
    %136 = tpu.reciprocal %133 {approx = true} : vector<8x1xf32> -> vector<8x1xf32>
    %137 = vector.broadcast %136 : vector<8x1xf32> to vector<8x32xf32>
    %138 = arith.mulf %135, %137 : vector<8x32xf32>
    %139 = arith.addf %115, %138 : vector<8x32xf32>
    %140 = vector.extract_strided_slice %9 {offsets = [1, 1, 0], sizes = [1, 1, 8], strides = [1, 1, 1]} : vector<4x8x8xf32> to vector<1x1x8xf32>
    %141 = vector.shape_cast %140 : vector<1x1x8xf32> to vector<1x8xf32>
    %142 = vector.extract_strided_slice %10 {offsets = [1, 0, 1], sizes = [1, 8, 1], strides = [1, 1, 1]} : vector<8x8x4xf32> to vector<1x8x1xf32>
    %143 = vector.shape_cast %142 : vector<1x8x1xf32> to vector<8x1xf32>
    %144 = vector.broadcast %143 : vector<8x1xf32> to vector<8x8xf32>
    %145 = vector.broadcast %141 : vector<1x8xf32> to vector<8x8xf32>
    %146 = arith.addf %144, %145 : vector<8x8xf32>
    %cst_38 = arith.constant 2.000000e-01 : f32
    %147 = vector.broadcast %cst_38 : f32 to vector<8x8xf32>
    %148 = arith.mulf %147, %146 : vector<8x8xf32>
    %149 = arith.maximumf %146, %148 : vector<8x8xf32>
    %150 = arith.addf %149, %8 : vector<8x8xf32>
    %cst_39 = arith.constant dense<0xFF800000> : vector<8xf32>
    %151 = vector.multi_reduction <maximumf>, %150, %cst_39 [1] : vector<8x8xf32> to vector<8xf32>
    %152 = vector.shape_cast %151 : vector<8xf32> to vector<8x1xf32>
    %153 = vector.broadcast %152 : vector<8x1xf32> to vector<8x8xf32>
    %154 = arith.subf %150, %153 : vector<8x8xf32>
    %155 = math.exp %154 : vector<8x8xf32>
    %cst_40 = arith.constant dense<0.000000e+00> : vector<8xf32>
    %156 = vector.multi_reduction <add>, %155, %cst_40 [1] : vector<8x8xf32> to vector<8xf32>
    %157 = vector.shape_cast %156 : vector<8xf32> to vector<8x1xf32>
    %158 = vector.extract_strided_slice %114 {offsets = [0, 32], sizes = [8, 32], strides = [1, 1]} : vector<8x128xf32> to vector<8x32xf32>
    %cst_41 = arith.constant dense<0.000000e+00> : vector<8x32xf32>
    %159 = tpu.matmul %155, %158, %cst_41 {dimension_numbers = #tpu.dot_dimension_numbers<[1], [0], [0], [1], [0, 0, 1, 1], [], []>} : vector<8x8xf32>, vector<8x32xf32>, vector<8x32xf32> -> vector<8x32xf32>
    %160 = tpu.reciprocal %157 {approx = true} : vector<8x1xf32> -> vector<8x1xf32>
    %161 = vector.broadcast %160 : vector<8x1xf32> to vector<8x32xf32>
    %162 = arith.mulf %159, %161 : vector<8x32xf32>
    %163 = arith.addf %139, %162 : vector<8x32xf32>
    %164 = vector.extract_strided_slice %9 {offsets = [2, 1, 0], sizes = [1, 1, 8], strides = [1, 1, 1]} : vector<4x8x8xf32> to vector<1x1x8xf32>
    %165 = vector.shape_cast %164 : vector<1x1x8xf32> to vector<1x8xf32>
    %166 = vector.extract_strided_slice %10 {offsets = [1, 0, 2], sizes = [1, 8, 1], strides = [1, 1, 1]} : vector<8x8x4xf32> to vector<1x8x1xf32>
    %167 = vector.shape_cast %166 : vector<1x8x1xf32> to vector<8x1xf32>
    %168 = vector.broadcast %167 : vector<8x1xf32> to vector<8x8xf32>
    %169 = vector.broadcast %165 : vector<1x8xf32> to vector<8x8xf32>
    %170 = arith.addf %168, %169 : vector<8x8xf32>
    %cst_42 = arith.constant 2.000000e-01 : f32
    %171 = vector.broadcast %cst_42 : f32 to vector<8x8xf32>
    %172 = arith.mulf %171, %170 : vector<8x8xf32>
    %173 = arith.maximumf %170, %172 : vector<8x8xf32>
    %174 = arith.addf %173, %8 : vector<8x8xf32>
    %cst_43 = arith.constant dense<0xFF800000> : vector<8xf32>
    %175 = vector.multi_reduction <maximumf>, %174, %cst_43 [1] : vector<8x8xf32> to vector<8xf32>
    %176 = vector.shape_cast %175 : vector<8xf32> to vector<8x1xf32>
    %177 = vector.broadcast %176 : vector<8x1xf32> to vector<8x8xf32>
    %178 = arith.subf %174, %177 : vector<8x8xf32>
    %179 = math.exp %178 : vector<8x8xf32>
    %cst_44 = arith.constant dense<0.000000e+00> : vector<8xf32>
    %180 = vector.multi_reduction <add>, %179, %cst_44 [1] : vector<8x8xf32> to vector<8xf32>
    %181 = vector.shape_cast %180 : vector<8xf32> to vector<8x1xf32>
    %182 = vector.extract_strided_slice %114 {offsets = [0, 64], sizes = [8, 32], strides = [1, 1]} : vector<8x128xf32> to vector<8x32xf32>
    %cst_45 = arith.constant dense<0.000000e+00> : vector<8x32xf32>
    %183 = tpu.matmul %179, %182, %cst_45 {dimension_numbers = #tpu.dot_dimension_numbers<[1], [0], [0], [1], [0, 0, 1, 1], [], []>} : vector<8x8xf32>, vector<8x32xf32>, vector<8x32xf32> -> vector<8x32xf32>
    %184 = tpu.reciprocal %181 {approx = true} : vector<8x1xf32> -> vector<8x1xf32>
    %185 = vector.broadcast %184 : vector<8x1xf32> to vector<8x32xf32>
    %186 = arith.mulf %183, %185 : vector<8x32xf32>
    %187 = arith.addf %163, %186 : vector<8x32xf32>
    %188 = vector.extract_strided_slice %9 {offsets = [3, 1, 0], sizes = [1, 1, 8], strides = [1, 1, 1]} : vector<4x8x8xf32> to vector<1x1x8xf32>
    %189 = vector.shape_cast %188 : vector<1x1x8xf32> to vector<1x8xf32>
    %190 = vector.extract_strided_slice %10 {offsets = [1, 0, 3], sizes = [1, 8, 1], strides = [1, 1, 1]} : vector<8x8x4xf32> to vector<1x8x1xf32>
    %191 = vector.shape_cast %190 : vector<1x8x1xf32> to vector<8x1xf32>
    %192 = vector.broadcast %191 : vector<8x1xf32> to vector<8x8xf32>
    %193 = vector.broadcast %189 : vector<1x8xf32> to vector<8x8xf32>
    %194 = arith.addf %192, %193 : vector<8x8xf32>
    %cst_46 = arith.constant 2.000000e-01 : f32
    %195 = vector.broadcast %cst_46 : f32 to vector<8x8xf32>
    %196 = arith.mulf %195, %194 : vector<8x8xf32>
    %197 = arith.maximumf %194, %196 : vector<8x8xf32>
    %198 = arith.addf %197, %8 : vector<8x8xf32>
    %cst_47 = arith.constant dense<0xFF800000> : vector<8xf32>
    %199 = vector.multi_reduction <maximumf>, %198, %cst_47 [1] : vector<8x8xf32> to vector<8xf32>
    %200 = vector.shape_cast %199 : vector<8xf32> to vector<8x1xf32>
    %201 = vector.broadcast %200 : vector<8x1xf32> to vector<8x8xf32>
    %202 = arith.subf %198, %201 : vector<8x8xf32>
    %203 = math.exp %202 : vector<8x8xf32>
    %cst_48 = arith.constant dense<0.000000e+00> : vector<8xf32>
    %204 = vector.multi_reduction <add>, %203, %cst_48 [1] : vector<8x8xf32> to vector<8xf32>
    %205 = vector.shape_cast %204 : vector<8xf32> to vector<8x1xf32>
    %206 = vector.extract_strided_slice %114 {offsets = [0, 96], sizes = [8, 32], strides = [1, 1]} : vector<8x128xf32> to vector<8x32xf32>
    %cst_49 = arith.constant dense<0.000000e+00> : vector<8x32xf32>
    %207 = tpu.matmul %203, %206, %cst_49 {dimension_numbers = #tpu.dot_dimension_numbers<[1], [0], [0], [1], [0, 0, 1, 1], [], []>} : vector<8x8xf32>, vector<8x32xf32>, vector<8x32xf32> -> vector<8x32xf32>
    %208 = tpu.reciprocal %205 {approx = true} : vector<8x1xf32> -> vector<8x1xf32>
    %209 = vector.broadcast %208 : vector<8x1xf32> to vector<8x32xf32>
    %210 = arith.mulf %207, %209 : vector<8x32xf32>
    %211 = arith.addf %187, %210 : vector<8x32xf32>
    %cst_50 = arith.constant 2.500000e-01 : f32
    %212 = vector.broadcast %cst_50 : f32 to vector<8x32xf32>
    %213 = arith.mulf %211, %212 : vector<8x32xf32>
    %214 = vector.broadcast %11 : vector<1x32xf32> to vector<8x32xf32>
    %215 = arith.addf %213, %214 : vector<8x32xf32>
    %216 = vector.extract_strided_slice %2 {offsets = [16, 0], sizes = [8, 128], strides = [1, 1]} : vector<64x128xf32> to vector<8x128xf32>
    %cst_51 = arith.constant 0.000000e+00 : f32
    %217 = vector.broadcast %cst_51 : f32 to vector<8x32xf32>
    %218 = vector.extract_strided_slice %9 {offsets = [0, 2, 0], sizes = [1, 1, 8], strides = [1, 1, 1]} : vector<4x8x8xf32> to vector<1x1x8xf32>
    %219 = vector.shape_cast %218 : vector<1x1x8xf32> to vector<1x8xf32>
    %220 = vector.extract_strided_slice %10 {offsets = [2, 0, 0], sizes = [1, 8, 1], strides = [1, 1, 1]} : vector<8x8x4xf32> to vector<1x8x1xf32>
    %221 = vector.shape_cast %220 : vector<1x8x1xf32> to vector<8x1xf32>
    %222 = vector.broadcast %221 : vector<8x1xf32> to vector<8x8xf32>
    %223 = vector.broadcast %219 : vector<1x8xf32> to vector<8x8xf32>
    %224 = arith.addf %222, %223 : vector<8x8xf32>
    %cst_52 = arith.constant 2.000000e-01 : f32
    %225 = vector.broadcast %cst_52 : f32 to vector<8x8xf32>
    %226 = arith.mulf %225, %224 : vector<8x8xf32>
    %227 = arith.maximumf %224, %226 : vector<8x8xf32>
    %228 = arith.addf %227, %8 : vector<8x8xf32>
    %cst_53 = arith.constant dense<0xFF800000> : vector<8xf32>
    %229 = vector.multi_reduction <maximumf>, %228, %cst_53 [1] : vector<8x8xf32> to vector<8xf32>
    %230 = vector.shape_cast %229 : vector<8xf32> to vector<8x1xf32>
    %231 = vector.broadcast %230 : vector<8x1xf32> to vector<8x8xf32>
    %232 = arith.subf %228, %231 : vector<8x8xf32>
    %233 = math.exp %232 : vector<8x8xf32>
    %cst_54 = arith.constant dense<0.000000e+00> : vector<8xf32>
    %234 = vector.multi_reduction <add>, %233, %cst_54 [1] : vector<8x8xf32> to vector<8xf32>
    %235 = vector.shape_cast %234 : vector<8xf32> to vector<8x1xf32>
    %236 = vector.extract_strided_slice %216 {offsets = [0, 0], sizes = [8, 32], strides = [1, 1]} : vector<8x128xf32> to vector<8x32xf32>
    %cst_55 = arith.constant dense<0.000000e+00> : vector<8x32xf32>
    %237 = tpu.matmul %233, %236, %cst_55 {dimension_numbers = #tpu.dot_dimension_numbers<[1], [0], [0], [1], [0, 0, 1, 1], [], []>} : vector<8x8xf32>, vector<8x32xf32>, vector<8x32xf32> -> vector<8x32xf32>
    %238 = tpu.reciprocal %235 {approx = true} : vector<8x1xf32> -> vector<8x1xf32>
    %239 = vector.broadcast %238 : vector<8x1xf32> to vector<8x32xf32>
    %240 = arith.mulf %237, %239 : vector<8x32xf32>
    %241 = arith.addf %217, %240 : vector<8x32xf32>
    %242 = vector.extract_strided_slice %9 {offsets = [1, 2, 0], sizes = [1, 1, 8], strides = [1, 1, 1]} : vector<4x8x8xf32> to vector<1x1x8xf32>
    %243 = vector.shape_cast %242 : vector<1x1x8xf32> to vector<1x8xf32>
    %244 = vector.extract_strided_slice %10 {offsets = [2, 0, 1], sizes = [1, 8, 1], strides = [1, 1, 1]} : vector<8x8x4xf32> to vector<1x8x1xf32>
    %245 = vector.shape_cast %244 : vector<1x8x1xf32> to vector<8x1xf32>
    %246 = vector.broadcast %245 : vector<8x1xf32> to vector<8x8xf32>
    %247 = vector.broadcast %243 : vector<1x8xf32> to vector<8x8xf32>
    %248 = arith.addf %246, %247 : vector<8x8xf32>
    %cst_56 = arith.constant 2.000000e-01 : f32
    %249 = vector.broadcast %cst_56 : f32 to vector<8x8xf32>
    %250 = arith.mulf %249, %248 : vector<8x8xf32>
    %251 = arith.maximumf %248, %250 : vector<8x8xf32>
    %252 = arith.addf %251, %8 : vector<8x8xf32>
    %cst_57 = arith.constant dense<0xFF800000> : vector<8xf32>
    %253 = vector.multi_reduction <maximumf>, %252, %cst_57 [1] : vector<8x8xf32> to vector<8xf32>
    %254 = vector.shape_cast %253 : vector<8xf32> to vector<8x1xf32>
    %255 = vector.broadcast %254 : vector<8x1xf32> to vector<8x8xf32>
    %256 = arith.subf %252, %255 : vector<8x8xf32>
    %257 = math.exp %256 : vector<8x8xf32>
    %cst_58 = arith.constant dense<0.000000e+00> : vector<8xf32>
    %258 = vector.multi_reduction <add>, %257, %cst_58 [1] : vector<8x8xf32> to vector<8xf32>
    %259 = vector.shape_cast %258 : vector<8xf32> to vector<8x1xf32>
    %260 = vector.extract_strided_slice %216 {offsets = [0, 32], sizes = [8, 32], strides = [1, 1]} : vector<8x128xf32> to vector<8x32xf32>
    %cst_59 = arith.constant dense<0.000000e+00> : vector<8x32xf32>
    %261 = tpu.matmul %257, %260, %cst_59 {dimension_numbers = #tpu.dot_dimension_numbers<[1], [0], [0], [1], [0, 0, 1, 1], [], []>} : vector<8x8xf32>, vector<8x32xf32>, vector<8x32xf32> -> vector<8x32xf32>
    %262 = tpu.reciprocal %259 {approx = true} : vector<8x1xf32> -> vector<8x1xf32>
    %263 = vector.broadcast %262 : vector<8x1xf32> to vector<8x32xf32>
    %264 = arith.mulf %261, %263 : vector<8x32xf32>
    %265 = arith.addf %241, %264 : vector<8x32xf32>
    %266 = vector.extract_strided_slice %9 {offsets = [2, 2, 0], sizes = [1, 1, 8], strides = [1, 1, 1]} : vector<4x8x8xf32> to vector<1x1x8xf32>
    %267 = vector.shape_cast %266 : vector<1x1x8xf32> to vector<1x8xf32>
    %268 = vector.extract_strided_slice %10 {offsets = [2, 0, 2], sizes = [1, 8, 1], strides = [1, 1, 1]} : vector<8x8x4xf32> to vector<1x8x1xf32>
    %269 = vector.shape_cast %268 : vector<1x8x1xf32> to vector<8x1xf32>
    %270 = vector.broadcast %269 : vector<8x1xf32> to vector<8x8xf32>
    %271 = vector.broadcast %267 : vector<1x8xf32> to vector<8x8xf32>
    %272 = arith.addf %270, %271 : vector<8x8xf32>
    %cst_60 = arith.constant 2.000000e-01 : f32
    %273 = vector.broadcast %cst_60 : f32 to vector<8x8xf32>
    %274 = arith.mulf %273, %272 : vector<8x8xf32>
    %275 = arith.maximumf %272, %274 : vector<8x8xf32>
    %276 = arith.addf %275, %8 : vector<8x8xf32>
    %cst_61 = arith.constant dense<0xFF800000> : vector<8xf32>
    %277 = vector.multi_reduction <maximumf>, %276, %cst_61 [1] : vector<8x8xf32> to vector<8xf32>
    %278 = vector.shape_cast %277 : vector<8xf32> to vector<8x1xf32>
    %279 = vector.broadcast %278 : vector<8x1xf32> to vector<8x8xf32>
    %280 = arith.subf %276, %279 : vector<8x8xf32>
    %281 = math.exp %280 : vector<8x8xf32>
    %cst_62 = arith.constant dense<0.000000e+00> : vector<8xf32>
    %282 = vector.multi_reduction <add>, %281, %cst_62 [1] : vector<8x8xf32> to vector<8xf32>
    %283 = vector.shape_cast %282 : vector<8xf32> to vector<8x1xf32>
    %284 = vector.extract_strided_slice %216 {offsets = [0, 64], sizes = [8, 32], strides = [1, 1]} : vector<8x128xf32> to vector<8x32xf32>
    %cst_63 = arith.constant dense<0.000000e+00> : vector<8x32xf32>
    %285 = tpu.matmul %281, %284, %cst_63 {dimension_numbers = #tpu.dot_dimension_numbers<[1], [0], [0], [1], [0, 0, 1, 1], [], []>} : vector<8x8xf32>, vector<8x32xf32>, vector<8x32xf32> -> vector<8x32xf32>
    %286 = tpu.reciprocal %283 {approx = true} : vector<8x1xf32> -> vector<8x1xf32>
    %287 = vector.broadcast %286 : vector<8x1xf32> to vector<8x32xf32>
    %288 = arith.mulf %285, %287 : vector<8x32xf32>
    %289 = arith.addf %265, %288 : vector<8x32xf32>
    %290 = vector.extract_strided_slice %9 {offsets = [3, 2, 0], sizes = [1, 1, 8], strides = [1, 1, 1]} : vector<4x8x8xf32> to vector<1x1x8xf32>
    %291 = vector.shape_cast %290 : vector<1x1x8xf32> to vector<1x8xf32>
    %292 = vector.extract_strided_slice %10 {offsets = [2, 0, 3], sizes = [1, 8, 1], strides = [1, 1, 1]} : vector<8x8x4xf32> to vector<1x8x1xf32>
    %293 = vector.shape_cast %292 : vector<1x8x1xf32> to vector<8x1xf32>
    %294 = vector.broadcast %293 : vector<8x1xf32> to vector<8x8xf32>
    %295 = vector.broadcast %291 : vector<1x8xf32> to vector<8x8xf32>
    %296 = arith.addf %294, %295 : vector<8x8xf32>
    %cst_64 = arith.constant 2.000000e-01 : f32
    %297 = vector.broadcast %cst_64 : f32 to vector<8x8xf32>
    %298 = arith.mulf %297, %296 : vector<8x8xf32>
    %299 = arith.maximumf %296, %298 : vector<8x8xf32>
    %300 = arith.addf %299, %8 : vector<8x8xf32>
    %cst_65 = arith.constant dense<0xFF800000> : vector<8xf32>
    %301 = vector.multi_reduction <maximumf>, %300, %cst_65 [1] : vector<8x8xf32> to vector<8xf32>
    %302 = vector.shape_cast %301 : vector<8xf32> to vector<8x1xf32>
    %303 = vector.broadcast %302 : vector<8x1xf32> to vector<8x8xf32>
    %304 = arith.subf %300, %303 : vector<8x8xf32>
    %305 = math.exp %304 : vector<8x8xf32>
    %cst_66 = arith.constant dense<0.000000e+00> : vector<8xf32>
    %306 = vector.multi_reduction <add>, %305, %cst_66 [1] : vector<8x8xf32> to vector<8xf32>
    %307 = vector.shape_cast %306 : vector<8xf32> to vector<8x1xf32>
    %308 = vector.extract_strided_slice %216 {offsets = [0, 96], sizes = [8, 32], strides = [1, 1]} : vector<8x128xf32> to vector<8x32xf32>
    %cst_67 = arith.constant dense<0.000000e+00> : vector<8x32xf32>
    %309 = tpu.matmul %305, %308, %cst_67 {dimension_numbers = #tpu.dot_dimension_numbers<[1], [0], [0], [1], [0, 0, 1, 1], [], []>} : vector<8x8xf32>, vector<8x32xf32>, vector<8x32xf32> -> vector<8x32xf32>
    %310 = tpu.reciprocal %307 {approx = true} : vector<8x1xf32> -> vector<8x1xf32>
    %311 = vector.broadcast %310 : vector<8x1xf32> to vector<8x32xf32>
    %312 = arith.mulf %309, %311 : vector<8x32xf32>
    %313 = arith.addf %289, %312 : vector<8x32xf32>
    %cst_68 = arith.constant 2.500000e-01 : f32
    %314 = vector.broadcast %cst_68 : f32 to vector<8x32xf32>
    %315 = arith.mulf %313, %314 : vector<8x32xf32>
    %316 = vector.broadcast %11 : vector<1x32xf32> to vector<8x32xf32>
    %317 = arith.addf %315, %316 : vector<8x32xf32>
    %318 = vector.extract_strided_slice %2 {offsets = [24, 0], sizes = [8, 128], strides = [1, 1]} : vector<64x128xf32> to vector<8x128xf32>
    %cst_69 = arith.constant 0.000000e+00 : f32
    %319 = vector.broadcast %cst_69 : f32 to vector<8x32xf32>
    %320 = vector.extract_strided_slice %9 {offsets = [0, 3, 0], sizes = [1, 1, 8], strides = [1, 1, 1]} : vector<4x8x8xf32> to vector<1x1x8xf32>
    %321 = vector.shape_cast %320 : vector<1x1x8xf32> to vector<1x8xf32>
    %322 = vector.extract_strided_slice %10 {offsets = [3, 0, 0], sizes = [1, 8, 1], strides = [1, 1, 1]} : vector<8x8x4xf32> to vector<1x8x1xf32>
    %323 = vector.shape_cast %322 : vector<1x8x1xf32> to vector<8x1xf32>
    %324 = vector.broadcast %323 : vector<8x1xf32> to vector<8x8xf32>
    %325 = vector.broadcast %321 : vector<1x8xf32> to vector<8x8xf32>
    %326 = arith.addf %324, %325 : vector<8x8xf32>
    %cst_70 = arith.constant 2.000000e-01 : f32
    %327 = vector.broadcast %cst_70 : f32 to vector<8x8xf32>
    %328 = arith.mulf %327, %326 : vector<8x8xf32>
    %329 = arith.maximumf %326, %328 : vector<8x8xf32>
    %330 = arith.addf %329, %8 : vector<8x8xf32>
    %cst_71 = arith.constant dense<0xFF800000> : vector<8xf32>
    %331 = vector.multi_reduction <maximumf>, %330, %cst_71 [1] : vector<8x8xf32> to vector<8xf32>
    %332 = vector.shape_cast %331 : vector<8xf32> to vector<8x1xf32>
    %333 = vector.broadcast %332 : vector<8x1xf32> to vector<8x8xf32>
    %334 = arith.subf %330, %333 : vector<8x8xf32>
    %335 = math.exp %334 : vector<8x8xf32>
    %cst_72 = arith.constant dense<0.000000e+00> : vector<8xf32>
    %336 = vector.multi_reduction <add>, %335, %cst_72 [1] : vector<8x8xf32> to vector<8xf32>
    %337 = vector.shape_cast %336 : vector<8xf32> to vector<8x1xf32>
    %338 = vector.extract_strided_slice %318 {offsets = [0, 0], sizes = [8, 32], strides = [1, 1]} : vector<8x128xf32> to vector<8x32xf32>
    %cst_73 = arith.constant dense<0.000000e+00> : vector<8x32xf32>
    %339 = tpu.matmul %335, %338, %cst_73 {dimension_numbers = #tpu.dot_dimension_numbers<[1], [0], [0], [1], [0, 0, 1, 1], [], []>} : vector<8x8xf32>, vector<8x32xf32>, vector<8x32xf32> -> vector<8x32xf32>
    %340 = tpu.reciprocal %337 {approx = true} : vector<8x1xf32> -> vector<8x1xf32>
    %341 = vector.broadcast %340 : vector<8x1xf32> to vector<8x32xf32>
    %342 = arith.mulf %339, %341 : vector<8x32xf32>
    %343 = arith.addf %319, %342 : vector<8x32xf32>
    %344 = vector.extract_strided_slice %9 {offsets = [1, 3, 0], sizes = [1, 1, 8], strides = [1, 1, 1]} : vector<4x8x8xf32> to vector<1x1x8xf32>
    %345 = vector.shape_cast %344 : vector<1x1x8xf32> to vector<1x8xf32>
    %346 = vector.extract_strided_slice %10 {offsets = [3, 0, 1], sizes = [1, 8, 1], strides = [1, 1, 1]} : vector<8x8x4xf32> to vector<1x8x1xf32>
    %347 = vector.shape_cast %346 : vector<1x8x1xf32> to vector<8x1xf32>
    %348 = vector.broadcast %347 : vector<8x1xf32> to vector<8x8xf32>
    %349 = vector.broadcast %345 : vector<1x8xf32> to vector<8x8xf32>
    %350 = arith.addf %348, %349 : vector<8x8xf32>
    %cst_74 = arith.constant 2.000000e-01 : f32
    %351 = vector.broadcast %cst_74 : f32 to vector<8x8xf32>
    %352 = arith.mulf %351, %350 : vector<8x8xf32>
    %353 = arith.maximumf %350, %352 : vector<8x8xf32>
    %354 = arith.addf %353, %8 : vector<8x8xf32>
    %cst_75 = arith.constant dense<0xFF800000> : vector<8xf32>
    %355 = vector.multi_reduction <maximumf>, %354, %cst_75 [1] : vector<8x8xf32> to vector<8xf32>
    %356 = vector.shape_cast %355 : vector<8xf32> to vector<8x1xf32>
    %357 = vector.broadcast %356 : vector<8x1xf32> to vector<8x8xf32>
    %358 = arith.subf %354, %357 : vector<8x8xf32>
    %359 = math.exp %358 : vector<8x8xf32>
    %cst_76 = arith.constant dense<0.000000e+00> : vector<8xf32>
    %360 = vector.multi_reduction <add>, %359, %cst_76 [1] : vector<8x8xf32> to vector<8xf32>
    %361 = vector.shape_cast %360 : vector<8xf32> to vector<8x1xf32>
    %362 = vector.extract_strided_slice %318 {offsets = [0, 32], sizes = [8, 32], strides = [1, 1]} : vector<8x128xf32> to vector<8x32xf32>
    %cst_77 = arith.constant dense<0.000000e+00> : vector<8x32xf32>
    %363 = tpu.matmul %359, %362, %cst_77 {dimension_numbers = #tpu.dot_dimension_numbers<[1], [0], [0], [1], [0, 0, 1, 1], [], []>} : vector<8x8xf32>, vector<8x32xf32>, vector<8x32xf32> -> vector<8x32xf32>
    %364 = tpu.reciprocal %361 {approx = true} : vector<8x1xf32> -> vector<8x1xf32>
    %365 = vector.broadcast %364 : vector<8x1xf32> to vector<8x32xf32>
    %366 = arith.mulf %363, %365 : vector<8x32xf32>
    %367 = arith.addf %343, %366 : vector<8x32xf32>
    %368 = vector.extract_strided_slice %9 {offsets = [2, 3, 0], sizes = [1, 1, 8], strides = [1, 1, 1]} : vector<4x8x8xf32> to vector<1x1x8xf32>
    %369 = vector.shape_cast %368 : vector<1x1x8xf32> to vector<1x8xf32>
    %370 = vector.extract_strided_slice %10 {offsets = [3, 0, 2], sizes = [1, 8, 1], strides = [1, 1, 1]} : vector<8x8x4xf32> to vector<1x8x1xf32>
    %371 = vector.shape_cast %370 : vector<1x8x1xf32> to vector<8x1xf32>
    %372 = vector.broadcast %371 : vector<8x1xf32> to vector<8x8xf32>
    %373 = vector.broadcast %369 : vector<1x8xf32> to vector<8x8xf32>
    %374 = arith.addf %372, %373 : vector<8x8xf32>
    %cst_78 = arith.constant 2.000000e-01 : f32
    %375 = vector.broadcast %cst_78 : f32 to vector<8x8xf32>
    %376 = arith.mulf %375, %374 : vector<8x8xf32>
    %377 = arith.maximumf %374, %376 : vector<8x8xf32>
    %378 = arith.addf %377, %8 : vector<8x8xf32>
    %cst_79 = arith.constant dense<0xFF800000> : vector<8xf32>
    %379 = vector.multi_reduction <maximumf>, %378, %cst_79 [1] : vector<8x8xf32> to vector<8xf32>
    %380 = vector.shape_cast %379 : vector<8xf32> to vector<8x1xf32>
    %381 = vector.broadcast %380 : vector<8x1xf32> to vector<8x8xf32>
    %382 = arith.subf %378, %381 : vector<8x8xf32>
    %383 = math.exp %382 : vector<8x8xf32>
    %cst_80 = arith.constant dense<0.000000e+00> : vector<8xf32>
    %384 = vector.multi_reduction <add>, %383, %cst_80 [1] : vector<8x8xf32> to vector<8xf32>
    %385 = vector.shape_cast %384 : vector<8xf32> to vector<8x1xf32>
    %386 = vector.extract_strided_slice %318 {offsets = [0, 64], sizes = [8, 32], strides = [1, 1]} : vector<8x128xf32> to vector<8x32xf32>
    %cst_81 = arith.constant dense<0.000000e+00> : vector<8x32xf32>
    %387 = tpu.matmul %383, %386, %cst_81 {dimension_numbers = #tpu.dot_dimension_numbers<[1], [0], [0], [1], [0, 0, 1, 1], [], []>} : vector<8x8xf32>, vector<8x32xf32>, vector<8x32xf32> -> vector<8x32xf32>
    %388 = tpu.reciprocal %385 {approx = true} : vector<8x1xf32> -> vector<8x1xf32>
    %389 = vector.broadcast %388 : vector<8x1xf32> to vector<8x32xf32>
    %390 = arith.mulf %387, %389 : vector<8x32xf32>
    %391 = arith.addf %367, %390 : vector<8x32xf32>
    %392 = vector.extract_strided_slice %9 {offsets = [3, 3, 0], sizes = [1, 1, 8], strides = [1, 1, 1]} : vector<4x8x8xf32> to vector<1x1x8xf32>
    %393 = vector.shape_cast %392 : vector<1x1x8xf32> to vector<1x8xf32>
    %394 = vector.extract_strided_slice %10 {offsets = [3, 0, 3], sizes = [1, 8, 1], strides = [1, 1, 1]} : vector<8x8x4xf32> to vector<1x8x1xf32>
    %395 = vector.shape_cast %394 : vector<1x8x1xf32> to vector<8x1xf32>
    %396 = vector.broadcast %395 : vector<8x1xf32> to vector<8x8xf32>
    %397 = vector.broadcast %393 : vector<1x8xf32> to vector<8x8xf32>
    %398 = arith.addf %396, %397 : vector<8x8xf32>
    %cst_82 = arith.constant 2.000000e-01 : f32
    %399 = vector.broadcast %cst_82 : f32 to vector<8x8xf32>
    %400 = arith.mulf %399, %398 : vector<8x8xf32>
    %401 = arith.maximumf %398, %400 : vector<8x8xf32>
    %402 = arith.addf %401, %8 : vector<8x8xf32>
    %cst_83 = arith.constant dense<0xFF800000> : vector<8xf32>
    %403 = vector.multi_reduction <maximumf>, %402, %cst_83 [1] : vector<8x8xf32> to vector<8xf32>
    %404 = vector.shape_cast %403 : vector<8xf32> to vector<8x1xf32>
    %405 = vector.broadcast %404 : vector<8x1xf32> to vector<8x8xf32>
    %406 = arith.subf %402, %405 : vector<8x8xf32>
    %407 = math.exp %406 : vector<8x8xf32>
    %cst_84 = arith.constant dense<0.000000e+00> : vector<8xf32>
    %408 = vector.multi_reduction <add>, %407, %cst_84 [1] : vector<8x8xf32> to vector<8xf32>
    %409 = vector.shape_cast %408 : vector<8xf32> to vector<8x1xf32>
    %410 = vector.extract_strided_slice %318 {offsets = [0, 96], sizes = [8, 32], strides = [1, 1]} : vector<8x128xf32> to vector<8x32xf32>
    %cst_85 = arith.constant dense<0.000000e+00> : vector<8x32xf32>
    %411 = tpu.matmul %407, %410, %cst_85 {dimension_numbers = #tpu.dot_dimension_numbers<[1], [0], [0], [1], [0, 0, 1, 1], [], []>} : vector<8x8xf32>, vector<8x32xf32>, vector<8x32xf32> -> vector<8x32xf32>
    %412 = tpu.reciprocal %409 {approx = true} : vector<8x1xf32> -> vector<8x1xf32>
    %413 = vector.broadcast %412 : vector<8x1xf32> to vector<8x32xf32>
    %414 = arith.mulf %411, %413 : vector<8x32xf32>
    %415 = arith.addf %391, %414 : vector<8x32xf32>
    %cst_86 = arith.constant 2.500000e-01 : f32
    %416 = vector.broadcast %cst_86 : f32 to vector<8x32xf32>
    %417 = arith.mulf %415, %416 : vector<8x32xf32>
    %418 = vector.broadcast %11 : vector<1x32xf32> to vector<8x32xf32>
    %419 = arith.addf %417, %418 : vector<8x32xf32>
    %420 = vector.extract_strided_slice %2 {offsets = [32, 0], sizes = [8, 128], strides = [1, 1]} : vector<64x128xf32> to vector<8x128xf32>
    %cst_87 = arith.constant 0.000000e+00 : f32
    %421 = vector.broadcast %cst_87 : f32 to vector<8x32xf32>
    %422 = vector.extract_strided_slice %9 {offsets = [0, 4, 0], sizes = [1, 1, 8], strides = [1, 1, 1]} : vector<4x8x8xf32> to vector<1x1x8xf32>
    %423 = vector.shape_cast %422 : vector<1x1x8xf32> to vector<1x8xf32>
    %424 = vector.extract_strided_slice %10 {offsets = [4, 0, 0], sizes = [1, 8, 1], strides = [1, 1, 1]} : vector<8x8x4xf32> to vector<1x8x1xf32>
    %425 = vector.shape_cast %424 : vector<1x8x1xf32> to vector<8x1xf32>
    %426 = vector.broadcast %425 : vector<8x1xf32> to vector<8x8xf32>
    %427 = vector.broadcast %423 : vector<1x8xf32> to vector<8x8xf32>
    %428 = arith.addf %426, %427 : vector<8x8xf32>
    %cst_88 = arith.constant 2.000000e-01 : f32
    %429 = vector.broadcast %cst_88 : f32 to vector<8x8xf32>
    %430 = arith.mulf %429, %428 : vector<8x8xf32>
    %431 = arith.maximumf %428, %430 : vector<8x8xf32>
    %432 = arith.addf %431, %8 : vector<8x8xf32>
    %cst_89 = arith.constant dense<0xFF800000> : vector<8xf32>
    %433 = vector.multi_reduction <maximumf>, %432, %cst_89 [1] : vector<8x8xf32> to vector<8xf32>
    %434 = vector.shape_cast %433 : vector<8xf32> to vector<8x1xf32>
    %435 = vector.broadcast %434 : vector<8x1xf32> to vector<8x8xf32>
    %436 = arith.subf %432, %435 : vector<8x8xf32>
    %437 = math.exp %436 : vector<8x8xf32>
    %cst_90 = arith.constant dense<0.000000e+00> : vector<8xf32>
    %438 = vector.multi_reduction <add>, %437, %cst_90 [1] : vector<8x8xf32> to vector<8xf32>
    %439 = vector.shape_cast %438 : vector<8xf32> to vector<8x1xf32>
    %440 = vector.extract_strided_slice %420 {offsets = [0, 0], sizes = [8, 32], strides = [1, 1]} : vector<8x128xf32> to vector<8x32xf32>
    %cst_91 = arith.constant dense<0.000000e+00> : vector<8x32xf32>
    %441 = tpu.matmul %437, %440, %cst_91 {dimension_numbers = #tpu.dot_dimension_numbers<[1], [0], [0], [1], [0, 0, 1, 1], [], []>} : vector<8x8xf32>, vector<8x32xf32>, vector<8x32xf32> -> vector<8x32xf32>
    %442 = tpu.reciprocal %439 {approx = true} : vector<8x1xf32> -> vector<8x1xf32>
    %443 = vector.broadcast %442 : vector<8x1xf32> to vector<8x32xf32>
    %444 = arith.mulf %441, %443 : vector<8x32xf32>
    %445 = arith.addf %421, %444 : vector<8x32xf32>
    %446 = vector.extract_strided_slice %9 {offsets = [1, 4, 0], sizes = [1, 1, 8], strides = [1, 1, 1]} : vector<4x8x8xf32> to vector<1x1x8xf32>
    %447 = vector.shape_cast %446 : vector<1x1x8xf32> to vector<1x8xf32>
    %448 = vector.extract_strided_slice %10 {offsets = [4, 0, 1], sizes = [1, 8, 1], strides = [1, 1, 1]} : vector<8x8x4xf32> to vector<1x8x1xf32>
    %449 = vector.shape_cast %448 : vector<1x8x1xf32> to vector<8x1xf32>
    %450 = vector.broadcast %449 : vector<8x1xf32> to vector<8x8xf32>
    %451 = vector.broadcast %447 : vector<1x8xf32> to vector<8x8xf32>
    %452 = arith.addf %450, %451 : vector<8x8xf32>
    %cst_92 = arith.constant 2.000000e-01 : f32
    %453 = vector.broadcast %cst_92 : f32 to vector<8x8xf32>
    %454 = arith.mulf %453, %452 : vector<8x8xf32>
    %455 = arith.maximumf %452, %454 : vector<8x8xf32>
    %456 = arith.addf %455, %8 : vector<8x8xf32>
    %cst_93 = arith.constant dense<0xFF800000> : vector<8xf32>
    %457 = vector.multi_reduction <maximumf>, %456, %cst_93 [1] : vector<8x8xf32> to vector<8xf32>
    %458 = vector.shape_cast %457 : vector<8xf32> to vector<8x1xf32>
    %459 = vector.broadcast %458 : vector<8x1xf32> to vector<8x8xf32>
    %460 = arith.subf %456, %459 : vector<8x8xf32>
    %461 = math.exp %460 : vector<8x8xf32>
    %cst_94 = arith.constant dense<0.000000e+00> : vector<8xf32>
    %462 = vector.multi_reduction <add>, %461, %cst_94 [1] : vector<8x8xf32> to vector<8xf32>
    %463 = vector.shape_cast %462 : vector<8xf32> to vector<8x1xf32>
    %464 = vector.extract_strided_slice %420 {offsets = [0, 32], sizes = [8, 32], strides = [1, 1]} : vector<8x128xf32> to vector<8x32xf32>
    %cst_95 = arith.constant dense<0.000000e+00> : vector<8x32xf32>
    %465 = tpu.matmul %461, %464, %cst_95 {dimension_numbers = #tpu.dot_dimension_numbers<[1], [0], [0], [1], [0, 0, 1, 1], [], []>} : vector<8x8xf32>, vector<8x32xf32>, vector<8x32xf32> -> vector<8x32xf32>
    %466 = tpu.reciprocal %463 {approx = true} : vector<8x1xf32> -> vector<8x1xf32>
    %467 = vector.broadcast %466 : vector<8x1xf32> to vector<8x32xf32>
    %468 = arith.mulf %465, %467 : vector<8x32xf32>
    %469 = arith.addf %445, %468 : vector<8x32xf32>
    %470 = vector.extract_strided_slice %9 {offsets = [2, 4, 0], sizes = [1, 1, 8], strides = [1, 1, 1]} : vector<4x8x8xf32> to vector<1x1x8xf32>
    %471 = vector.shape_cast %470 : vector<1x1x8xf32> to vector<1x8xf32>
    %472 = vector.extract_strided_slice %10 {offsets = [4, 0, 2], sizes = [1, 8, 1], strides = [1, 1, 1]} : vector<8x8x4xf32> to vector<1x8x1xf32>
    %473 = vector.shape_cast %472 : vector<1x8x1xf32> to vector<8x1xf32>
    %474 = vector.broadcast %473 : vector<8x1xf32> to vector<8x8xf32>
    %475 = vector.broadcast %471 : vector<1x8xf32> to vector<8x8xf32>
    %476 = arith.addf %474, %475 : vector<8x8xf32>
    %cst_96 = arith.constant 2.000000e-01 : f32
    %477 = vector.broadcast %cst_96 : f32 to vector<8x8xf32>
    %478 = arith.mulf %477, %476 : vector<8x8xf32>
    %479 = arith.maximumf %476, %478 : vector<8x8xf32>
    %480 = arith.addf %479, %8 : vector<8x8xf32>
    %cst_97 = arith.constant dense<0xFF800000> : vector<8xf32>
    %481 = vector.multi_reduction <maximumf>, %480, %cst_97 [1] : vector<8x8xf32> to vector<8xf32>
    %482 = vector.shape_cast %481 : vector<8xf32> to vector<8x1xf32>
    %483 = vector.broadcast %482 : vector<8x1xf32> to vector<8x8xf32>
    %484 = arith.subf %480, %483 : vector<8x8xf32>
    %485 = math.exp %484 : vector<8x8xf32>
    %cst_98 = arith.constant dense<0.000000e+00> : vector<8xf32>
    %486 = vector.multi_reduction <add>, %485, %cst_98 [1] : vector<8x8xf32> to vector<8xf32>
    %487 = vector.shape_cast %486 : vector<8xf32> to vector<8x1xf32>
    %488 = vector.extract_strided_slice %420 {offsets = [0, 64], sizes = [8, 32], strides = [1, 1]} : vector<8x128xf32> to vector<8x32xf32>
    %cst_99 = arith.constant dense<0.000000e+00> : vector<8x32xf32>
    %489 = tpu.matmul %485, %488, %cst_99 {dimension_numbers = #tpu.dot_dimension_numbers<[1], [0], [0], [1], [0, 0, 1, 1], [], []>} : vector<8x8xf32>, vector<8x32xf32>, vector<8x32xf32> -> vector<8x32xf32>
    %490 = tpu.reciprocal %487 {approx = true} : vector<8x1xf32> -> vector<8x1xf32>
    %491 = vector.broadcast %490 : vector<8x1xf32> to vector<8x32xf32>
    %492 = arith.mulf %489, %491 : vector<8x32xf32>
    %493 = arith.addf %469, %492 : vector<8x32xf32>
    %494 = vector.extract_strided_slice %9 {offsets = [3, 4, 0], sizes = [1, 1, 8], strides = [1, 1, 1]} : vector<4x8x8xf32> to vector<1x1x8xf32>
    %495 = vector.shape_cast %494 : vector<1x1x8xf32> to vector<1x8xf32>
    %496 = vector.extract_strided_slice %10 {offsets = [4, 0, 3], sizes = [1, 8, 1], strides = [1, 1, 1]} : vector<8x8x4xf32> to vector<1x8x1xf32>
    %497 = vector.shape_cast %496 : vector<1x8x1xf32> to vector<8x1xf32>
    %498 = vector.broadcast %497 : vector<8x1xf32> to vector<8x8xf32>
    %499 = vector.broadcast %495 : vector<1x8xf32> to vector<8x8xf32>
    %500 = arith.addf %498, %499 : vector<8x8xf32>
    %cst_100 = arith.constant 2.000000e-01 : f32
    %501 = vector.broadcast %cst_100 : f32 to vector<8x8xf32>
    %502 = arith.mulf %501, %500 : vector<8x8xf32>
    %503 = arith.maximumf %500, %502 : vector<8x8xf32>
    %504 = arith.addf %503, %8 : vector<8x8xf32>
    %cst_101 = arith.constant dense<0xFF800000> : vector<8xf32>
    %505 = vector.multi_reduction <maximumf>, %504, %cst_101 [1] : vector<8x8xf32> to vector<8xf32>
    %506 = vector.shape_cast %505 : vector<8xf32> to vector<8x1xf32>
    %507 = vector.broadcast %506 : vector<8x1xf32> to vector<8x8xf32>
    %508 = arith.subf %504, %507 : vector<8x8xf32>
    %509 = math.exp %508 : vector<8x8xf32>
    %cst_102 = arith.constant dense<0.000000e+00> : vector<8xf32>
    %510 = vector.multi_reduction <add>, %509, %cst_102 [1] : vector<8x8xf32> to vector<8xf32>
    %511 = vector.shape_cast %510 : vector<8xf32> to vector<8x1xf32>
    %512 = vector.extract_strided_slice %420 {offsets = [0, 96], sizes = [8, 32], strides = [1, 1]} : vector<8x128xf32> to vector<8x32xf32>
    %cst_103 = arith.constant dense<0.000000e+00> : vector<8x32xf32>
    %513 = tpu.matmul %509, %512, %cst_103 {dimension_numbers = #tpu.dot_dimension_numbers<[1], [0], [0], [1], [0, 0, 1, 1], [], []>} : vector<8x8xf32>, vector<8x32xf32>, vector<8x32xf32> -> vector<8x32xf32>
    %514 = tpu.reciprocal %511 {approx = true} : vector<8x1xf32> -> vector<8x1xf32>
    %515 = vector.broadcast %514 : vector<8x1xf32> to vector<8x32xf32>
    %516 = arith.mulf %513, %515 : vector<8x32xf32>
    %517 = arith.addf %493, %516 : vector<8x32xf32>
    %cst_104 = arith.constant 2.500000e-01 : f32
    %518 = vector.broadcast %cst_104 : f32 to vector<8x32xf32>
    %519 = arith.mulf %517, %518 : vector<8x32xf32>
    %520 = vector.broadcast %11 : vector<1x32xf32> to vector<8x32xf32>
    %521 = arith.addf %519, %520 : vector<8x32xf32>
    %522 = vector.extract_strided_slice %2 {offsets = [40, 0], sizes = [8, 128], strides = [1, 1]} : vector<64x128xf32> to vector<8x128xf32>
    %cst_105 = arith.constant 0.000000e+00 : f32
    %523 = vector.broadcast %cst_105 : f32 to vector<8x32xf32>
    %524 = vector.extract_strided_slice %9 {offsets = [0, 5, 0], sizes = [1, 1, 8], strides = [1, 1, 1]} : vector<4x8x8xf32> to vector<1x1x8xf32>
    %525 = vector.shape_cast %524 : vector<1x1x8xf32> to vector<1x8xf32>
    %526 = vector.extract_strided_slice %10 {offsets = [5, 0, 0], sizes = [1, 8, 1], strides = [1, 1, 1]} : vector<8x8x4xf32> to vector<1x8x1xf32>
    %527 = vector.shape_cast %526 : vector<1x8x1xf32> to vector<8x1xf32>
    %528 = vector.broadcast %527 : vector<8x1xf32> to vector<8x8xf32>
    %529 = vector.broadcast %525 : vector<1x8xf32> to vector<8x8xf32>
    %530 = arith.addf %528, %529 : vector<8x8xf32>
    %cst_106 = arith.constant 2.000000e-01 : f32
    %531 = vector.broadcast %cst_106 : f32 to vector<8x8xf32>
    %532 = arith.mulf %531, %530 : vector<8x8xf32>
    %533 = arith.maximumf %530, %532 : vector<8x8xf32>
    %534 = arith.addf %533, %8 : vector<8x8xf32>
    %cst_107 = arith.constant dense<0xFF800000> : vector<8xf32>
    %535 = vector.multi_reduction <maximumf>, %534, %cst_107 [1] : vector<8x8xf32> to vector<8xf32>
    %536 = vector.shape_cast %535 : vector<8xf32> to vector<8x1xf32>
    %537 = vector.broadcast %536 : vector<8x1xf32> to vector<8x8xf32>
    %538 = arith.subf %534, %537 : vector<8x8xf32>
    %539 = math.exp %538 : vector<8x8xf32>
    %cst_108 = arith.constant dense<0.000000e+00> : vector<8xf32>
    %540 = vector.multi_reduction <add>, %539, %cst_108 [1] : vector<8x8xf32> to vector<8xf32>
    %541 = vector.shape_cast %540 : vector<8xf32> to vector<8x1xf32>
    %542 = vector.extract_strided_slice %522 {offsets = [0, 0], sizes = [8, 32], strides = [1, 1]} : vector<8x128xf32> to vector<8x32xf32>
    %cst_109 = arith.constant dense<0.000000e+00> : vector<8x32xf32>
    %543 = tpu.matmul %539, %542, %cst_109 {dimension_numbers = #tpu.dot_dimension_numbers<[1], [0], [0], [1], [0, 0, 1, 1], [], []>} : vector<8x8xf32>, vector<8x32xf32>, vector<8x32xf32> -> vector<8x32xf32>
    %544 = tpu.reciprocal %541 {approx = true} : vector<8x1xf32> -> vector<8x1xf32>
    %545 = vector.broadcast %544 : vector<8x1xf32> to vector<8x32xf32>
    %546 = arith.mulf %543, %545 : vector<8x32xf32>
    %547 = arith.addf %523, %546 : vector<8x32xf32>
    %548 = vector.extract_strided_slice %9 {offsets = [1, 5, 0], sizes = [1, 1, 8], strides = [1, 1, 1]} : vector<4x8x8xf32> to vector<1x1x8xf32>
    %549 = vector.shape_cast %548 : vector<1x1x8xf32> to vector<1x8xf32>
    %550 = vector.extract_strided_slice %10 {offsets = [5, 0, 1], sizes = [1, 8, 1], strides = [1, 1, 1]} : vector<8x8x4xf32> to vector<1x8x1xf32>
    %551 = vector.shape_cast %550 : vector<1x8x1xf32> to vector<8x1xf32>
    %552 = vector.broadcast %551 : vector<8x1xf32> to vector<8x8xf32>
    %553 = vector.broadcast %549 : vector<1x8xf32> to vector<8x8xf32>
    %554 = arith.addf %552, %553 : vector<8x8xf32>
    %cst_110 = arith.constant 2.000000e-01 : f32
    %555 = vector.broadcast %cst_110 : f32 to vector<8x8xf32>
    %556 = arith.mulf %555, %554 : vector<8x8xf32>
    %557 = arith.maximumf %554, %556 : vector<8x8xf32>
    %558 = arith.addf %557, %8 : vector<8x8xf32>
    %cst_111 = arith.constant dense<0xFF800000> : vector<8xf32>
    %559 = vector.multi_reduction <maximumf>, %558, %cst_111 [1] : vector<8x8xf32> to vector<8xf32>
    %560 = vector.shape_cast %559 : vector<8xf32> to vector<8x1xf32>
    %561 = vector.broadcast %560 : vector<8x1xf32> to vector<8x8xf32>
    %562 = arith.subf %558, %561 : vector<8x8xf32>
    %563 = math.exp %562 : vector<8x8xf32>
    %cst_112 = arith.constant dense<0.000000e+00> : vector<8xf32>
    %564 = vector.multi_reduction <add>, %563, %cst_112 [1] : vector<8x8xf32> to vector<8xf32>
    %565 = vector.shape_cast %564 : vector<8xf32> to vector<8x1xf32>
    %566 = vector.extract_strided_slice %522 {offsets = [0, 32], sizes = [8, 32], strides = [1, 1]} : vector<8x128xf32> to vector<8x32xf32>
    %cst_113 = arith.constant dense<0.000000e+00> : vector<8x32xf32>
    %567 = tpu.matmul %563, %566, %cst_113 {dimension_numbers = #tpu.dot_dimension_numbers<[1], [0], [0], [1], [0, 0, 1, 1], [], []>} : vector<8x8xf32>, vector<8x32xf32>, vector<8x32xf32> -> vector<8x32xf32>
    %568 = tpu.reciprocal %565 {approx = true} : vector<8x1xf32> -> vector<8x1xf32>
    %569 = vector.broadcast %568 : vector<8x1xf32> to vector<8x32xf32>
    %570 = arith.mulf %567, %569 : vector<8x32xf32>
    %571 = arith.addf %547, %570 : vector<8x32xf32>
    %572 = vector.extract_strided_slice %9 {offsets = [2, 5, 0], sizes = [1, 1, 8], strides = [1, 1, 1]} : vector<4x8x8xf32> to vector<1x1x8xf32>
    %573 = vector.shape_cast %572 : vector<1x1x8xf32> to vector<1x8xf32>
    %574 = vector.extract_strided_slice %10 {offsets = [5, 0, 2], sizes = [1, 8, 1], strides = [1, 1, 1]} : vector<8x8x4xf32> to vector<1x8x1xf32>
    %575 = vector.shape_cast %574 : vector<1x8x1xf32> to vector<8x1xf32>
    %576 = vector.broadcast %575 : vector<8x1xf32> to vector<8x8xf32>
    %577 = vector.broadcast %573 : vector<1x8xf32> to vector<8x8xf32>
    %578 = arith.addf %576, %577 : vector<8x8xf32>
    %cst_114 = arith.constant 2.000000e-01 : f32
    %579 = vector.broadcast %cst_114 : f32 to vector<8x8xf32>
    %580 = arith.mulf %579, %578 : vector<8x8xf32>
    %581 = arith.maximumf %578, %580 : vector<8x8xf32>
    %582 = arith.addf %581, %8 : vector<8x8xf32>
    %cst_115 = arith.constant dense<0xFF800000> : vector<8xf32>
    %583 = vector.multi_reduction <maximumf>, %582, %cst_115 [1] : vector<8x8xf32> to vector<8xf32>
    %584 = vector.shape_cast %583 : vector<8xf32> to vector<8x1xf32>
    %585 = vector.broadcast %584 : vector<8x1xf32> to vector<8x8xf32>
    %586 = arith.subf %582, %585 : vector<8x8xf32>
    %587 = math.exp %586 : vector<8x8xf32>
    %cst_116 = arith.constant dense<0.000000e+00> : vector<8xf32>
    %588 = vector.multi_reduction <add>, %587, %cst_116 [1] : vector<8x8xf32> to vector<8xf32>
    %589 = vector.shape_cast %588 : vector<8xf32> to vector<8x1xf32>
    %590 = vector.extract_strided_slice %522 {offsets = [0, 64], sizes = [8, 32], strides = [1, 1]} : vector<8x128xf32> to vector<8x32xf32>
    %cst_117 = arith.constant dense<0.000000e+00> : vector<8x32xf32>
    %591 = tpu.matmul %587, %590, %cst_117 {dimension_numbers = #tpu.dot_dimension_numbers<[1], [0], [0], [1], [0, 0, 1, 1], [], []>} : vector<8x8xf32>, vector<8x32xf32>, vector<8x32xf32> -> vector<8x32xf32>
    %592 = tpu.reciprocal %589 {approx = true} : vector<8x1xf32> -> vector<8x1xf32>
    %593 = vector.broadcast %592 : vector<8x1xf32> to vector<8x32xf32>
    %594 = arith.mulf %591, %593 : vector<8x32xf32>
    %595 = arith.addf %571, %594 : vector<8x32xf32>
    %596 = vector.extract_strided_slice %9 {offsets = [3, 5, 0], sizes = [1, 1, 8], strides = [1, 1, 1]} : vector<4x8x8xf32> to vector<1x1x8xf32>
    %597 = vector.shape_cast %596 : vector<1x1x8xf32> to vector<1x8xf32>
    %598 = vector.extract_strided_slice %10 {offsets = [5, 0, 3], sizes = [1, 8, 1], strides = [1, 1, 1]} : vector<8x8x4xf32> to vector<1x8x1xf32>
    %599 = vector.shape_cast %598 : vector<1x8x1xf32> to vector<8x1xf32>
    %600 = vector.broadcast %599 : vector<8x1xf32> to vector<8x8xf32>
    %601 = vector.broadcast %597 : vector<1x8xf32> to vector<8x8xf32>
    %602 = arith.addf %600, %601 : vector<8x8xf32>
    %cst_118 = arith.constant 2.000000e-01 : f32
    %603 = vector.broadcast %cst_118 : f32 to vector<8x8xf32>
    %604 = arith.mulf %603, %602 : vector<8x8xf32>
    %605 = arith.maximumf %602, %604 : vector<8x8xf32>
    %606 = arith.addf %605, %8 : vector<8x8xf32>
    %cst_119 = arith.constant dense<0xFF800000> : vector<8xf32>
    %607 = vector.multi_reduction <maximumf>, %606, %cst_119 [1] : vector<8x8xf32> to vector<8xf32>
    %608 = vector.shape_cast %607 : vector<8xf32> to vector<8x1xf32>
    %609 = vector.broadcast %608 : vector<8x1xf32> to vector<8x8xf32>
    %610 = arith.subf %606, %609 : vector<8x8xf32>
    %611 = math.exp %610 : vector<8x8xf32>
    %cst_120 = arith.constant dense<0.000000e+00> : vector<8xf32>
    %612 = vector.multi_reduction <add>, %611, %cst_120 [1] : vector<8x8xf32> to vector<8xf32>
    %613 = vector.shape_cast %612 : vector<8xf32> to vector<8x1xf32>
    %614 = vector.extract_strided_slice %522 {offsets = [0, 96], sizes = [8, 32], strides = [1, 1]} : vector<8x128xf32> to vector<8x32xf32>
    %cst_121 = arith.constant dense<0.000000e+00> : vector<8x32xf32>
    %615 = tpu.matmul %611, %614, %cst_121 {dimension_numbers = #tpu.dot_dimension_numbers<[1], [0], [0], [1], [0, 0, 1, 1], [], []>} : vector<8x8xf32>, vector<8x32xf32>, vector<8x32xf32> -> vector<8x32xf32>
    %616 = tpu.reciprocal %613 {approx = true} : vector<8x1xf32> -> vector<8x1xf32>
    %617 = vector.broadcast %616 : vector<8x1xf32> to vector<8x32xf32>
    %618 = arith.mulf %615, %617 : vector<8x32xf32>
    %619 = arith.addf %595, %618 : vector<8x32xf32>
    %cst_122 = arith.constant 2.500000e-01 : f32
    %620 = vector.broadcast %cst_122 : f32 to vector<8x32xf32>
    %621 = arith.mulf %619, %620 : vector<8x32xf32>
    %622 = vector.broadcast %11 : vector<1x32xf32> to vector<8x32xf32>
    %623 = arith.addf %621, %622 : vector<8x32xf32>
    %624 = vector.extract_strided_slice %2 {offsets = [48, 0], sizes = [8, 128], strides = [1, 1]} : vector<64x128xf32> to vector<8x128xf32>
    %cst_123 = arith.constant 0.000000e+00 : f32
    %625 = vector.broadcast %cst_123 : f32 to vector<8x32xf32>
    %626 = vector.extract_strided_slice %9 {offsets = [0, 6, 0], sizes = [1, 1, 8], strides = [1, 1, 1]} : vector<4x8x8xf32> to vector<1x1x8xf32>
    %627 = vector.shape_cast %626 : vector<1x1x8xf32> to vector<1x8xf32>
    %628 = vector.extract_strided_slice %10 {offsets = [6, 0, 0], sizes = [1, 8, 1], strides = [1, 1, 1]} : vector<8x8x4xf32> to vector<1x8x1xf32>
    %629 = vector.shape_cast %628 : vector<1x8x1xf32> to vector<8x1xf32>
    %630 = vector.broadcast %629 : vector<8x1xf32> to vector<8x8xf32>
    %631 = vector.broadcast %627 : vector<1x8xf32> to vector<8x8xf32>
    %632 = arith.addf %630, %631 : vector<8x8xf32>
    %cst_124 = arith.constant 2.000000e-01 : f32
    %633 = vector.broadcast %cst_124 : f32 to vector<8x8xf32>
    %634 = arith.mulf %633, %632 : vector<8x8xf32>
    %635 = arith.maximumf %632, %634 : vector<8x8xf32>
    %636 = arith.addf %635, %8 : vector<8x8xf32>
    %cst_125 = arith.constant dense<0xFF800000> : vector<8xf32>
    %637 = vector.multi_reduction <maximumf>, %636, %cst_125 [1] : vector<8x8xf32> to vector<8xf32>
    %638 = vector.shape_cast %637 : vector<8xf32> to vector<8x1xf32>
    %639 = vector.broadcast %638 : vector<8x1xf32> to vector<8x8xf32>
    %640 = arith.subf %636, %639 : vector<8x8xf32>
    %641 = math.exp %640 : vector<8x8xf32>
    %cst_126 = arith.constant dense<0.000000e+00> : vector<8xf32>
    %642 = vector.multi_reduction <add>, %641, %cst_126 [1] : vector<8x8xf32> to vector<8xf32>
    %643 = vector.shape_cast %642 : vector<8xf32> to vector<8x1xf32>
    %644 = vector.extract_strided_slice %624 {offsets = [0, 0], sizes = [8, 32], strides = [1, 1]} : vector<8x128xf32> to vector<8x32xf32>
    %cst_127 = arith.constant dense<0.000000e+00> : vector<8x32xf32>
    %645 = tpu.matmul %641, %644, %cst_127 {dimension_numbers = #tpu.dot_dimension_numbers<[1], [0], [0], [1], [0, 0, 1, 1], [], []>} : vector<8x8xf32>, vector<8x32xf32>, vector<8x32xf32> -> vector<8x32xf32>
    %646 = tpu.reciprocal %643 {approx = true} : vector<8x1xf32> -> vector<8x1xf32>
    %647 = vector.broadcast %646 : vector<8x1xf32> to vector<8x32xf32>
    %648 = arith.mulf %645, %647 : vector<8x32xf32>
    %649 = arith.addf %625, %648 : vector<8x32xf32>
    %650 = vector.extract_strided_slice %9 {offsets = [1, 6, 0], sizes = [1, 1, 8], strides = [1, 1, 1]} : vector<4x8x8xf32> to vector<1x1x8xf32>
    %651 = vector.shape_cast %650 : vector<1x1x8xf32> to vector<1x8xf32>
    %652 = vector.extract_strided_slice %10 {offsets = [6, 0, 1], sizes = [1, 8, 1], strides = [1, 1, 1]} : vector<8x8x4xf32> to vector<1x8x1xf32>
    %653 = vector.shape_cast %652 : vector<1x8x1xf32> to vector<8x1xf32>
    %654 = vector.broadcast %653 : vector<8x1xf32> to vector<8x8xf32>
    %655 = vector.broadcast %651 : vector<1x8xf32> to vector<8x8xf32>
    %656 = arith.addf %654, %655 : vector<8x8xf32>
    %cst_128 = arith.constant 2.000000e-01 : f32
    %657 = vector.broadcast %cst_128 : f32 to vector<8x8xf32>
    %658 = arith.mulf %657, %656 : vector<8x8xf32>
    %659 = arith.maximumf %656, %658 : vector<8x8xf32>
    %660 = arith.addf %659, %8 : vector<8x8xf32>
    %cst_129 = arith.constant dense<0xFF800000> : vector<8xf32>
    %661 = vector.multi_reduction <maximumf>, %660, %cst_129 [1] : vector<8x8xf32> to vector<8xf32>
    %662 = vector.shape_cast %661 : vector<8xf32> to vector<8x1xf32>
    %663 = vector.broadcast %662 : vector<8x1xf32> to vector<8x8xf32>
    %664 = arith.subf %660, %663 : vector<8x8xf32>
    %665 = math.exp %664 : vector<8x8xf32>
    %cst_130 = arith.constant dense<0.000000e+00> : vector<8xf32>
    %666 = vector.multi_reduction <add>, %665, %cst_130 [1] : vector<8x8xf32> to vector<8xf32>
    %667 = vector.shape_cast %666 : vector<8xf32> to vector<8x1xf32>
    %668 = vector.extract_strided_slice %624 {offsets = [0, 32], sizes = [8, 32], strides = [1, 1]} : vector<8x128xf32> to vector<8x32xf32>
    %cst_131 = arith.constant dense<0.000000e+00> : vector<8x32xf32>
    %669 = tpu.matmul %665, %668, %cst_131 {dimension_numbers = #tpu.dot_dimension_numbers<[1], [0], [0], [1], [0, 0, 1, 1], [], []>} : vector<8x8xf32>, vector<8x32xf32>, vector<8x32xf32> -> vector<8x32xf32>
    %670 = tpu.reciprocal %667 {approx = true} : vector<8x1xf32> -> vector<8x1xf32>
    %671 = vector.broadcast %670 : vector<8x1xf32> to vector<8x32xf32>
    %672 = arith.mulf %669, %671 : vector<8x32xf32>
    %673 = arith.addf %649, %672 : vector<8x32xf32>
    %674 = vector.extract_strided_slice %9 {offsets = [2, 6, 0], sizes = [1, 1, 8], strides = [1, 1, 1]} : vector<4x8x8xf32> to vector<1x1x8xf32>
    %675 = vector.shape_cast %674 : vector<1x1x8xf32> to vector<1x8xf32>
    %676 = vector.extract_strided_slice %10 {offsets = [6, 0, 2], sizes = [1, 8, 1], strides = [1, 1, 1]} : vector<8x8x4xf32> to vector<1x8x1xf32>
    %677 = vector.shape_cast %676 : vector<1x8x1xf32> to vector<8x1xf32>
    %678 = vector.broadcast %677 : vector<8x1xf32> to vector<8x8xf32>
    %679 = vector.broadcast %675 : vector<1x8xf32> to vector<8x8xf32>
    %680 = arith.addf %678, %679 : vector<8x8xf32>
    %cst_132 = arith.constant 2.000000e-01 : f32
    %681 = vector.broadcast %cst_132 : f32 to vector<8x8xf32>
    %682 = arith.mulf %681, %680 : vector<8x8xf32>
    %683 = arith.maximumf %680, %682 : vector<8x8xf32>
    %684 = arith.addf %683, %8 : vector<8x8xf32>
    %cst_133 = arith.constant dense<0xFF800000> : vector<8xf32>
    %685 = vector.multi_reduction <maximumf>, %684, %cst_133 [1] : vector<8x8xf32> to vector<8xf32>
    %686 = vector.shape_cast %685 : vector<8xf32> to vector<8x1xf32>
    %687 = vector.broadcast %686 : vector<8x1xf32> to vector<8x8xf32>
    %688 = arith.subf %684, %687 : vector<8x8xf32>
    %689 = math.exp %688 : vector<8x8xf32>
    %cst_134 = arith.constant dense<0.000000e+00> : vector<8xf32>
    %690 = vector.multi_reduction <add>, %689, %cst_134 [1] : vector<8x8xf32> to vector<8xf32>
    %691 = vector.shape_cast %690 : vector<8xf32> to vector<8x1xf32>
    %692 = vector.extract_strided_slice %624 {offsets = [0, 64], sizes = [8, 32], strides = [1, 1]} : vector<8x128xf32> to vector<8x32xf32>
    %cst_135 = arith.constant dense<0.000000e+00> : vector<8x32xf32>
    %693 = tpu.matmul %689, %692, %cst_135 {dimension_numbers = #tpu.dot_dimension_numbers<[1], [0], [0], [1], [0, 0, 1, 1], [], []>} : vector<8x8xf32>, vector<8x32xf32>, vector<8x32xf32> -> vector<8x32xf32>
    %694 = tpu.reciprocal %691 {approx = true} : vector<8x1xf32> -> vector<8x1xf32>
    %695 = vector.broadcast %694 : vector<8x1xf32> to vector<8x32xf32>
    %696 = arith.mulf %693, %695 : vector<8x32xf32>
    %697 = arith.addf %673, %696 : vector<8x32xf32>
    %698 = vector.extract_strided_slice %9 {offsets = [3, 6, 0], sizes = [1, 1, 8], strides = [1, 1, 1]} : vector<4x8x8xf32> to vector<1x1x8xf32>
    %699 = vector.shape_cast %698 : vector<1x1x8xf32> to vector<1x8xf32>
    %700 = vector.extract_strided_slice %10 {offsets = [6, 0, 3], sizes = [1, 8, 1], strides = [1, 1, 1]} : vector<8x8x4xf32> to vector<1x8x1xf32>
    %701 = vector.shape_cast %700 : vector<1x8x1xf32> to vector<8x1xf32>
    %702 = vector.broadcast %701 : vector<8x1xf32> to vector<8x8xf32>
    %703 = vector.broadcast %699 : vector<1x8xf32> to vector<8x8xf32>
    %704 = arith.addf %702, %703 : vector<8x8xf32>
    %cst_136 = arith.constant 2.000000e-01 : f32
    %705 = vector.broadcast %cst_136 : f32 to vector<8x8xf32>
    %706 = arith.mulf %705, %704 : vector<8x8xf32>
    %707 = arith.maximumf %704, %706 : vector<8x8xf32>
    %708 = arith.addf %707, %8 : vector<8x8xf32>
    %cst_137 = arith.constant dense<0xFF800000> : vector<8xf32>
    %709 = vector.multi_reduction <maximumf>, %708, %cst_137 [1] : vector<8x8xf32> to vector<8xf32>
    %710 = vector.shape_cast %709 : vector<8xf32> to vector<8x1xf32>
    %711 = vector.broadcast %710 : vector<8x1xf32> to vector<8x8xf32>
    %712 = arith.subf %708, %711 : vector<8x8xf32>
    %713 = math.exp %712 : vector<8x8xf32>
    %cst_138 = arith.constant dense<0.000000e+00> : vector<8xf32>
    %714 = vector.multi_reduction <add>, %713, %cst_138 [1] : vector<8x8xf32> to vector<8xf32>
    %715 = vector.shape_cast %714 : vector<8xf32> to vector<8x1xf32>
    %716 = vector.extract_strided_slice %624 {offsets = [0, 96], sizes = [8, 32], strides = [1, 1]} : vector<8x128xf32> to vector<8x32xf32>
    %cst_139 = arith.constant dense<0.000000e+00> : vector<8x32xf32>
    %717 = tpu.matmul %713, %716, %cst_139 {dimension_numbers = #tpu.dot_dimension_numbers<[1], [0], [0], [1], [0, 0, 1, 1], [], []>} : vector<8x8xf32>, vector<8x32xf32>, vector<8x32xf32> -> vector<8x32xf32>
    %718 = tpu.reciprocal %715 {approx = true} : vector<8x1xf32> -> vector<8x1xf32>
    %719 = vector.broadcast %718 : vector<8x1xf32> to vector<8x32xf32>
    %720 = arith.mulf %717, %719 : vector<8x32xf32>
    %721 = arith.addf %697, %720 : vector<8x32xf32>
    %cst_140 = arith.constant 2.500000e-01 : f32
    %722 = vector.broadcast %cst_140 : f32 to vector<8x32xf32>
    %723 = arith.mulf %721, %722 : vector<8x32xf32>
    %724 = vector.broadcast %11 : vector<1x32xf32> to vector<8x32xf32>
    %725 = arith.addf %723, %724 : vector<8x32xf32>
    %726 = vector.extract_strided_slice %2 {offsets = [56, 0], sizes = [8, 128], strides = [1, 1]} : vector<64x128xf32> to vector<8x128xf32>
    %cst_141 = arith.constant 0.000000e+00 : f32
    %727 = vector.broadcast %cst_141 : f32 to vector<8x32xf32>
    %728 = vector.extract_strided_slice %9 {offsets = [0, 7, 0], sizes = [1, 1, 8], strides = [1, 1, 1]} : vector<4x8x8xf32> to vector<1x1x8xf32>
    %729 = vector.shape_cast %728 : vector<1x1x8xf32> to vector<1x8xf32>
    %730 = vector.extract_strided_slice %10 {offsets = [7, 0, 0], sizes = [1, 8, 1], strides = [1, 1, 1]} : vector<8x8x4xf32> to vector<1x8x1xf32>
    %731 = vector.shape_cast %730 : vector<1x8x1xf32> to vector<8x1xf32>
    %732 = vector.broadcast %731 : vector<8x1xf32> to vector<8x8xf32>
    %733 = vector.broadcast %729 : vector<1x8xf32> to vector<8x8xf32>
    %734 = arith.addf %732, %733 : vector<8x8xf32>
    %cst_142 = arith.constant 2.000000e-01 : f32
    %735 = vector.broadcast %cst_142 : f32 to vector<8x8xf32>
    %736 = arith.mulf %735, %734 : vector<8x8xf32>
    %737 = arith.maximumf %734, %736 : vector<8x8xf32>
    %738 = arith.addf %737, %8 : vector<8x8xf32>
    %cst_143 = arith.constant dense<0xFF800000> : vector<8xf32>
    %739 = vector.multi_reduction <maximumf>, %738, %cst_143 [1] : vector<8x8xf32> to vector<8xf32>
    %740 = vector.shape_cast %739 : vector<8xf32> to vector<8x1xf32>
    %741 = vector.broadcast %740 : vector<8x1xf32> to vector<8x8xf32>
    %742 = arith.subf %738, %741 : vector<8x8xf32>
    %743 = math.exp %742 : vector<8x8xf32>
    %cst_144 = arith.constant dense<0.000000e+00> : vector<8xf32>
    %744 = vector.multi_reduction <add>, %743, %cst_144 [1] : vector<8x8xf32> to vector<8xf32>
    %745 = vector.shape_cast %744 : vector<8xf32> to vector<8x1xf32>
    %746 = vector.extract_strided_slice %726 {offsets = [0, 0], sizes = [8, 32], strides = [1, 1]} : vector<8x128xf32> to vector<8x32xf32>
    %cst_145 = arith.constant dense<0.000000e+00> : vector<8x32xf32>
    %747 = tpu.matmul %743, %746, %cst_145 {dimension_numbers = #tpu.dot_dimension_numbers<[1], [0], [0], [1], [0, 0, 1, 1], [], []>} : vector<8x8xf32>, vector<8x32xf32>, vector<8x32xf32> -> vector<8x32xf32>
    %748 = tpu.reciprocal %745 {approx = true} : vector<8x1xf32> -> vector<8x1xf32>
    %749 = vector.broadcast %748 : vector<8x1xf32> to vector<8x32xf32>
    %750 = arith.mulf %747, %749 : vector<8x32xf32>
    %751 = arith.addf %727, %750 : vector<8x32xf32>
    %752 = vector.extract_strided_slice %9 {offsets = [1, 7, 0], sizes = [1, 1, 8], strides = [1, 1, 1]} : vector<4x8x8xf32> to vector<1x1x8xf32>
    %753 = vector.shape_cast %752 : vector<1x1x8xf32> to vector<1x8xf32>
    %754 = vector.extract_strided_slice %10 {offsets = [7, 0, 1], sizes = [1, 8, 1], strides = [1, 1, 1]} : vector<8x8x4xf32> to vector<1x8x1xf32>
    %755 = vector.shape_cast %754 : vector<1x8x1xf32> to vector<8x1xf32>
    %756 = vector.broadcast %755 : vector<8x1xf32> to vector<8x8xf32>
    %757 = vector.broadcast %753 : vector<1x8xf32> to vector<8x8xf32>
    %758 = arith.addf %756, %757 : vector<8x8xf32>
    %cst_146 = arith.constant 2.000000e-01 : f32
    %759 = vector.broadcast %cst_146 : f32 to vector<8x8xf32>
    %760 = arith.mulf %759, %758 : vector<8x8xf32>
    %761 = arith.maximumf %758, %760 : vector<8x8xf32>
    %762 = arith.addf %761, %8 : vector<8x8xf32>
    %cst_147 = arith.constant dense<0xFF800000> : vector<8xf32>
    %763 = vector.multi_reduction <maximumf>, %762, %cst_147 [1] : vector<8x8xf32> to vector<8xf32>
    %764 = vector.shape_cast %763 : vector<8xf32> to vector<8x1xf32>
    %765 = vector.broadcast %764 : vector<8x1xf32> to vector<8x8xf32>
    %766 = arith.subf %762, %765 : vector<8x8xf32>
    %767 = math.exp %766 : vector<8x8xf32>
    %cst_148 = arith.constant dense<0.000000e+00> : vector<8xf32>
    %768 = vector.multi_reduction <add>, %767, %cst_148 [1] : vector<8x8xf32> to vector<8xf32>
    %769 = vector.shape_cast %768 : vector<8xf32> to vector<8x1xf32>
    %770 = vector.extract_strided_slice %726 {offsets = [0, 32], sizes = [8, 32], strides = [1, 1]} : vector<8x128xf32> to vector<8x32xf32>
    %cst_149 = arith.constant dense<0.000000e+00> : vector<8x32xf32>
    %771 = tpu.matmul %767, %770, %cst_149 {dimension_numbers = #tpu.dot_dimension_numbers<[1], [0], [0], [1], [0, 0, 1, 1], [], []>} : vector<8x8xf32>, vector<8x32xf32>, vector<8x32xf32> -> vector<8x32xf32>
    %772 = tpu.reciprocal %769 {approx = true} : vector<8x1xf32> -> vector<8x1xf32>
    %773 = vector.broadcast %772 : vector<8x1xf32> to vector<8x32xf32>
    %774 = arith.mulf %771, %773 : vector<8x32xf32>
    %775 = arith.addf %751, %774 : vector<8x32xf32>
    %776 = vector.extract_strided_slice %9 {offsets = [2, 7, 0], sizes = [1, 1, 8], strides = [1, 1, 1]} : vector<4x8x8xf32> to vector<1x1x8xf32>
    %777 = vector.shape_cast %776 : vector<1x1x8xf32> to vector<1x8xf32>
    %778 = vector.extract_strided_slice %10 {offsets = [7, 0, 2], sizes = [1, 8, 1], strides = [1, 1, 1]} : vector<8x8x4xf32> to vector<1x8x1xf32>
    %779 = vector.shape_cast %778 : vector<1x8x1xf32> to vector<8x1xf32>
    %780 = vector.broadcast %779 : vector<8x1xf32> to vector<8x8xf32>
    %781 = vector.broadcast %777 : vector<1x8xf32> to vector<8x8xf32>
    %782 = arith.addf %780, %781 : vector<8x8xf32>
    %cst_150 = arith.constant 2.000000e-01 : f32
    %783 = vector.broadcast %cst_150 : f32 to vector<8x8xf32>
    %784 = arith.mulf %783, %782 : vector<8x8xf32>
    %785 = arith.maximumf %782, %784 : vector<8x8xf32>
    %786 = arith.addf %785, %8 : vector<8x8xf32>
    %cst_151 = arith.constant dense<0xFF800000> : vector<8xf32>
    %787 = vector.multi_reduction <maximumf>, %786, %cst_151 [1] : vector<8x8xf32> to vector<8xf32>
    %788 = vector.shape_cast %787 : vector<8xf32> to vector<8x1xf32>
    %789 = vector.broadcast %788 : vector<8x1xf32> to vector<8x8xf32>
    %790 = arith.subf %786, %789 : vector<8x8xf32>
    %791 = math.exp %790 : vector<8x8xf32>
    %cst_152 = arith.constant dense<0.000000e+00> : vector<8xf32>
    %792 = vector.multi_reduction <add>, %791, %cst_152 [1] : vector<8x8xf32> to vector<8xf32>
    %793 = vector.shape_cast %792 : vector<8xf32> to vector<8x1xf32>
    %794 = vector.extract_strided_slice %726 {offsets = [0, 64], sizes = [8, 32], strides = [1, 1]} : vector<8x128xf32> to vector<8x32xf32>
    %cst_153 = arith.constant dense<0.000000e+00> : vector<8x32xf32>
    %795 = tpu.matmul %791, %794, %cst_153 {dimension_numbers = #tpu.dot_dimension_numbers<[1], [0], [0], [1], [0, 0, 1, 1], [], []>} : vector<8x8xf32>, vector<8x32xf32>, vector<8x32xf32> -> vector<8x32xf32>
    %796 = tpu.reciprocal %793 {approx = true} : vector<8x1xf32> -> vector<8x1xf32>
    %797 = vector.broadcast %796 : vector<8x1xf32> to vector<8x32xf32>
    %798 = arith.mulf %795, %797 : vector<8x32xf32>
    %799 = arith.addf %775, %798 : vector<8x32xf32>
    %800 = vector.extract_strided_slice %9 {offsets = [3, 7, 0], sizes = [1, 1, 8], strides = [1, 1, 1]} : vector<4x8x8xf32> to vector<1x1x8xf32>
    %801 = vector.shape_cast %800 : vector<1x1x8xf32> to vector<1x8xf32>
    %802 = vector.extract_strided_slice %10 {offsets = [7, 0, 3], sizes = [1, 8, 1], strides = [1, 1, 1]} : vector<8x8x4xf32> to vector<1x8x1xf32>
    %803 = vector.shape_cast %802 : vector<1x8x1xf32> to vector<8x1xf32>
    %804 = vector.broadcast %803 : vector<8x1xf32> to vector<8x8xf32>
    %805 = vector.broadcast %801 : vector<1x8xf32> to vector<8x8xf32>
    %806 = arith.addf %804, %805 : vector<8x8xf32>
    %cst_154 = arith.constant 2.000000e-01 : f32
    %807 = vector.broadcast %cst_154 : f32 to vector<8x8xf32>
    %808 = arith.mulf %807, %806 : vector<8x8xf32>
    %809 = arith.maximumf %806, %808 : vector<8x8xf32>
    %810 = arith.addf %809, %8 : vector<8x8xf32>
    %cst_155 = arith.constant dense<0xFF800000> : vector<8xf32>
    %811 = vector.multi_reduction <maximumf>, %810, %cst_155 [1] : vector<8x8xf32> to vector<8xf32>
    %812 = vector.shape_cast %811 : vector<8xf32> to vector<8x1xf32>
    %813 = vector.broadcast %812 : vector<8x1xf32> to vector<8x8xf32>
    %814 = arith.subf %810, %813 : vector<8x8xf32>
    %815 = math.exp %814 : vector<8x8xf32>
    %cst_156 = arith.constant dense<0.000000e+00> : vector<8xf32>
    %816 = vector.multi_reduction <add>, %815, %cst_156 [1] : vector<8x8xf32> to vector<8xf32>
    %817 = vector.shape_cast %816 : vector<8xf32> to vector<8x1xf32>
    %818 = vector.extract_strided_slice %726 {offsets = [0, 96], sizes = [8, 32], strides = [1, 1]} : vector<8x128xf32> to vector<8x32xf32>
    %cst_157 = arith.constant dense<0.000000e+00> : vector<8x32xf32>
    %819 = tpu.matmul %815, %818, %cst_157 {dimension_numbers = #tpu.dot_dimension_numbers<[1], [0], [0], [1], [0, 0, 1, 1], [], []>} : vector<8x8xf32>, vector<8x32xf32>, vector<8x32xf32> -> vector<8x32xf32>
    %820 = tpu.reciprocal %817 {approx = true} : vector<8x1xf32> -> vector<8x1xf32>
    %821 = vector.broadcast %820 : vector<8x1xf32> to vector<8x32xf32>
    %822 = arith.mulf %819, %821 : vector<8x32xf32>
    %823 = arith.addf %799, %822 : vector<8x32xf32>
    %cst_158 = arith.constant 2.500000e-01 : f32
    %824 = vector.broadcast %cst_158 : f32 to vector<8x32xf32>
    %825 = arith.mulf %823, %824 : vector<8x32xf32>
    %826 = vector.broadcast %11 : vector<1x32xf32> to vector<8x32xf32>
    %827 = arith.addf %825, %826 : vector<8x32xf32>
    %828 = tpu.concatenate %113, %215, %317, %419, %521, %623, %725, %827 in 1 : vector<8x32xf32>, vector<8x32xf32>, vector<8x32xf32>, vector<8x32xf32>, vector<8x32xf32>, vector<8x32xf32>, vector<8x32xf32>, vector<8x32xf32> -> vector<8x256xf32>
    %c0_159 = arith.constant 0 : index
    %c0_160 = arith.constant 0 : index
    %829 = vector.load %arg8[%c0_159, %c0_160] : memref<8x256xf32, #tpu.memory_space<vmem>>, vector<8x256xf32>
    tpu.vector_store %arg8[%c0_159, %c0_160], %828 {strides = array<i32>} : memref<8x256xf32, #tpu.memory_space<vmem>>, vector<8x256xf32>,
    return
  }
  func.func @transform_0(%arg0: i32, %arg1: i32) -> (i32, i32) {
    %c0_i32 = arith.constant 0 : i32
    %c0_i32_0 = arith.constant 0 : i32
    return %arg1, %c0_i32 : i32, i32
  }
  func.func @transform_1(%arg0: i32, %arg1: i32) -> (i32, i32) {
    %c0_i32 = arith.constant 0 : i32
    %c0_i32_0 = arith.constant 0 : i32
    return %arg0, %c0_i32 : i32, i32
  }
  func.func @transform_2(%arg0: i32, %arg1: i32) -> (i32, i32, i32) {
    %c0_i32 = arith.constant 0 : i32
    %c0_i32_0 = arith.constant 0 : i32
    %c0_i32_1 = arith.constant 0 : i32
    return %c0_i32, %arg1, %c0_i32_0 : i32, i32, i32
  }
  func.func @transform_3(%arg0: i32, %arg1: i32) -> (i32, i32, i32) {
    %c0_i32 = arith.constant 0 : i32
    %c0_i32_0 = arith.constant 0 : i32
    return %arg1, %arg0, %c0_i32 : i32, i32, i32
  }
  func.func @transform_4(%arg0: i32, %arg1: i32) -> (i32, i32) {
    %c0_i32 = arith.constant 0 : i32
    %c0_i32_0 = arith.constant 0 : i32
    %c0_i32_1 = arith.constant 0 : i32
    return %c0_i32, %c0_i32_0 : i32, i32
  }
  func.func @transform_5(%arg0: i32, %arg1: i32) -> (i32, i32) {
    %c0_i32 = arith.constant 0 : i32
    %c0_i32_0 = arith.constant 0 : i32
    %c0_i32_1 = arith.constant 0 : i32
    return %c0_i32, %c0_i32_0 : i32, i32
  }
  func.func @transform_6(%arg0: i32, %arg1: i32) -> (i32, i32) {
    %c0_i32 = arith.constant 0 : i32
    return %arg0, %arg1 : i32, i32
  }
}

</mosaic_0001>

<llo_original>
// kernel: tpu_custom_call.1
$region0: #{tpu_custom_call.1}
  #allocation0 [shape = 'u32[]', space=smem, size = 0x4, offset = 0x4, fixed_abs, tag = 'smem constant byte address 0x4 - core index']
  #allocation1 [shape = 'u32[144,128]{1,0:T(1,128)}', space=vmem, size = 0x12000, scoped, tag = 'internal scratch']
  %s0 = inlined_call_operand.vmem [shape: f32[64,16], index: 0, kind: input, shape index: {}]
  %s1 = inlined_call_operand.vmem [shape: s8[8,8], index: 1, kind: input, shape index: {}]
  %s2 = inlined_call_operand.vmem [shape: f32[4,8,8], index: 2, kind: input, shape index: {}]
  %s3 = inlined_call_operand.vmem [shape: f32[8,8,4], index: 3, kind: input, shape index: {}]
  %s4 = inlined_call_operand.vmem [shape: f32[16,128], index: 4, kind: input, shape index: {}]
  %s5 = inlined_call_operand.vmem [shape: f32[1,32], index: 5, kind: input, shape index: {}]
  %s6 = inlined_call_operand.hbm [shape: f32[8,256], index: 6, kind: output, shape index: {}]
  %s7 = sld [smem:[#allocation0]]
  $region34: #{tpu_custom_call.1} parent=0
    _
  %s9 = ssub.s32 1, %s7
  %s10 = scalar_select 0, %s9, %s7
  $region1: #{tpu_custom_call.1} parent=0
    #allocation2 [shape = 'u8[8192]{0}', space=vmem, size = 0x2000, scoped, tag = 'output window, operand 0, single buffered']
    #allocation3 [shape = 's32[1]{0}', space=sflag, size = 0x4, scoped, tag = 'scoped memory for tpu_custom_call.1']
    %11 = vsyncpa [#allocation3], 0
    // Predicated region
    $region2: #{tpu_custom_call.1} parent=1 // pred_check
      _
    $region3: #{tpu_custom_call.1} parent=1 // pred_check_branch
      %13 = sbr.rel (0) target = $region5
    $region4: #{tpu_custom_call.1} parent=1 // pred_region
      _
    $region5: #{tpu_custom_call.1} parent=1 // pred_fallthru
      _
    // Predicated region
    $region6: #{tpu_custom_call.1} parent=1 // pred_check
      _
    $region7: #{tpu_custom_call.1} parent=1 // pred_check_branch
      %15 = sbr.rel (0) target = $region9
    $region8: #{tpu_custom_call.1} parent=1 // pred_region
      _
    $region9: #{tpu_custom_call.1} parent=1 // pred_fallthru
      _
    // Predicated region
    $region10: #{tpu_custom_call.1} parent=1 // pred_check
      _
    $region11: #{tpu_custom_call.1} parent=1 // pred_check_branch
      %17 = sbr.rel (0) target = $region13
    $region12: #{tpu_custom_call.1} parent=1 // pred_region
      _
    $region13: #{tpu_custom_call.1} parent=1 // pred_fallthru
      _
    // Predicated region
    $region14: #{tpu_custom_call.1} parent=1 // pred_check
      _
    $region15: #{tpu_custom_call.1} parent=1 // pred_check_branch
      %19 = sbr.rel (0) target = $region17
    $region16: #{tpu_custom_call.1} parent=1 // pred_region
      _
    $region17: #{tpu_custom_call.1} parent=1 // pred_fallthru
      _
    // Predicated region
    $region18: #{tpu_custom_call.1} parent=1 // pred_check
      _
    $region19: #{tpu_custom_call.1} parent=1 // pred_check_branch
      %21 = sbr.rel (0) target = $region21
    $region20: #{tpu_custom_call.1} parent=1 // pred_region
      _
    $region21: #{tpu_custom_call.1} parent=1 // pred_fallthru
      _
    // Predicated region
    $region22: #{tpu_custom_call.1} parent=1 // pred_check
      _
    $region23: #{tpu_custom_call.1} parent=1 // pred_check_branch
      %23 = sbr.rel (0) target = $region25
    $region24: #{tpu_custom_call.1} parent=1 // pred_region
      _
    $region25: #{tpu_custom_call.1} parent=1 // pred_fallthru
      _
    %v24 = vld [vmem:[%s0] sm:$0xff]
    %v25 = vld [vmem:[%s0 + $0x8] sm:$0xff]
    %v26 = vld [vmem:[%s0 + $0x10] sm:$0xff]
    %v27 = vld [vmem:[%s0 + $0x18] sm:$0xff]
    %v28 = vld [vmem:[%s0 + $0x20] sm:$0xff]
    %v29 = vld [vmem:[%s0 + $0x28] sm:$0xff]
    %v30 = vld [vmem:[%s0 + $0x30] sm:$0xff]
    %v31 = vld [vmem:[%s0 + $0x38] sm:$0xff]
    %v32 = vld [vmem:[%s4] sm:$0xff]
    %v33 = vld [vmem:[%s4 + $0x8] sm:$0xff]
    %vm34 = vcmask 130048
    %v36 = vsel %vm34, %v24, 0
    %v39 = vsel %vm34, %v25, 0
    %v42 = vsel %vm34, %v26, 0
    %v45 = vsel %vm34, %v27, 0
    %v48 = vsel %vm34, %v28, 0
    %v51 = vsel %vm34, %v29, 0
    %v54 = vsel %vm34, %v30, 0
    %v57 = vsel %vm34, %v31, 0
    %59 = vmatprep.subr.mxu0 0.0
    %60 = vmatpush1.msra.mxu0 %v32
    %61 = vmatprep.subr.mxu0 0.0
    %62 = vmatpush1.msra.mxu0 %v33
    %63 = vmatprep.subr.mxu0 0.0
    %64 = vmatpush1.msra.mxu0 0.0
    %65 = vmatprep.subr.mxu0 0.0
    %66 = vmatpush1.msra.mxu0 0.0
    %67 = vmatprep.subr.mxu0 0.0
    %68 = vmatpush1.msra.mxu0 0.0
    %69 = vmatprep.subr.mxu0 0.0
    %70 = vmatpush1.msra.mxu0 0.0
    %71 = vmatprep.subr.mxu0 0.0
    %72 = vmatpush1.msra.mxu0 0.0
    %73 = vmatprep.subr.mxu0 0.0
    %74 = vmatpush1.msra.mxu0 0.0
    %75 = vmatprep.subr.mxu0 0.0
    %76 = vmatpush1.msra.mxu0 0.0
    %77 = vmatprep.subr.mxu0 0.0
    %78 = vmatpush1.msra.mxu0 0.0
    %79 = vmatprep.subr.mxu0 0.0
    %80 = vmatpush1.msra.mxu0 0.0
    %81 = vmatprep.subr.mxu0 0.0
    %82 = vmatpush1.msra.mxu0 0.0
    %83 = vmatprep.subr.mxu0 0.0
    %84 = vmatpush1.msra.mxu0 0.0
    %85 = vmatprep.subr.mxu0 0.0
    %86 = vmatpush1.msra.mxu0 0.0
    %87 = vmatprep.subr.mxu0 0.0
    %88 = vmatpush1.msra.mxu0 0.0
    %89 = vmatprep.subr.mxu0 0.0
    %90 = vmatpush1.msra.mxu0 0.0
    %91 = vmatprep.subr.mxu0 0.0
    %92 = vmatpush1.msra.mxu0 0.0
    %93 = vmatprep.subr.mxu0 0.0
    %94 = vmatpush1.msra.mxu0 0.0
    %95 = vmatprep.subr.mxu0 0.0
    %96 = vmatpush1.msra.mxu0 0.0
    %97 = vmatprep.subr.mxu0 0.0
    %98 = vmatpush1.msra.mxu0 0.0
    %99 = vmatprep.subr.mxu0 0.0
    %100 = vmatpush1.msra.mxu0 0.0
    %101 = vmatprep.subr.mxu0 0.0
    %102 = vmatpush1.msra.mxu0 0.0
    %103 = vmatprep.subr.mxu0 0.0
    %104 = vmatpush1.msra.mxu0 0.0
    %105 = vmatprep.subr.mxu0 0.0
    %106 = vmatpush1.msra.mxu0 0.0
    %107 = vmatprep.subr.mxu0 0.0
    %108 = vmatpush1.msra.mxu0 0.0
    %109 = vmatprep.subr.mxu0 0.0
    %110 = vmatpush1.msra.mxu0 0.0
    %111 = vmatprep.subr.mxu0 0.0
    %112 = vmatpush1.msra.mxu0 0.0
    %113 = vmatprep.subr.mxu0 0.0
    %114 = vmatpush1.msra.mxu0 0.0
    %115 = vmatprep.subr.mxu0 0.0
    %116 = vmatpush1.msra.mxu0 0.0
    %117 = vmatprep.subr.mxu0 0.0
    %118 = vmatpush1.msra.mxu0 0.0
    %119 = vmatprep.subr.mxu0 0.0
    %120 = vmatpush1.msra.mxu0 0.0
    %121 = vmatprep.subr.mxu0 0.0
    %122 = vmatpush1.msra.mxu0 0.0
    %123 = vmatprep.mubr.f32.mxu0 0.0
    %124 = vmatmul.mubr.f32.gmra.mrb[0].mxu0 %v36
    %v125 = vpop.f32.mrb[0].mxu0
    %v126 = vadd.f32 0.0, %v125
    %v127 = vpop.f32.mrb[0].mxu0
    %128 = vmatprep.mubr.f32.mxu0 0.0
    %129 = vmatmul.mubr.f32.gmra.mrb[0].mxu0 %v39
    %v130 = vpop.f32.mrb[0].mxu0
    %v131 = vadd.f32 0.0, %v130
    %v132 = vpop.f32.mrb[0].mxu0
    %133 = vmatprep.mubr.f32.mxu0 0.0
    %134 = vmatmul.mubr.f32.gmra.mrb[0].mxu0 %v42
    %v135 = vpop.f32.mrb[0].mxu0
    %v136 = vadd.f32 0.0, %v135
    %v137 = vpop.f32.mrb[0].mxu0
    %138 = vmatprep.mubr.f32.mxu0 0.0
    %139 = vmatmul.mubr.f32.gmra.mrb[0].mxu0 %v45
    %v140 = vpop.f32.mrb[0].mxu0
    %v141 = vadd.f32 0.0, %v140
    %v142 = vpop.f32.mrb[0].mxu0
    %143 = vmatprep.mubr.f32.mxu0 0.0
    %144 = vmatmul.mubr.f32.gmra.mrb[0].mxu0 %v48
    %v145 = vpop.f32.mrb[0].mxu0
    %v146 = vadd.f32 0.0, %v145
    %v147 = vpop.f32.mrb[0].mxu0
    %148 = vmatprep.mubr.f32.mxu0 0.0
    %149 = vmatmul.mubr.f32.gmra.mrb[0].mxu0 %v51
    %v150 = vpop.f32.mrb[0].mxu0
    %v151 = vadd.f32 0.0, %v150
    %v152 = vpop.f32.mrb[0].mxu0
    %153 = vmatprep.mubr.f32.mxu0 0.0
    %154 = vmatmul.mubr.f32.gmra.mrb[0].mxu0 %v54
    %v155 = vpop.f32.mrb[0].mxu0
    %v156 = vadd.f32 0.0, %v155
    %v157 = vpop.f32.mrb[0].mxu0
    %158 = vmatprep.mubr.f32.mxu0 0.0
    %159 = vmatmul.mubr.f32.gmra.mrb[0].mxu0 %v57
    %v160 = vpop.f32.mrb[0].mxu0
    %v161 = vadd.f32 0.0, %v160
    %v162 = vpop.f32.mrb[0].mxu0
    %163 = vdwg.mxu0
    %v164 = vld [vmem:[%s1] sm:$0x3]
    %v165 = vunpack.c.0.s8 %v164
    %v166 = vcvt.s32.f32 %v165
    %v167 = vsub.f32 %v166, 1.0
    %v168 = vmul.f32 %v167, 1e+30
    %v169 = vld [vmem:[%s2] sm:$0xff]
    %v170 = vld [vmem:[%s2 + $0x8] sm:$0xff]
    %v171 = vld [vmem:[%s2 + $0x10] sm:$0xff]
    %v172 = vld [vmem:[%s2 + $0x18] sm:$0xff]
    %v173 = vld [vmem:[%s3] sm:$0xff]
    %v174 = vld [vmem:[%s3 + $0x8] sm:$0xff]
    %v175 = vld [vmem:[%s3 + $0x10] sm:$0xff]
    %v176 = vld [vmem:[%s3 + $0x18] sm:$0xff]
    %v177 = vld [vmem:[%s3 + $0x20] sm:$0xff]
    %v178 = vld [vmem:[%s3 + $0x28] sm:$0xff]
    %v179 = vld [vmem:[%s3 + $0x30] sm:$0xff]
    %v180 = vld [vmem:[%s3 + $0x38] sm:$0xff]
    %v181 = vld [vmem:[%s5] sm:$0x1]
    %183 = vset.pattern.permute.xlu0 0
    %184 = vperm.xlu0 %183, %v173
    %v185 = vpop.permute.xlu0 %184
    %v187 = vlaneseq
    %v188 = vshrl.u32 %v187, 7
    %v189 = vsub.s32 0, %v188
    %v190 = vrot.slane %v169, %v189
    %v191 = vadd.f32 %v185, %v190
    %v192 = vmul.f32 %v191, 0.2
    %v193 = vmax.f32 %v191, %v192
    %v194 = vadd.f32 %v193, %v168
    %vm195 = vcmask 64512
    %v196 = vsel %vm195, %v194, -inf
    %197 = vmax.xlane.f32.xlu0 %v196
    %v198 = vpop.xlane.xlu0 %197
    %v199 = vsub.f32 %v194, %v198
    %v200 = vmul.f32 %v199, 1.442695
    %v201 = vpow.pop %v200
    %v202 = vsel %vm195, %v201, 0.0
    %203 = vadd.xlane.f32.xlu0 %v202
    %v204 = vpop.xlane.xlu0 %203
    %v206 = vsel %vm195, %v201, 0
    %208 = vmatprep.subr.mxu0 0.0
    %209 = vmatpush1.msra.mxu0 %v126
    %210 = vmatprep.subr.mxu0 0.0
    %211 = vmatpush1.msra.mxu0 0.0
    %212 = vmatprep.subr.mxu0 0.0
    %213 = vmatpush1.msra.mxu0 0.0
    %214 = vmatprep.subr.mxu0 0.0
    %215 = vmatpush1.msra.mxu0 0.0
    %216 = vmatprep.subr.mxu0 0.0
    %217 = vmatpush1.msra.mxu0 0.0
    %218 = vmatprep.subr.mxu0 0.0
    %219 = vmatpush1.msra.mxu0 0.0
    %220 = vmatprep.subr.mxu0 0.0
    %221 = vmatpush1.msra.mxu0 0.0
    %222 = vmatprep.subr.mxu0 0.0
    %223 = vmatpush1.msra.mxu0 0.0
    %224 = vmatprep.subr.mxu0 0.0
    %225 = vmatpush1.msra.mxu0 0.0
    %226 = vmatprep.subr.mxu0 0.0
    %227 = vmatpush1.msra.mxu0 0.0
    %228 = vmatprep.subr.mxu0 0.0
    %229 = vmatpush1.msra.mxu0 0.0
    %230 = vmatprep.subr.mxu0 0.0
    %231 = vmatpush1.msra.mxu0 0.0
    %232 = vmatprep.subr.mxu0 0.0
    %233 = vmatpush1.msra.mxu0 0.0
    %234 = vmatprep.subr.mxu0 0.0
    %235 = vmatpush1.msra.mxu0 0.0
    %236 = vmatprep.subr.mxu0 0.0
    %237 = vmatpush1.msra.mxu0 0.0
    %238 = vmatprep.subr.mxu0 0.0
    %239 = vmatpush1.msra.mxu0 0.0
    %240 = vmatprep.subr.mxu0 0.0
    %241 = vmatpush1.msra.mxu0 0.0
    %242 = vmatprep.subr.mxu0 0.0
    %243 = vmatpush1.msra.mxu0 0.0
    %244 = vmatprep.subr.mxu0 0.0
    %245 = vmatpush1.msra.mxu0 0.0
    %246 = vmatprep.subr.mxu0 0.0
    %247 = vmatpush1.msra.mxu0 0.0
    %248 = vmatprep.subr.mxu0 0.0
    %249 = vmatpush1.msra.mxu0 0.0
    %250 = vmatprep.subr.mxu0 0.0
    %251 = vmatpush1.msra.mxu0 0.0
    %252 = vmatprep.subr.mxu0 0.0
    %253 = vmatpush1.msra.mxu0 0.0
    %254 = vmatprep.subr.mxu0 0.0
    %255 = vmatpush1.msra.mxu0 0.0
    %256 = vmatprep.subr.mxu0 0.0
    %257 = vmatpush1.msra.mxu0 0.0
    %258 = vmatprep.subr.mxu0 0.0
    %259 = vmatpush1.msra.mxu0 0.0
    %260 = vmatprep.subr.mxu0 0.0
    %261 = vmatpush1.msra.mxu0 0.0
    %262 = vmatprep.subr.mxu0 0.0
    %263 = vmatpush1.msra.mxu0 0.0
    %264 = vmatprep.subr.mxu0 0.0
    %265 = vmatpush1.msra.mxu0 0.0
    %266 = vmatprep.subr.mxu0 0.0
    %267 = vmatpush1.msra.mxu0 0.0
    %268 = vmatprep.subr.mxu0 0.0
    %269 = vmatpush1.msra.mxu0 0.0
    %270 = vmatprep.subr.mxu0 0.0
    %271 = vmatpush1.msra.mxu0 0.0
    %272 = vmatprep.mubr.f32.mxu0 0.0
    %273 = vmatmul.mubr.f32.gmra.mrb[0].mxu0 %v206
    %v274 = vpop.f32.mrb[0].mxu0
    %v275 = vadd.f32 0.0, %v274
    %v276 = vpop.f32.mrb[0].mxu0
    %277 = vdwg.mxu0
    %v278 = vrcp.pop %v204
    %v279 = vmul.f32 %v275, %v278
    %v280 = vadd.f32 %v279, 0.0
    %281 = vset.pattern.permute.xlu0 1
    %282 = vperm.xlu0 %281, %v173
    %v283 = vpop.permute.xlu0 %282
    %v285 = vlaneseq
    %v286 = vshrl.u32 %v285, 7
    %v287 = vsub.s32 0, %v286
    %v288 = vrot.slane %v170, %v287
    %v289 = vadd.f32 %v283, %v288
    %v290 = vmul.f32 %v289, 0.2
    %v291 = vmax.f32 %v289, %v290
    %v292 = vadd.f32 %v291, %v168
    %v293 = vsel %vm195, %v292, -inf
    %294 = vmax.xlane.f32.xlu0 %v293
    %v295 = vpop.xlane.xlu0 %294
    %v296 = vsub.f32 %v292, %v295
    %v297 = vmul.f32 %v296, 1.442695
    %v298 = vpow.pop %v297
    %v299 = vsel %vm195, %v298, 0.0
    %300 = vadd.xlane.f32.xlu0 %v299
    %v301 = vpop.xlane.xlu0 %300
    %303 = vrot.lane.b32.xlu0 %v126, 96
    %v304 = vpop.permute.xlu0 %303
    %v307 = vsel %vm195, %v298, 0
    %309 = vmatprep.subr.mxu0 0.0
    %310 = vmatpush1.msra.mxu0 %v304
    %311 = vmatprep.subr.mxu0 0.0
    %312 = vmatpush1.msra.mxu0 0.0
    %313 = vmatprep.subr.mxu0 0.0
    %314 = vmatpush1.msra.mxu0 0.0
    %315 = vmatprep.subr.mxu0 0.0
    %316 = vmatpush1.msra.mxu0 0.0
    %317 = vmatprep.subr.mxu0 0.0
    %318 = vmatpush1.msra.mxu0 0.0
    %319 = vmatprep.subr.mxu0 0.0
    %320 = vmatpush1.msra.mxu0 0.0
    %321 = vmatprep.subr.mxu0 0.0
    %322 = vmatpush1.msra.mxu0 0.0
    %323 = vmatprep.subr.mxu0 0.0
    %324 = vmatpush1.msra.mxu0 0.0
    %325 = vmatprep.subr.mxu0 0.0
    %326 = vmatpush1.msra.mxu0 0.0
    %327 = vmatprep.subr.mxu0 0.0
    %328 = vmatpush1.msra.mxu0 0.0
    %329 = vmatprep.subr.mxu0 0.0
    %330 = vmatpush1.msra.mxu0 0.0
    %331 = vmatprep.subr.mxu0 0.0
    %332 = vmatpush1.msra.mxu0 0.0
    %333 = vmatprep.subr.mxu0 0.0
    %334 = vmatpush1.msra.mxu0 0.0
    %335 = vmatprep.subr.mxu0 0.0
    %336 = vmatpush1.msra.mxu0 0.0
    %337 = vmatprep.subr.mxu0 0.0
    %338 = vmatpush1.msra.mxu0 0.0
    %339 = vmatprep.subr.mxu0 0.0
    %340 = vmatpush1.msra.mxu0 0.0
    %341 = vmatprep.subr.mxu0 0.0
    %342 = vmatpush1.msra.mxu0 0.0
    %343 = vmatprep.subr.mxu0 0.0
    %344 = vmatpush1.msra.mxu0 0.0
    %345 = vmatprep.subr.mxu0 0.0
    %346 = vmatpush1.msra.mxu0 0.0
    %347 = vmatprep.subr.mxu0 0.0
    %348 = vmatpush1.msra.mxu0 0.0
    %349 = vmatprep.subr.mxu0 0.0
    %350 = vmatpush1.msra.mxu0 0.0
    %351 = vmatprep.subr.mxu0 0.0
    %352 = vmatpush1.msra.mxu0 0.0
    %353 = vmatprep.subr.mxu0 0.0
    %354 = vmatpush1.msra.mxu0 0.0
    %355 = vmatprep.subr.mxu0 0.0
    %356 = vmatpush1.msra.mxu0 0.0
    %357 = vmatprep.subr.mxu0 0.0
    %358 = vmatpush1.msra.mxu0 0.0
    %359 = vmatprep.subr.mxu0 0.0
    %360 = vmatpush1.msra.mxu0 0.0
    %361 = vmatprep.subr.mxu0 0.0
    %362 = vmatpush1.msra.mxu0 0.0
    %363 = vmatprep.subr.mxu0 0.0
    %364 = vmatpush1.msra.mxu0 0.0
    %365 = vmatprep.subr.mxu0 0.0
    %366 = vmatpush1.msra.mxu0 0.0
    %367 = vmatprep.subr.mxu0 0.0
    %368 = vmatpush1.msra.mxu0 0.0
    %369 = vmatprep.subr.mxu0 0.0
    %370 = vmatpush1.msra.mxu0 0.0
    %371 = vmatprep.subr.mxu0 0.0
    %372 = vmatpush1.msra.mxu0 0.0
    %373 = vmatprep.mubr.f32.mxu0 0.0
    %374 = vmatmul.mubr.f32.gmra.mrb[0].mxu0 %v307
    %v375 = vpop.f32.mrb[0].mxu0
    %v376 = vadd.f32 0.0, %v375
    %v377 = vpop.f32.mrb[0].mxu0
    %378 = vdwg.mxu0
    %v379 = vrcp.pop %v301
    %v380 = vmul.f32 %v376, %v379
    %v381 = vadd.f32 %v280, %v380
    %382 = vset.pattern.permute.xlu0 2
    %383 = vperm.xlu0 %382, %v173
    %v384 = vpop.permute.xlu0 %383
    %v386 = vlaneseq
    %v387 = vshrl.u32 %v386, 7
    %v388 = vsub.s32 0, %v387
    %v389 = vrot.slane %v171, %v388
    %v390 = vadd.f32 %v384, %v389
    %v391 = vmul.f32 %v390, 0.2
    %v392 = vmax.f32 %v390, %v391
    %v393 = vadd.f32 %v392, %v168
    %v394 = vsel %vm195, %v393, -inf
    %395 = vmax.xlane.f32.xlu0 %v394
    %v396 = vpop.xlane.xlu0 %395
    %v397 = vsub.f32 %v393, %v396
    %v398 = vmul.f32 %v397, 1.442695
    %v399 = vpow.pop %v398
    %v400 = vsel %vm195, %v399, 0.0
    %401 = vadd.xlane.f32.xlu0 %v400
    %v402 = vpop.xlane.xlu0 %401
    %403 = vrot.lane.b32.xlu0 %v126, 64
    %v404 = vpop.permute.xlu0 %403
    %v407 = vsel %vm195, %v399, 0
    %409 = vmatprep.subr.mxu0 0.0
    %410 = vmatpush1.msra.mxu0 %v404
    %411 = vmatprep.subr.mxu0 0.0
    %412 = vmatpush1.msra.mxu0 0.0
    %413 = vmatprep.subr.mxu0 0.0
    %414 = vmatpush1.msra.mxu0 0.0
    %415 = vmatprep.subr.mxu0 0.0
    %416 = vmatpush1.msra.mxu0 0.0
    %417 = vmatprep.subr.mxu0 0.0
    %418 = vmatpush1.msra.mxu0 0.0
    %419 = vmatprep.subr.mxu0 0.0
    %420 = vmatpush1.msra.mxu0 0.0
    %421 = vmatprep.subr.mxu0 0.0
    %422 = vmatpush1.msra.mxu0 0.0
    %423 = vmatprep.subr.mxu0 0.0
    %424 = vmatpush1.msra.mxu0 0.0
    %425 = vmatprep.subr.mxu0 0.0
    %426 = vmatpush1.msra.mxu0 0.0
    %427 = vmatprep.subr.mxu0 0.0
    %428 = vmatpush1.msra.mxu0 0.0
    %429 = vmatprep.subr.mxu0 0.0
    %430 = vmatpush1.msra.mxu0 0.0
    %431 = vmatprep.subr.mxu0 0.0
    %432 = vmatpush1.msra.mxu0 0.0
    %433 = vmatprep.subr.mxu0 0.0
    %434 = vmatpush1.msra.mxu0 0.0
    %435 = vmatprep.subr.mxu0 0.0
    %436 = vmatpush1.msra.mxu0 0.0
    %437 = vmatprep.subr.mxu0 0.0
    %438 = vmatpush1.msra.mxu0 0.0
    %439 = vmatprep.subr.mxu0 0.0
    %440 = vmatpush1.msra.mxu0 0.0
    %441 = vmatprep.subr.mxu0 0.0
    %442 = vmatpush1.msra.mxu0 0.0
    %443 = vmatprep.subr.mxu0 0.0
    %444 = vmatpush1.msra.mxu0 0.0
    %445 = vmatprep.subr.mxu0 0.0
    %446 = vmatpush1.msra.mxu0 0.0
    %447 = vmatprep.subr.mxu0 0.0
    %448 = vmatpush1.msra.mxu0 0.0
    %449 = vmatprep.subr.mxu0 0.0
    %450 = vmatpush1.msra.mxu0 0.0
    %451 = vmatprep.subr.mxu0 0.0
    %452 = vmatpush1.msra.mxu0 0.0
    %453 = vmatprep.subr.mxu0 0.0
    %454 = vmatpush1.msra.mxu0 0.0
    %455 = vmatprep.subr.mxu0 0.0
    %456 = vmatpush1.msra.mxu0 0.0
    %457 = vmatprep.subr.mxu0 0.0
    %458 = vmatpush1.msra.mxu0 0.0
    %459 = vmatprep.subr.mxu0 0.0
    %460 = vmatpush1.msra.mxu0 0.0
    %461 = vmatprep.subr.mxu0 0.0
    %462 = vmatpush1.msra.mxu0 0.0
    %463 = vmatprep.subr.mxu0 0.0
    %464 = vmatpush1.msra.mxu0 0.0
    %465 = vmatprep.subr.mxu0 0.0
    %466 = vmatpush1.msra.mxu0 0.0
    %467 = vmatprep.subr.mxu0 0.0
    %468 = vmatpush1.msra.mxu0 0.0
    %469 = vmatprep.subr.mxu0 0.0
    %470 = vmatpush1.msra.mxu0 0.0
    %471 = vmatprep.subr.mxu0 0.0
    %472 = vmatpush1.msra.mxu0 0.0
    %473 = vmatprep.mubr.f32.mxu0 0.0
    %474 = vmatmul.mubr.f32.gmra.mrb[0].mxu0 %v407
    %v475 = vpop.f32.mrb[0].mxu0
    %v476 = vadd.f32 0.0, %v475
    %v477 = vpop.f32.mrb[0].mxu0
    %478 = vdwg.mxu0
    %v479 = vrcp.pop %v402
    %v480 = vmul.f32 %v476, %v479
    %v481 = vadd.f32 %v381, %v480
    %482 = vset.pattern.permute.xlu0 3
    %483 = vperm.xlu0 %482, %v173
    %v484 = vpop.permute.xlu0 %483
    %v486 = vlaneseq
    %v487 = vshrl.u32 %v486, 7
    %v488 = vsub.s32 0, %v487
    %v489 = vrot.slane %v172, %v488
    %v490 = vadd.f32 %v484, %v489
    %v491 = vmul.f32 %v490, 0.2
    %v492 = vmax.f32 %v490, %v491
    %v493 = vadd.f32 %v492, %v168
    %v494 = vsel %vm195, %v493, -inf
    %495 = vmax.xlane.f32.xlu0 %v494
    %v496 = vpop.xlane.xlu0 %495
    %v497 = vsub.f32 %v493, %v496
    %v498 = vmul.f32 %v497, 1.442695
    %v499 = vpow.pop %v498
    %v500 = vsel %vm195, %v499, 0.0
    %501 = vadd.xlane.f32.xlu0 %v500
    %v502 = vpop.xlane.xlu0 %501
    %503 = vrot.lane.b32.xlu0 %v126, 32
    %v504 = vpop.permute.xlu0 %503
    %v507 = vsel %vm195, %v499, 0
    %509 = vmatprep.subr.mxu0 0.0
    %510 = vmatpush1.msra.mxu0 %v504
    %511 = vmatprep.subr.mxu0 0.0
    %512 = vmatpush1.msra.mxu0 0.0
    %513 = vmatprep.subr.mxu0 0.0
    %514 = vmatpush1.msra.mxu0 0.0
    %515 = vmatprep.subr.mxu0 0.0
    %516 = vmatpush1.msra.mxu0 0.0
    %517 = vmatprep.subr.mxu0 0.0
    %518 = vmatpush1.msra.mxu0 0.0
    %519 = vmatprep.subr.mxu0 0.0
    %520 = vmatpush1.msra.mxu0 0.0
    %521 = vmatprep.subr.mxu0 0.0
    %522 = vmatpush1.msra.mxu0 0.0
    %523 = vmatprep.subr.mxu0 0.0
    %524 = vmatpush1.msra.mxu0 0.0
    %525 = vmatprep.subr.mxu0 0.0
    %526 = vmatpush1.msra.mxu0 0.0
    %527 = vmatprep.subr.mxu0 0.0
    %528 = vmatpush1.msra.mxu0 0.0
    %529 = vmatprep.subr.mxu0 0.0
    %530 = vmatpush1.msra.mxu0 0.0
    %531 = vmatprep.subr.mxu0 0.0
    %532 = vmatpush1.msra.mxu0 0.0
    %533 = vmatprep.subr.mxu0 0.0
    %534 = vmatpush1.msra.mxu0 0.0
    %535 = vmatprep.subr.mxu0 0.0
    %536 = vmatpush1.msra.mxu0 0.0
    %537 = vmatprep.subr.mxu0 0.0
    %538 = vmatpush1.msra.mxu0 0.0
    %539 = vmatprep.subr.mxu0 0.0
    %540 = vmatpush1.msra.mxu0 0.0
    %541 = vmatprep.subr.mxu0 0.0
    %542 = vmatpush1.msra.mxu0 0.0
    %543 = vmatprep.subr.mxu0 0.0
    %544 = vmatpush1.msra.mxu0 0.0
    %545 = vmatprep.subr.mxu0 0.0
    %546 = vmatpush1.msra.mxu0 0.0
    %547 = vmatprep.subr.mxu0 0.0
    %548 = vmatpush1.msra.mxu0 0.0
    %549 = vmatprep.subr.mxu0 0.0
    %550 = vmatpush1.msra.mxu0 0.0
    %551 = vmatprep.subr.mxu0 0.0
    %552 = vmatpush1.msra.mxu0 0.0
    %553 = vmatprep.subr.mxu0 0.0
    %554 = vmatpush1.msra.mxu0 0.0
    %555 = vmatprep.subr.mxu0 0.0
    %556 = vmatpush1.msra.mxu0 0.0
    %557 = vmatprep.subr.mxu0 0.0
    %558 = vmatpush1.msra.mxu0 0.0
    %559 = vmatprep.subr.mxu0 0.0
    %560 = vmatpush1.msra.mxu0 0.0
    %561 = vmatprep.subr.mxu0 0.0
    %562 = vmatpush1.msra.mxu0 0.0
    %563 = vmatprep.subr.mxu0 0.0
    %564 = vmatpush1.msra.mxu0 0.0
    %565 = vmatprep.subr.mxu0 0.0
    %566 = vmatpush1.msra.mxu0 0.0
    %567 = vmatprep.subr.mxu0 0.0
    %568 = vmatpush1.msra.mxu0 0.0
    %569 = vmatprep.subr.mxu0 0.0
    %570 = vmatpush1.msra.mxu0 0.0
    %571 = vmatprep.subr.mxu0 0.0
    %572 = vmatpush1.msra.mxu0 0.0
    %573 = vmatprep.mubr.f32.mxu0 0.0
    %574 = vmatmul.mubr.f32.gmra.mrb[0].mxu0 %v507
    %v575 = vpop.f32.mrb[0].mxu0
    %v576 = vadd.f32 0.0, %v575
    %v577 = vpop.f32.mrb[0].mxu0
    %578 = vdwg.mxu0
    %v579 = vrcp.pop %v502
    %v580 = vmul.f32 %v576, %v579
    %v581 = vadd.f32 %v481, %v580
    %v582 = vmul.f32 %v581, 0.25
    %v584 = vlaneseq
    %v585 = vshrl.u32 %v584, 7
    %v586 = vsub.s32 0, %v585
    %v587 = vrot.slane %v181, %v586
    %v589 = vadd.f32 %v582, %v587
    %591 = vset.pattern.permute.xlu0 0
    %592 = vperm.xlu0 %591, %v174
    %v593 = vpop.permute.xlu0 %592
    %v595 = vlaneseq
    %v596 = vshrl.u32 %v595, 7
    %v597 = vsub.s32 1, %v596
    %v598 = vrot.slane %v169, %v597
    %v599 = vadd.f32 %v593, %v598
    %v600 = vmul.f32 %v599, 0.2
    %v601 = vmax.f32 %v599, %v600
    %v602 = vadd.f32 %v601, %v168
    %v603 = vsel %vm195, %v602, -inf
    %604 = vmax.xlane.f32.xlu0 %v603
    %v605 = vpop.xlane.xlu0 %604
    %v606 = vsub.f32 %v602, %v605
    %v607 = vmul.f32 %v606, 1.442695
    %v608 = vpow.pop %v607
    %v609 = vsel %vm195, %v608, 0.0
    %610 = vadd.xlane.f32.xlu0 %v609
    %v611 = vpop.xlane.xlu0 %610
    %v613 = vsel %vm195, %v608, 0
    %615 = vmatprep.subr.mxu0 0.0
    %616 = vmatpush1.msra.mxu0 %v131
    %617 = vmatprep.subr.mxu0 0.0
    %618 = vmatpush1.msra.mxu0 0.0
    %619 = vmatprep.subr.mxu0 0.0
    %620 = vmatpush1.msra.mxu0 0.0
    %621 = vmatprep.subr.mxu0 0.0
    %622 = vmatpush1.msra.mxu0 0.0
    %623 = vmatprep.subr.mxu0 0.0
    %624 = vmatpush1.msra.mxu0 0.0
    %625 = vmatprep.subr.mxu0 0.0
    %626 = vmatpush1.msra.mxu0 0.0
    %627 = vmatprep.subr.mxu0 0.0
    %628 = vmatpush1.msra.mxu0 0.0
    %629 = vmatprep.subr.mxu0 0.0
    %630 = vmatpush1.msra.mxu0 0.0
    %631 = vmatprep.subr.mxu0 0.0
    %632 = vmatpush1.msra.mxu0 0.0
    %633 = vmatprep.subr.mxu0 0.0
    %634 = vmatpush1.msra.mxu0 0.0
    %635 = vmatprep.subr.mxu0 0.0
    %636 = vmatpush1.msra.mxu0 0.0
    %637 = vmatprep.subr.mxu0 0.0
    %638 = vmatpush1.msra.mxu0 0.0
    %639 = vmatprep.subr.mxu0 0.0
    %640 = vmatpush1.msra.mxu0 0.0
    %641 = vmatprep.subr.mxu0 0.0
    %642 = vmatpush1.msra.mxu0 0.0
    %643 = vmatprep.subr.mxu0 0.0
    %644 = vmatpush1.msra.mxu0 0.0
    %645 = vmatprep.subr.mxu0 0.0
    %646 = vmatpush1.msra.mxu0 0.0
    %647 = vmatprep.subr.mxu0 0.0
    %648 = vmatpush1.msra.mxu0 0.0
    %649 = vmatprep.subr.mxu0 0.0
    %650 = vmatpush1.msra.mxu0 0.0
    %651 = vmatprep.subr.mxu0 0.0
    %652 = vmatpush1.msra.mxu0 0.0
    %653 = vmatprep.subr.mxu0 0.0
    %654 = vmatpush1.msra.mxu0 0.0
    %655 = vmatprep.subr.mxu0 0.0
    %656 = vmatpush1.msra.mxu0 0.0
    %657 = vmatprep.subr.mxu0 0.0
    %658 = vmatpush1.msra.mxu0 0.0
    %659 = vmatprep.subr.mxu0 0.0
    %660 = vmatpush1.msra.mxu0 0.0
    %661 = vmatprep.subr.mxu0 0.0
    %662 = vmatpush1.msra.mxu0 0.0
    %663 = vmatprep.subr.mxu0 0.0
    %664 = vmatpush1.msra.mxu0 0.0
    %665 = vmatprep.subr.mxu0 0.0
    %666 = vmatpush1.msra.mxu0 0.0
    %667 = vmatprep.subr.mxu0 0.0
    %668 = vmatpush1.msra.mxu0 0.0
    %669 = vmatprep.subr.mxu0 0.0
    %670 = vmatpush1.msra.mxu0 0.0
    %671 = vmatprep.subr.mxu0 0.0
    %672 = vmatpush1.msra.mxu0 0.0
    %673 = vmatprep.subr.mxu0 0.0
    %674 = vmatpush1.msra.mxu0 0.0
    %675 = vmatprep.subr.mxu0 0.0
    %676 = vmatpush1.msra.mxu0 0.0
    %677 = vmatprep.subr.mxu0 0.0
    %678 = vmatpush1.msra.mxu0 0.0
    %679 = vmatprep.mubr.f32.mxu0 0.0
    %680 = vmatmul.mubr.f32.gmra.mrb[0].mxu0 %v613
    %v681 = vpop.f32.mrb[0].mxu0
    %v682 = vadd.f32 0.0, %v681
    %v683 = vpop.f32.mrb[0].mxu0
    %684 = vdwg.mxu0
    %v685 = vrcp.pop %v611
    %v686 = vmul.f32 %v682, %v685
    %v687 = vadd.f32 %v686, 0.0
    %688 = vset.pattern.permute.xlu0 1
    %689 = vperm.xlu0 %688, %v174
    %v690 = vpop.permute.xlu0 %689
    %v692 = vlaneseq
    %v693 = vshrl.u32 %v692, 7
    %v694 = vsub.s32 1, %v693
    %v695 = vrot.slane %v170, %v694
    %v696 = vadd.f32 %v690, %v695
    %v697 = vmul.f32 %v696, 0.2
    %v698 = vmax.f32 %v696, %v697
    %v699 = vadd.f32 %v698, %v168
    %v700 = vsel %vm195, %v699, -inf
    %701 = vmax.xlane.f32.xlu0 %v700
    %v702 = vpop.xlane.xlu0 %701
    %v703 = vsub.f32 %v699, %v702
    %v704 = vmul.f32 %v703, 1.442695
    %v705 = vpow.pop %v704
    %v706 = vsel %vm195, %v705, 0.0
    %707 = vadd.xlane.f32.xlu0 %v706
    %v708 = vpop.xlane.xlu0 %707
    %710 = vrot.lane.b32.xlu0 %v131, 96
    %v711 = vpop.permute.xlu0 %710
    %v714 = vsel %vm195, %v705, 0
    %716 = vmatprep.subr.mxu0 0.0
    %717 = vmatpush1.msra.mxu0 %v711
    %718 = vmatprep.subr.mxu0 0.0
    %719 = vmatpush1.msra.mxu0 0.0
    %720 = vmatprep.subr.mxu0 0.0
    %721 = vmatpush1.msra.mxu0 0.0
    %722 = vmatprep.subr.mxu0 0.0
    %723 = vmatpush1.msra.mxu0 0.0
    %724 = vmatprep.subr.mxu0 0.0
    %725 = vmatpush1.msra.mxu0 0.0
    %726 = vmatprep.subr.mxu0 0.0
    %727 = vmatpush1.msra.mxu0 0.0
    %728 = vmatprep.subr.mxu0 0.0
    %729 = vmatpush1.msra.mxu0 0.0
    %730 = vmatprep.subr.mxu0 0.0
    %731 = vmatpush1.msra.mxu0 0.0
    %732 = vmatprep.subr.mxu0 0.0
    %733 = vmatpush1.msra.mxu0 0.0
    %734 = vmatprep.subr.mxu0 0.0
    %735 = vmatpush1.msra.mxu0 0.0
    %736 = vmatprep.subr.mxu0 0.0
    %737 = vmatpush1.msra.mxu0 0.0
    %738 = vmatprep.subr.mxu0 0.0
    %739 = vmatpush1.msra.mxu0 0.0
    %740 = vmatprep.subr.mxu0 0.0
    %741 = vmatpush1.msra.mxu0 0.0
    %742 = vmatprep.subr.mxu0 0.0
    %743 = vmatpush1.msra.mxu0 0.0
    %744 = vmatprep.subr.mxu0 0.0
    %745 = vmatpush1.msra.mxu0 0.0
    %746 = vmatprep.subr.mxu0 0.0
    %747 = vmatpush1.msra.mxu0 0.0
    %748 = vmatprep.subr.mxu0 0.0
    %749 = vmatpush1.msra.mxu0 0.0
    %750 = vmatprep.subr.mxu0 0.0
    %751 = vmatpush1.msra.mxu0 0.0
    %752 = vmatprep.subr.mxu0 0.0
    %753 = vmatpush1.msra.mxu0 0.0
    %754 = vmatprep.subr.mxu0 0.0
    %755 = vmatpush1.msra.mxu0 0.0
    %756 = vmatprep.subr.mxu0 0.0
    %757 = vmatpush1.msra.mxu0 0.0
    %758 = vmatprep.subr.mxu0 0.0
    %759 = vmatpush1.msra.mxu0 0.0
    %760 = vmatprep.subr.mxu0 0.0
    %761 = vmatpush1.msra.mxu0 0.0
    %762 = vmatprep.subr.mxu0 0.0
    %763 = vmatpush1.msra.mxu0 0.0
    %764 = vmatprep.subr.mxu0 0.0
    %765 = vmatpush1.msra.mxu0 0.0
    %766 = vmatprep.subr.mxu0 0.0
    %767 = vmatpush1.msra.mxu0 0.0
    %768 = vmatprep.subr.mxu0 0.0
    %769 = vmatpush1.msra.mxu0 0.0
    %770 = vmatprep.subr.mxu0 0.0
    %771 = vmatpush1.msra.mxu0 0.0
    %772 = vmatprep.subr.mxu0 0.0
    %773 = vmatpush1.msra.mxu0 0.0
    %774 = vmatprep.subr.mxu0 0.0
    %775 = vmatpush1.msra.mxu0 0.0
    %776 = vmatprep.subr.mxu0 0.0
    %777 = vmatpush1.msra.mxu0 0.0
    %778 = vmatprep.subr.mxu0 0.0
    %779 = vmatpush1.msra.mxu0 0.0
    %780 = vmatprep.mubr.f32.mxu0 0.0
    %781 = vmatmul.mubr.f32.gmra.mrb[0].mxu0 %v714
    %v782 = vpop.f32.mrb[0].mxu0
    %v783 = vadd.f32 0.0, %v782
    %v784 = vpop.f32.mrb[0].mxu0
    %785 = vdwg.mxu0
    %v786 = vrcp.pop %v708
    %v787 = vmul.f32 %v783, %v786
    %v788 = vadd.f32 %v687, %v787
    %789 = vset.pattern.permute.xlu0 2
    %790 = vperm.xlu0 %789, %v174
    %v791 = vpop.permute.xlu0 %790
    %v793 = vlaneseq
    %v794 = vshrl.u32 %v793, 7
    %v795 = vsub.s32 1, %v794
    %v796 = vrot.slane %v171, %v795
    %v797 = vadd.f32 %v791, %v796
    %v798 = vmul.f32 %v797, 0.2
    %v799 = vmax.f32 %v797, %v798
    %v800 = vadd.f32 %v799, %v168
    %v801 = vsel %vm195, %v800, -inf
    %802 = vmax.xlane.f32.xlu0 %v801
    %v803 = vpop.xlane.xlu0 %802
    %v804 = vsub.f32 %v800, %v803
    %v805 = vmul.f32 %v804, 1.442695
    %v806 = vpow.pop %v805
    %v807 = vsel %vm195, %v806, 0.0
    %808 = vadd.xlane.f32.xlu0 %v807
    %v809 = vpop.xlane.xlu0 %808
    %810 = vrot.lane.b32.xlu0 %v131, 64
    %v811 = vpop.permute.xlu0 %810
    %v814 = vsel %vm195, %v806, 0
    %816 = vmatprep.subr.mxu0 0.0
    %817 = vmatpush1.msra.mxu0 %v811
    %818 = vmatprep.subr.mxu0 0.0
    %819 = vmatpush1.msra.mxu0 0.0
    %820 = vmatprep.subr.mxu0 0.0
    %821 = vmatpush1.msra.mxu0 0.0
    %822 = vmatprep.subr.mxu0 0.0
    %823 = vmatpush1.msra.mxu0 0.0
    %824 = vmatprep.subr.mxu0 0.0
    %825 = vmatpush1.msra.mxu0 0.0
    %826 = vmatprep.subr.mxu0 0.0
    %827 = vmatpush1.msra.mxu0 0.0
    %828 = vmatprep.subr.mxu0 0.0
    %829 = vmatpush1.msra.mxu0 0.0
    %830 = vmatprep.subr.mxu0 0.0
    %831 = vmatpush1.msra.mxu0 0.0
    %832 = vmatprep.subr.mxu0 0.0
    %833 = vmatpush1.msra.mxu0 0.0
    %834 = vmatprep.subr.mxu0 0.0
    %835 = vmatpush1.msra.mxu0 0.0
    %836 = vmatprep.subr.mxu0 0.0
    %837 = vmatpush1.msra.mxu0 0.0
    %838 = vmatprep.subr.mxu0 0.0
    %839 = vmatpush1.msra.mxu0 0.0
    %840 = vmatprep.subr.mxu0 0.0
    %841 = vmatpush1.msra.mxu0 0.0
    %842 = vmatprep.subr.mxu0 0.0
    %843 = vmatpush1.msra.mxu0 0.0
    %844 = vmatprep.subr.mxu0 0.0
    %845 = vmatpush1.msra.mxu0 0.0
    %846 = vmatprep.subr.mxu0 0.0
    %847 = vmatpush1.msra.mxu0 0.0
    %848 = vmatprep.subr.mxu0 0.0
    %849 = vmatpush1.msra.mxu0 0.0
    %850 = vmatprep.subr.mxu0 0.0
    %851 = vmatpush1.msra.mxu0 0.0
    %852 = vmatprep.subr.mxu0 0.0
    %853 = vmatpush1.msra.mxu0 0.0
    %854 = vmatprep.subr.mxu0 0.0
    %855 = vmatpush1.msra.mxu0 0.0
    %856 = vmatprep.subr.mxu0 0.0
    %857 = vmatpush1.msra.mxu0 0.0
    %858 = vmatprep.subr.mxu0 0.0
    %859 = vmatpush1.msra.mxu0 0.0
    %860 = vmatprep.subr.mxu0 0.0
    %861 = vmatpush1.msra.mxu0 0.0
    %862 = vmatprep.subr.mxu0 0.0
    %863 = vmatpush1.msra.mxu0 0.0
    %864 = vmatprep.subr.mxu0 0.0
    %865 = vmatpush1.msra.mxu0 0.0
    %866 = vmatprep.subr.mxu0 0.0
    %867 = vmatpush1.msra.mxu0 0.0
    %868 = vmatprep.subr.mxu0 0.0
    %869 = vmatpush1.msra.mxu0 0.0
    %870 = vmatprep.subr.mxu0 0.0
    %871 = vmatpush1.msra.mxu0 0.0
    %872 = vmatprep.subr.mxu0 0.0
    %873 = vmatpush1.msra.mxu0 0.0
    %874 = vmatprep.subr.mxu0 0.0
    %875 = vmatpush1.msra.mxu0 0.0
    %876 = vmatprep.subr.mxu0 0.0
    %877 = vmatpush1.msra.mxu0 0.0
    %878 = vmatprep.subr.mxu0 0.0
    %879 = vmatpush1.msra.mxu0 0.0
    %880 = vmatprep.mubr.f32.mxu0 0.0
    %881 = vmatmul.mubr.f32.gmra.mrb[0].mxu0 %v814
    %v882 = vpop.f32.mrb[0].mxu0
    %v883 = vadd.f32 0.0, %v882
    %v884 = vpop.f32.mrb[0].mxu0
    %885 = vdwg.mxu0
    %v886 = vrcp.pop %v809
    %v887 = vmul.f32 %v883, %v886
    %v888 = vadd.f32 %v788, %v887
    %889 = vset.pattern.permute.xlu0 3
    %890 = vperm.xlu0 %889, %v174
    %v891 = vpop.permute.xlu0 %890
    %v893 = vlaneseq
    %v894 = vshrl.u32 %v893, 7
    %v895 = vsub.s32 1, %v894
    %v896 = vrot.slane %v172, %v895
    %v897 = vadd.f32 %v891, %v896
    %v898 = vmul.f32 %v897, 0.2
    %v899 = vmax.f32 %v897, %v898
    %v900 = vadd.f32 %v899, %v168
    %v901 = vsel %vm195, %v900, -inf
    %902 = vmax.xlane.f32.xlu0 %v901
    %v903 = vpop.xlane.xlu0 %902
    %v904 = vsub.f32 %v900, %v903
    %v905 = vmul.f32 %v904, 1.442695
    %v906 = vpow.pop %v905
    %v907 = vsel %vm195, %v906, 0.0
    %908 = vadd.xlane.f32.xlu0 %v907
    %v909 = vpop.xlane.xlu0 %908
    %910 = vrot.lane.b32.xlu0 %v131, 32
    %v911 = vpop.permute.xlu0 %910
    %v914 = vsel %vm195, %v906, 0
    %916 = vmatprep.subr.mxu0 0.0
    %917 = vmatpush1.msra.mxu0 %v911
    %918 = vmatprep.subr.mxu0 0.0
    %919 = vmatpush1.msra.mxu0 0.0
    %920 = vmatprep.subr.mxu0 0.0
    %921 = vmatpush1.msra.mxu0 0.0
    %922 = vmatprep.subr.mxu0 0.0
    %923 = vmatpush1.msra.mxu0 0.0
    %924 = vmatprep.subr.mxu0 0.0
    %925 = vmatpush1.msra.mxu0 0.0
    %926 = vmatprep.subr.mxu0 0.0
    %927 = vmatpush1.msra.mxu0 0.0
    %928 = vmatprep.subr.mxu0 0.0
    %929 = vmatpush1.msra.mxu0 0.0
    %930 = vmatprep.subr.mxu0 0.0
    %931 = vmatpush1.msra.mxu0 0.0
    %932 = vmatprep.subr.mxu0 0.0
    %933 = vmatpush1.msra.mxu0 0.0
    %934 = vmatprep.subr.mxu0 0.0
    %935 = vmatpush1.msra.mxu0 0.0
    %936 = vmatprep.subr.mxu0 0.0
    %937 = vmatpush1.msra.mxu0 0.0
    %938 = vmatprep.subr.mxu0 0.0
    %939 = vmatpush1.msra.mxu0 0.0
    %940 = vmatprep.subr.mxu0 0.0
    %941 = vmatpush1.msra.mxu0 0.0
    %942 = vmatprep.subr.mxu0 0.0
    %943 = vmatpush1.msra.mxu0 0.0
    %944 = vmatprep.subr.mxu0 0.0
    %945 = vmatpush1.msra.mxu0 0.0
    %946 = vmatprep.subr.mxu0 0.0
    %947 = vmatpush1.msra.mxu0 0.0
    %948 = vmatprep.subr.mxu0 0.0
    %949 = vmatpush1.msra.mxu0 0.0
    %950 = vmatprep.subr.mxu0 0.0
    %951 = vmatpush1.msra.mxu0 0.0
    %952 = vmatprep.subr.mxu0 0.0
    %953 = vmatpush1.msra.mxu0 0.0
    %954 = vmatprep.subr.mxu0 0.0
    %955 = vmatpush1.msra.mxu0 0.0
    %956 = vmatprep.subr.mxu0 0.0
    %957 = vmatpush1.msra.mxu0 0.0
    %958 = vmatprep.subr.mxu0 0.0
    %959 = vmatpush1.msra.mxu0 0.0
    %960 = vmatprep.subr.mxu0 0.0
    %961 = vmatpush1.msra.mxu0 0.0
    %962 = vmatprep.subr.mxu0 0.0
    %963 = vmatpush1.msra.mxu0 0.0
    %964 = vmatprep.subr.mxu0 0.0
    %965 = vmatpush1.msra.mxu0 0.0
    %966 = vmatprep.subr.mxu0 0.0
    %967 = vmatpush1.msra.mxu0 0.0
    %968 = vmatprep.subr.mxu0 0.0
    %969 = vmatpush1.msra.mxu0 0.0
    %970 = vmatprep.subr.mxu0 0.0
    %971 = vmatpush1.msra.mxu0 0.0
    %972 = vmatprep.subr.mxu0 0.0
    %973 = vmatpush1.msra.mxu0 0.0
    %974 = vmatprep.subr.mxu0 0.0
    %975 = vmatpush1.msra.mxu0 0.0
    %976 = vmatprep.subr.mxu0 0.0
    %977 = vmatpush1.msra.mxu0 0.0
    %978 = vmatprep.subr.mxu0 0.0
    %979 = vmatpush1.msra.mxu0 0.0
    %980 = vmatprep.mubr.f32.mxu0 0.0
    %981 = vmatmul.mubr.f32.gmra.mrb[0].mxu0 %v914
    %v982 = vpop.f32.mrb[0].mxu0
    %v983 = vadd.f32 0.0, %v982
    %v984 = vpop.f32.mrb[0].mxu0
    %985 = vdwg.mxu0
    %v986 = vrcp.pop %v909
    %v987 = vmul.f32 %v983, %v986
    %v988 = vadd.f32 %v888, %v987
    %v989 = vmul.f32 %v988, 0.25
    %v990 = vadd.f32 %v989, %v587
    %992 = vset.pattern.permute.xlu0 0
    %993 = vperm.xlu0 %992, %v175
    %v994 = vpop.permute.xlu0 %993
    %v996 = vlaneseq
    %v997 = vshrl.u32 %v996, 7
    %v998 = vsub.s32 2, %v997
    %v999 = vrot.slane %v169, %v998
    %v1000 = vadd.f32 %v994, %v999
    %v1001 = vmul.f32 %v1000, 0.2
    %v1002 = vmax.f32 %v1000, %v1001
    %v1003 = vadd.f32 %v1002, %v168
    %v1004 = vsel %vm195, %v1003, -inf
    %1005 = vmax.xlane.f32.xlu0 %v1004
    %v1006 = vpop.xlane.xlu0 %1005
    %v1007 = vsub.f32 %v1003, %v1006
    %v1008 = vmul.f32 %v1007, 1.442695
    %v1009 = vpow.pop %v1008
    %v1010 = vsel %vm195, %v1009, 0.0
    %1011 = vadd.xlane.f32.xlu0 %v1010
    %v1012 = vpop.xlane.xlu0 %1011
    %v1014 = vsel %vm195, %v1009, 0
    %1016 = vmatprep.subr.mxu0 0.0
    %1017 = vmatpush1.msra.mxu0 %v136
    %1018 = vmatprep.subr.mxu0 0.0
    %1019 = vmatpush1.msra.mxu0 0.0
    %1020 = vmatprep.subr.mxu0 0.0
    %1021 = vmatpush1.msra.mxu0 0.0
    %1022 = vmatprep.subr.mxu0 0.0
    %1023 = vmatpush1.msra.mxu0 0.0
    %1024 = vmatprep.subr.mxu0 0.0
    %1025 = vmatpush1.msra.mxu0 0.0
    %1026 = vmatprep.subr.mxu0 0.0
    %1027 = vmatpush1.msra.mxu0 0.0
    %1028 = vmatprep.subr.mxu0 0.0
    %1029 = vmatpush1.msra.mxu0 0.0
    %1030 = vmatprep.subr.mxu0 0.0
    %1031 = vmatpush1.msra.mxu0 0.0
    %1032 = vmatprep.subr.mxu0 0.0
    %1033 = vmatpush1.msra.mxu0 0.0
    %1034 = vmatprep.subr.mxu0 0.0
    %1035 = vmatpush1.msra.mxu0 0.0
    %1036 = vmatprep.subr.mxu0 0.0
    %1037 = vmatpush1.msra.mxu0 0.0
    %1038 = vmatprep.subr.mxu0 0.0
    %1039 = vmatpush1.msra.mxu0 0.0
    %1040 = vmatprep.subr.mxu0 0.0
    %1041 = vmatpush1.msra.mxu0 0.0
    %1042 = vmatprep.subr.mxu0 0.0
    %1043 = vmatpush1.msra.mxu0 0.0
    %1044 = vmatprep.subr.mxu0 0.0
    %1045 = vmatpush1.msra.mxu0 0.0
    %1046 = vmatprep.subr.mxu0 0.0
    %1047 = vmatpush1.msra.mxu0 0.0
    %1048 = vmatprep.subr.mxu0 0.0
    %1049 = vmatpush1.msra.mxu0 0.0
    %1050 = vmatprep.subr.mxu0 0.0
    %1051 = vmatpush1.msra.mxu0 0.0
    %1052 = vmatprep.subr.mxu0 0.0
    %1053 = vmatpush1.msra.mxu0 0.0
    %1054 = vmatprep.subr.mxu0 0.0
    %1055 = vmatpush1.msra.mxu0 0.0
    %1056 = vmatprep.subr.mxu0 0.0
    %1057 = vmatpush1.msra.mxu0 0.0
    %1058 = vmatprep.subr.mxu0 0.0
    %1059 = vmatpush1.msra.mxu0 0.0
    %1060 = vmatprep.subr.mxu0 0.0
    %1061 = vmatpush1.msra.mxu0 0.0
    %1062 = vmatprep.subr.mxu0 0.0
    %1063 = vmatpush1.msra.mxu0 0.0
    %1064 = vmatprep.subr.mxu0 0.0
    %1065 = vmatpush1.msra.mxu0 0.0
    %1066 = vmatprep.subr.mxu0 0.0
    %1067 = vmatpush1.msra.mxu0 0.0
    %1068 = vmatprep.subr.mxu0 0.0
    %1069 = vmatpush1.msra.mxu0 0.0
    %1070 = vmatprep.subr.mxu0 0.0
    %1071 = vmatpush1.msra.mxu0 0.0
    %1072 = vmatprep.subr.mxu0 0.0
    %1073 = vmatpush1.msra.mxu0 0.0
    %1074 = vmatprep.subr.mxu0 0.0
    %1075 = vmatpush1.msra.mxu0 0.0
    %1076 = vmatprep.subr.mxu0 0.0
    %1077 = vmatpush1.msra.mxu0 0.0
    %1078 = vmatprep.subr.mxu0 0.0
    %1079 = vmatpush1.msra.mxu0 0.0
    %1080 = vmatprep.mubr.f32.mxu0 0.0
    %1081 = vmatmul.mubr.f32.gmra.mrb[0].mxu0 %v1014
    %v1082 = vpop.f32.mrb[0].mxu0
    %v1083 = vadd.f32 0.0, %v1082
    %v1084 = vpop.f32.mrb[0].mxu0
    %1085 = vdwg.mxu0
    %v1086 = vrcp.pop %v1012
    %v1087 = vmul.f32 %v1083, %v1086
    %v1088 = vadd.f32 %v1087, 0.0
    %1089 = vset.pattern.permute.xlu0 1
    %1090 = vperm.xlu0 %1089, %v175
    %v1091 = vpop.permute.xlu0 %1090
    %v1093 = vlaneseq
    %v1094 = vshrl.u32 %v1093, 7
    %v1095 = vsub.s32 2, %v1094
    %v1096 = vrot.slane %v170, %v1095
    %v1097 = vadd.f32 %v1091, %v1096
    %v1098 = vmul.f32 %v1097, 0.2
    %v1099 = vmax.f32 %v1097, %v1098
    %v1100 = vadd.f32 %v1099, %v168
    %v1101 = vsel %vm195, %v1100, -inf
    %1102 = vmax.xlane.f32.xlu0 %v1101
    %v1103 = vpop.xlane.xlu0 %1102
    %v1104 = vsub.f32 %v1100, %v1103
    %v1105 = vmul.f32 %v1104, 1.442695
    %v1106 = vpow.pop %v1105
    %v1107 = vsel %vm195, %v1106, 0.0
    %1108 = vadd.xlane.f32.xlu0 %v1107
    %v1109 = vpop.xlane.xlu0 %1108
    %1111 = vrot.lane.b32.xlu0 %v136, 96
    %v1112 = vpop.permute.xlu0 %1111
    %v1115 = vsel %vm195, %v1106, 0
    %1117 = vmatprep.subr.mxu0 0.0
    %1118 = vmatpush1.msra.mxu0 %v1112
    %1119 = vmatprep.subr.mxu0 0.0
    %1120 = vmatpush1.msra.mxu0 0.0
    %1121 = vmatprep.subr.mxu0 0.0
    %1122 = vmatpush1.msra.mxu0 0.0
    %1123 = vmatprep.subr.mxu0 0.0
    %1124 = vmatpush1.msra.mxu0 0.0
    %1125 = vmatprep.subr.mxu0 0.0
    %1126 = vmatpush1.msra.mxu0 0.0
    %1127 = vmatprep.subr.mxu0 0.0
    %1128 = vmatpush1.msra.mxu0 0.0
    %1129 = vmatprep.subr.mxu0 0.0
    %1130 = vmatpush1.msra.mxu0 0.0
    %1131 = vmatprep.subr.mxu0 0.0
    %1132 = vmatpush1.msra.mxu0 0.0
    %1133 = vmatprep.subr.mxu0 0.0
    %1134 = vmatpush1.msra.mxu0 0.0
    %1135 = vmatprep.subr.mxu0 0.0
    %1136 = vmatpush1.msra.mxu0 0.0
    %1137 = vmatprep.subr.mxu0 0.0
    %1138 = vmatpush1.msra.mxu0 0.0
    %1139 = vmatprep.subr.mxu0 0.0
    %1140 = vmatpush1.msra.mxu0 0.0
    %1141 = vmatprep.subr.mxu0 0.0
    %1142 = vmatpush1.msra.mxu0 0.0
    %1143 = vmatprep.subr.mxu0 0.0
    %1144 = vmatpush1.msra.mxu0 0.0
    %1145 = vmatprep.subr.mxu0 0.0
    %1146 = vmatpush1.msra.mxu0 0.0
    %1147 = vmatprep.subr.mxu0 0.0
    %1148 = vmatpush1.msra.mxu0 0.0
    %1149 = vmatprep.subr.mxu0 0.0
    %1150 = vmatpush1.msra.mxu0 0.0
    %1151 = vmatprep.subr.mxu0 0.0
    %1152 = vmatpush1.msra.mxu0 0.0
    %1153 = vmatprep.subr.mxu0 0.0
    %1154 = vmatpush1.msra.mxu0 0.0
    %1155 = vmatprep.subr.mxu0 0.0
    %1156 = vmatpush1.msra.mxu0 0.0
    %1157 = vmatprep.subr.mxu0 0.0
    %1158 = vmatpush1.msra.mxu0 0.0
    %1159 = vmatprep.subr.mxu0 0.0
    %1160 = vmatpush1.msra.mxu0 0.0
    %1161 = vmatprep.subr.mxu0 0.0
    %1162 = vmatpush1.msra.mxu0 0.0
    %1163 = vmatprep.subr.mxu0 0.0
    %1164 = vmatpush1.msra.mxu0 0.0
    %1165 = vmatprep.subr.mxu0 0.0
    %1166 = vmatpush1.msra.mxu0 0.0
    %1167 = vmatprep.subr.mxu0 0.0
    %1168 = vmatpush1.msra.mxu0 0.0
    %1169 = vmatprep.subr.mxu0 0.0
    %1170 = vmatpush1.msra.mxu0 0.0
    %1171 = vmatprep.subr.mxu0 0.0
    %1172 = vmatpush1.msra.mxu0 0.0
    %1173 = vmatprep.subr.mxu0 0.0
    %1174 = vmatpush1.msra.mxu0 0.0
    %1175 = vmatprep.subr.mxu0 0.0
    %1176 = vmatpush1.msra.mxu0 0.0
    %1177 = vmatprep.subr.mxu0 0.0
    %1178 = vmatpush1.msra.mxu0 0.0
    %1179 = vmatprep.subr.mxu0 0.0
    %1180 = vmatpush1.msra.mxu0 0.0
    %1181 = vmatprep.mubr.f32.mxu0 0.0
    %1182 = vmatmul.mubr.f32.gmra.mrb[0].mxu0 %v1115
    %v1183 = vpop.f32.mrb[0].mxu0
    %v1184 = vadd.f32 0.0, %v1183
    %v1185 = vpop.f32.mrb[0].mxu0
    %1186 = vdwg.mxu0
    %v1187 = vrcp.pop %v1109
    %v1188 = vmul.f32 %v1184, %v1187
    %v1189 = vadd.f32 %v1088, %v1188
    %1190 = vset.pattern.permute.xlu0 2
    %1191 = vperm.xlu0 %1190, %v175
    %v1192 = vpop.permute.xlu0 %1191
    %v1194 = vlaneseq
    %v1195 = vshrl.u32 %v1194, 7
    %v1196 = vsub.s32 2, %v1195
    %v1197 = vrot.slane %v171, %v1196
    %v1198 = vadd.f32 %v1192, %v1197
    %v1199 = vmul.f32 %v1198, 0.2
    %v1200 = vmax.f32 %v1198, %v1199
    %v1201 = vadd.f32 %v1200, %v168
    %v1202 = vsel %vm195, %v1201, -inf
    %1203 = vmax.xlane.f32.xlu0 %v1202
    %v1204 = vpop.xlane.xlu0 %1203
    %v1205 = vsub.f32 %v1201, %v1204
    %v1206 = vmul.f32 %v1205, 1.442695
    %v1207 = vpow.pop %v1206
    %v1208 = vsel %vm195, %v1207, 0.0
    %1209 = vadd.xlane.f32.xlu0 %v1208
    %v1210 = vpop.xlane.xlu0 %1209
    %1211 = vrot.lane.b32.xlu0 %v136, 64
    %v1212 = vpop.permute.xlu0 %1211
    %v1215 = vsel %vm195, %v1207, 0
    %1217 = vmatprep.subr.mxu0 0.0
    %1218 = vmatpush1.msra.mxu0 %v1212
    %1219 = vmatprep.subr.mxu0 0.0
    %1220 = vmatpush1.msra.mxu0 0.0
    %1221 = vmatprep.subr.mxu0 0.0
    %1222 = vmatpush1.msra.mxu0 0.0
    %1223 = vmatprep.subr.mxu0 0.0
    %1224 = vmatpush1.msra.mxu0 0.0
    %1225 = vmatprep.subr.mxu0 0.0
    %1226 = vmatpush1.msra.mxu0 0.0
    %1227 = vmatprep.subr.mxu0 0.0
    %1228 = vmatpush1.msra.mxu0 0.0
    %1229 = vmatprep.subr.mxu0 0.0
    %1230 = vmatpush1.msra.mxu0 0.0
    %1231 = vmatprep.subr.mxu0 0.0
    %1232 = vmatpush1.msra.mxu0 0.0
    %1233 = vmatprep.subr.mxu0 0.0
    %1234 = vmatpush1.msra.mxu0 0.0
    %1235 = vmatprep.subr.mxu0 0.0
    %1236 = vmatpush1.msra.mxu0 0.0
    %1237 = vmatprep.subr.mxu0 0.0
    %1238 = vmatpush1.msra.mxu0 0.0
    %1239 = vmatprep.subr.mxu0 0.0
    %1240 = vmatpush1.msra.mxu0 0.0
    %1241 = vmatprep.subr.mxu0 0.0
    %1242 = vmatpush1.msra.mxu0 0.0
    %1243 = vmatprep.subr.mxu0 0.0
    %1244 = vmatpush1.msra.mxu0 0.0
    %1245 = vmatprep.subr.mxu0 0.0
    %1246 = vmatpush1.msra.mxu0 0.0
    %1247 = vmatprep.subr.mxu0 0.0
    %1248 = vmatpush1.msra.mxu0 0.0
    %1249 = vmatprep.subr.mxu0 0.0
    %1250 = vmatpush1.msra.mxu0 0.0
    %1251 = vmatprep.subr.mxu0 0.0
    %1252 = vmatpush1.msra.mxu0 0.0
    %1253 = vmatprep.subr.mxu0 0.0
    %1254 = vmatpush1.msra.mxu0 0.0
    %1255 = vmatprep.subr.mxu0 0.0
    %1256 = vmatpush1.msra.mxu0 0.0
    %1257 = vmatprep.subr.mxu0 0.0
    %1258 = vmatpush1.msra.mxu0 0.0
    %1259 = vmatprep.subr.mxu0 0.0
    %1260 = vmatpush1.msra.mxu0 0.0
    %1261 = vmatprep.subr.mxu0 0.0
    %1262 = vmatpush1.msra.mxu0 0.0
    %1263 = vmatprep.subr.mxu0 0.0
    %1264 = vmatpush1.msra.mxu0 0.0
    %1265 = vmatprep.subr.mxu0 0.0
    %1266 = vmatpush1.msra.mxu0 0.0
    %1267 = vmatprep.subr.mxu0 0.0
    %1268 = vmatpush1.msra.mxu0 0.0
    %1269 = vmatprep.subr.mxu0 0.0
    %1270 = vmatpush1.msra.mxu0 0.0
    %1271 = vmatprep.subr.mxu0 0.0
    %1272 = vmatpush1.msra.mxu0 0.0
    %1273 = vmatprep.subr.mxu0 0.0
    %1274 = vmatpush1.msra.mxu0 0.0
    %1275 = vmatprep.subr.mxu0 0.0
    %1276 = vmatpush1.msra.mxu0 0.0
    %1277 = vmatprep.subr.mxu0 0.0
    %1278 = vmatpush1.msra.mxu0 0.0
    %1279 = vmatprep.subr.mxu0 0.0
    %1280 = vmatpush1.msra.mxu0 0.0
    %1281 = vmatprep.mubr.f32.mxu0 0.0
    %1282 = vmatmul.mubr.f32.gmra.mrb[0].mxu0 %v1215
    %v1283 = vpop.f32.mrb[0].mxu0
    %v1284 = vadd.f32 0.0, %v1283
    %v1285 = vpop.f32.mrb[0].mxu0
    %1286 = vdwg.mxu0
    %v1287 = vrcp.pop %v1210
    %v1288 = vmul.f32 %v1284, %v1287
    %v1289 = vadd.f32 %v1189, %v1288
    %1290 = vset.pattern.permute.xlu0 3
    %1291 = vperm.xlu0 %1290, %v175
    %v1292 = vpop.permute.xlu0 %1291
    %v1294 = vlaneseq
    %v1295 = vshrl.u32 %v1294, 7
    %v1296 = vsub.s32 2, %v1295
    %v1297 = vrot.slane %v172, %v1296
    %v1298 = vadd.f32 %v1292, %v1297
    %v1299 = vmul.f32 %v1298, 0.2
    %v1300 = vmax.f32 %v1298, %v1299
    %v1301 = vadd.f32 %v1300, %v168
    %v1302 = vsel %vm195, %v1301, -inf
    %1303 = vmax.xlane.f32.xlu0 %v1302
    %v1304 = vpop.xlane.xlu0 %1303
    %v1305 = vsub.f32 %v1301, %v1304
    %v1306 = vmul.f32 %v1305, 1.442695
    %v1307 = vpow.pop %v1306
    %v1308 = vsel %vm195, %v1307, 0.0
    %1309 = vadd.xlane.f32.xlu0 %v1308
    %v1310 = vpop.xlane.xlu0 %1309
    %1311 = vrot.lane.b32.xlu0 %v136, 32
    %v1312 = vpop.permute.xlu0 %1311
    %v1315 = vsel %vm195, %v1307, 0
    %1317 = vmatprep.subr.mxu0 0.0
    %1318 = vmatpush1.msra.mxu0 %v1312
    %1319 = vmatprep.subr.mxu0 0.0
    %1320 = vmatpush1.msra.mxu0 0.0
    %1321 = vmatprep.subr.mxu0 0.0
    %1322 = vmatpush1.msra.mxu0 0.0
    %1323 = vmatprep.subr.mxu0 0.0
    %1324 = vmatpush1.msra.mxu0 0.0
    %1325 = vmatprep.subr.mxu0 0.0
    %1326 = vmatpush1.msra.mxu0 0.0
    %1327 = vmatprep.subr.mxu0 0.0
    %1328 = vmatpush1.msra.mxu0 0.0
    %1329 = vmatprep.subr.mxu0 0.0
    %1330 = vmatpush1.msra.mxu0 0.0
    %1331 = vmatprep.subr.mxu0 0.0
    %1332 = vmatpush1.msra.mxu0 0.0
    %1333 = vmatprep.subr.mxu0 0.0
    %1334 = vmatpush1.msra.mxu0 0.0
    %1335 = vmatprep.subr.mxu0 0.0
    %1336 = vmatpush1.msra.mxu0 0.0
    %1337 = vmatprep.subr.mxu0 0.0
    %1338 = vmatpush1.msra.mxu0 0.0
    %1339 = vmatprep.subr.mxu0 0.0
    %1340 = vmatpush1.msra.mxu0 0.0
    %1341 = vmatprep.subr.mxu0 0.0
    %1342 = vmatpush1.msra.mxu0 0.0
    %1343 = vmatprep.subr.mxu0 0.0
    %1344 = vmatpush1.msra.mxu0 0.0
    %1345 = vmatprep.subr.mxu0 0.0
    %1346 = vmatpush1.msra.mxu0 0.0
    %1347 = vmatprep.subr.mxu0 0.0
    %1348 = vmatpush1.msra.mxu0 0.0
    %1349 = vmatprep.subr.mxu0 0.0
    %1350 = vmatpush1.msra.mxu0 0.0
    %1351 = vmatprep.subr.mxu0 0.0
    %1352 = vmatpush1.msra.mxu0 0.0
    %1353 = vmatprep.subr.mxu0 0.0
    %1354 = vmatpush1.msra.mxu0 0.0
    %1355 = vmatprep.subr.mxu0 0.0
    %1356 = vmatpush1.msra.mxu0 0.0
    %1357 = vmatprep.subr.mxu0 0.0
    %1358 = vmatpush1.msra.mxu0 0.0
    %1359 = vmatprep.subr.mxu0 0.0
    %1360 = vmatpush1.msra.mxu0 0.0
    %1361 = vmatprep.subr.mxu0 0.0
    %1362 = vmatpush1.msra.mxu0 0.0
    %1363 = vmatprep.subr.mxu0 0.0
    %1364 = vmatpush1.msra.mxu0 0.0
    %1365 = vmatprep.subr.mxu0 0.0
    %1366 = vmatpush1.msra.mxu0 0.0
    %1367 = vmatprep.subr.mxu0 0.0
    %1368 = vmatpush1.msra.mxu0 0.0
    %1369 = vmatprep.subr.mxu0 0.0
    %1370 = vmatpush1.msra.mxu0 0.0
    %1371 = vmatprep.subr.mxu0 0.0
    %1372 = vmatpush1.msra.mxu0 0.0
    %1373 = vmatprep.subr.mxu0 0.0
    %1374 = vmatpush1.msra.mxu0 0.0
    %1375 = vmatprep.subr.mxu0 0.0
    %1376 = vmatpush1.msra.mxu0 0.0
    %1377 = vmatprep.subr.mxu0 0.0
    %1378 = vmatpush1.msra.mxu0 0.0
    %1379 = vmatprep.subr.mxu0 0.0
    %1380 = vmatpush1.msra.mxu0 0.0
    %1381 = vmatprep.mubr.f32.mxu0 0.0
    %1382 = vmatmul.mubr.f32.gmra.mrb[0].mxu0 %v1315
    %v1383 = vpop.f32.mrb[0].mxu0
    %v1384 = vadd.f32 0.0, %v1383
    %v1385 = vpop.f32.mrb[0].mxu0
    %1386 = vdwg.mxu0
    %v1387 = vrcp.pop %v1310
    %v1388 = vmul.f32 %v1384, %v1387
    %v1389 = vadd.f32 %v1289, %v1388
    %v1390 = vmul.f32 %v1389, 0.25
    %v1391 = vadd.f32 %v1390, %v587
    %1393 = vset.pattern.permute.xlu0 0
    %1394 = vperm.xlu0 %1393, %v176
    %v1395 = vpop.permute.xlu0 %1394
    %v1397 = vlaneseq
    %v1398 = vshrl.u32 %v1397, 7
    %v1399 = vsub.s32 3, %v1398
    %v1400 = vrot.slane %v169, %v1399
    %v1401 = vadd.f32 %v1395, %v1400
    %v1402 = vmul.f32 %v1401, 0.2
    %v1403 = vmax.f32 %v1401, %v1402
    %v1404 = vadd.f32 %v1403, %v168
    %v1405 = vsel %vm195, %v1404, -inf
    %1406 = vmax.xlane.f32.xlu0 %v1405
    %v1407 = vpop.xlane.xlu0 %1406
    %v1408 = vsub.f32 %v1404, %v1407
    %v1409 = vmul.f32 %v1408, 1.442695
    %v1410 = vpow.pop %v1409
    %v1411 = vsel %vm195, %v1410, 0.0
    %1412 = vadd.xlane.f32.xlu0 %v1411
    %v1413 = vpop.xlane.xlu0 %1412
    %v1415 = vsel %vm195, %v1410, 0
    %1417 = vmatprep.subr.mxu0 0.0
    %1418 = vmatpush1.msra.mxu0 %v141
    %1419 = vmatprep.subr.mxu0 0.0
    %1420 = vmatpush1.msra.mxu0 0.0
    %1421 = vmatprep.subr.mxu0 0.0
    %1422 = vmatpush1.msra.mxu0 0.0
    %1423 = vmatprep.subr.mxu0 0.0
    %1424 = vmatpush1.msra.mxu0 0.0
    %1425 = vmatprep.subr.mxu0 0.0
    %1426 = vmatpush1.msra.mxu0 0.0
    %1427 = vmatprep.subr.mxu0 0.0
    %1428 = vmatpush1.msra.mxu0 0.0
    %1429 = vmatprep.subr.mxu0 0.0
    %1430 = vmatpush1.msra.mxu0 0.0
    %1431 = vmatprep.subr.mxu0 0.0
    %1432 = vmatpush1.msra.mxu0 0.0
    %1433 = vmatprep.subr.mxu0 0.0
    %1434 = vmatpush1.msra.mxu0 0.0
    %1435 = vmatprep.subr.mxu0 0.0
    %1436 = vmatpush1.msra.mxu0 0.0
    %1437 = vmatprep.subr.mxu0 0.0
    %1438 = vmatpush1.msra.mxu0 0.0
    %1439 = vmatprep.subr.mxu0 0.0
    %1440 = vmatpush1.msra.mxu0 0.0
    %1441 = vmatprep.subr.mxu0 0.0
    %1442 = vmatpush1.msra.mxu0 0.0
    %1443 = vmatprep.subr.mxu0 0.0
    %1444 = vmatpush1.msra.mxu0 0.0
    %1445 = vmatprep.subr.mxu0 0.0
    %1446 = vmatpush1.msra.mxu0 0.0
    %1447 = vmatprep.subr.mxu0 0.0
    %1448 = vmatpush1.msra.mxu0 0.0
    %1449 = vmatprep.subr.mxu0 0.0
    %1450 = vmatpush1.msra.mxu0 0.0
    %1451 = vmatprep.subr.mxu0 0.0
    %1452 = vmatpush1.msra.mxu0 0.0
    %1453 = vmatprep.subr.mxu0 0.0
    %1454 = vmatpush1.msra.mxu0 0.0
    %1455 = vmatprep.subr.mxu0 0.0
    %1456 = vmatpush1.msra.mxu0 0.0
    %1457 = vmatprep.subr.mxu0 0.0
    %1458 = vmatpush1.msra.mxu0 0.0
    %1459 = vmatprep.subr.mxu0 0.0
    %1460 = vmatpush1.msra.mxu0 0.0
    %1461 = vmatprep.subr.mxu0 0.0
    %1462 = vmatpush1.msra.mxu0 0.0
    %1463 = vmatprep.subr.mxu0 0.0
    %1464 = vmatpush1.msra.mxu0 0.0
    %1465 = vmatprep.subr.mxu0 0.0
    %1466 = vmatpush1.msra.mxu0 0.0
    %1467 = vmatprep.subr.mxu0 0.0
    %1468 = vmatpush1.msra.mxu0 0.0
    %1469 = vmatprep.subr.mxu0 0.0
    %1470 = vmatpush1.msra.mxu0 0.0
    %1471 = vmatprep.subr.mxu0 0.0
    %1472 = vmatpush1.msra.mxu0 0.0
    %1473 = vmatprep.subr.mxu0 0.0
    %1474 = vmatpush1.msra.mxu0 0.0
    %1475 = vmatprep.subr.mxu0 0.0
    %1476 = vmatpush1.msra.mxu0 0.0
    %1477 = vmatprep.subr.mxu0 0.0
    %1478 = vmatpush1.msra.mxu0 0.0
    %1479 = vmatprep.subr.mxu0 0.0
    %1480 = vmatpush1.msra.mxu0 0.0
    %1481 = vmatprep.mubr.f32.mxu0 0.0
    %1482 = vmatmul.mubr.f32.gmra.mrb[0].mxu0 %v1415
    %v1483 = vpop.f32.mrb[0].mxu0
    %v1484 = vadd.f32 0.0, %v1483
    %v1485 = vpop.f32.mrb[0].mxu0
    %1486 = vdwg.mxu0
    %v1487 = vrcp.pop %v1413
    %v1488 = vmul.f32 %v1484, %v1487
    %v1489 = vadd.f32 %v1488, 0.0
    %1490 = vset.pattern.permute.xlu0 1
    %1491 = vperm.xlu0 %1490, %v176
    %v1492 = vpop.permute.xlu0 %1491
    %v1494 = vlaneseq
    %v1495 = vshrl.u32 %v1494, 7
    %v1496 = vsub.s32 3, %v1495
    %v1497 = vrot.slane %v170, %v1496
    %v1498 = vadd.f32 %v1492, %v1497
    %v1499 = vmul.f32 %v1498, 0.2
    %v1500 = vmax.f32 %v1498, %v1499
    %v1501 = vadd.f32 %v1500, %v168
    %v1502 = vsel %vm195, %v1501, -inf
    %1503 = vmax.xlane.f32.xlu0 %v1502
    %v1504 = vpop.xlane.xlu0 %1503
    %v1505 = vsub.f32 %v1501, %v1504
    %v1506 = vmul.f32 %v1505, 1.442695
    %v1507 = vpow.pop %v1506
    %v1508 = vsel %vm195, %v1507, 0.0
    %1509 = vadd.xlane.f32.xlu0 %v1508
    %v1510 = vpop.xlane.xlu0 %1509
    %1512 = vrot.lane.b32.xlu0 %v141, 96
    %v1513 = vpop.permute.xlu0 %1512
    %v1516 = vsel %vm195, %v1507, 0
    %1518 = vmatprep.subr.mxu0 0.0
    %1519 = vmatpush1.msra.mxu0 %v1513
    %1520 = vmatprep.subr.mxu0 0.0
    %1521 = vmatpush1.msra.mxu0 0.0
    %1522 = vmatprep.subr.mxu0 0.0
    %1523 = vmatpush1.msra.mxu0 0.0
    %1524 = vmatprep.subr.mxu0 0.0
    %1525 = vmatpush1.msra.mxu0 0.0
    %1526 = vmatprep.subr.mxu0 0.0
    %1527 = vmatpush1.msra.mxu0 0.0
    %1528 = vmatprep.subr.mxu0 0.0
    %1529 = vmatpush1.msra.mxu0 0.0
    %1530 = vmatprep.subr.mxu0 0.0
    %1531 = vmatpush1.msra.mxu0 0.0
    %1532 = vmatprep.subr.mxu0 0.0
    %1533 = vmatpush1.msra.mxu0 0.0
    %1534 = vmatprep.subr.mxu0 0.0
    %1535 = vmatpush1.msra.mxu0 0.0
    %1536 = vmatprep.subr.mxu0 0.0
    %1537 = vmatpush1.msra.mxu0 0.0
    %1538 = vmatprep.subr.mxu0 0.0
    %1539 = vmatpush1.msra.mxu0 0.0
    %1540 = vmatprep.subr.mxu0 0.0
    %1541 = vmatpush1.msra.mxu0 0.0
    %1542 = vmatprep.subr.mxu0 0.0
    %1543 = vmatpush1.msra.mxu0 0.0
    %1544 = vmatprep.subr.mxu0 0.0
    %1545 = vmatpush1.msra.mxu0 0.0
    %1546 = vmatprep.subr.mxu0 0.0
    %1547 = vmatpush1.msra.mxu0 0.0
    %1548 = vmatprep.subr.mxu0 0.0
    %1549 = vmatpush1.msra.mxu0 0.0
    %1550 = vmatprep.subr.mxu0 0.0
    %1551 = vmatpush1.msra.mxu0 0.0
    %1552 = vmatprep.subr.mxu0 0.0
    %1553 = vmatpush1.msra.mxu0 0.0
    %1554 = vmatprep.subr.mxu0 0.0
    %1555 = vmatpush1.msra.mxu0 0.0
    %1556 = vmatprep.subr.mxu0 0.0
    %1557 = vmatpush1.msra.mxu0 0.0
    %1558 = vmatprep.subr.mxu0 0.0
    %1559 = vmatpush1.msra.mxu0 0.0
    %1560 = vmatprep.subr.mxu0 0.0
    %1561 = vmatpush1.msra.mxu0 0.0
    %1562 = vmatprep.subr.mxu0 0.0
    %1563 = vmatpush1.msra.mxu0 0.0
    %1564 = vmatprep.subr.mxu0 0.0
    %1565 = vmatpush1.msra.mxu0 0.0
    %1566 = vmatprep.subr.mxu0 0.0
    %1567 = vmatpush1.msra.mxu0 0.0
    %1568 = vmatprep.subr.mxu0 0.0
    %1569 = vmatpush1.msra.mxu0 0.0
    %1570 = vmatprep.subr.mxu0 0.0
    %1571 = vmatpush1.msra.mxu0 0.0
    %1572 = vmatprep.subr.mxu0 0.0
    %1573 = vmatpush1.msra.mxu0 0.0
    %1574 = vmatprep.subr.mxu0 0.0
    %1575 = vmatpush1.msra.mxu0 0.0
    %1576 = vmatprep.subr.mxu0 0.0
    %1577 = vmatpush1.msra.mxu0 0.0
    %1578 = vmatprep.subr.mxu0 0.0
    %1579 = vmatpush1.msra.mxu0 0.0
    %1580 = vmatprep.subr.mxu0 0.0
    %1581 = vmatpush1.msra.mxu0 0.0
    %1582 = vmatprep.mubr.f32.mxu0 0.0
    %1583 = vmatmul.mubr.f32.gmra.mrb[0].mxu0 %v1516
    %v1584 = vpop.f32.mrb[0].mxu0
    %v1585 = vadd.f32 0.0, %v1584
    %v1586 = vpop.f32.mrb[0].mxu0
    %1587 = vdwg.mxu0
    %v1588 = vrcp.pop %v1510
    %v1589 = vmul.f32 %v1585, %v1588
    %v1590 = vadd.f32 %v1489, %v1589
    %1591 = vset.pattern.permute.xlu0 2
    %1592 = vperm.xlu0 %1591, %v176
    %v1593 = vpop.permute.xlu0 %1592
    %v1595 = vlaneseq
    %v1596 = vshrl.u32 %v1595, 7
    %v1597 = vsub.s32 3, %v1596
    %v1598 = vrot.slane %v171, %v1597
    %v1599 = vadd.f32 %v1593, %v1598
    %v1600 = vmul.f32 %v1599, 0.2
    %v1601 = vmax.f32 %v1599, %v1600
    %v1602 = vadd.f32 %v1601, %v168
    %v1603 = vsel %vm195, %v1602, -inf
    %1604 = vmax.xlane.f32.xlu0 %v1603
    %v1605 = vpop.xlane.xlu0 %1604
    %v1606 = vsub.f32 %v1602, %v1605
    %v1607 = vmul.f32 %v1606, 1.442695
    %v1608 = vpow.pop %v1607
    %v1609 = vsel %vm195, %v1608, 0.0
    %1610 = vadd.xlane.f32.xlu0 %v1609
    %v1611 = vpop.xlane.xlu0 %1610
    %1612 = vrot.lane.b32.xlu0 %v141, 64
    %v1613 = vpop.permute.xlu0 %1612
    %v1616 = vsel %vm195, %v1608, 0
    %1618 = vmatprep.subr.mxu0 0.0
    %1619 = vmatpush1.msra.mxu0 %v1613
    %1620 = vmatprep.subr.mxu0 0.0
    %1621 = vmatpush1.msra.mxu0 0.0
    %1622 = vmatprep.subr.mxu0 0.0
    %1623 = vmatpush1.msra.mxu0 0.0
    %1624 = vmatprep.subr.mxu0 0.0
    %1625 = vmatpush1.msra.mxu0 0.0
    %1626 = vmatprep.subr.mxu0 0.0
    %1627 = vmatpush1.msra.mxu0 0.0
    %1628 = vmatprep.subr.mxu0 0.0
    %1629 = vmatpush1.msra.mxu0 0.0
    %1630 = vmatprep.subr.mxu0 0.0
    %1631 = vmatpush1.msra.mxu0 0.0
    %1632 = vmatprep.subr.mxu0 0.0
    %1633 = vmatpush1.msra.mxu0 0.0
    %1634 = vmatprep.subr.mxu0 0.0
    %1635 = vmatpush1.msra.mxu0 0.0
    %1636 = vmatprep.subr.mxu0 0.0
    %1637 = vmatpush1.msra.mxu0 0.0
    %1638 = vmatprep.subr.mxu0 0.0
    %1639 = vmatpush1.msra.mxu0 0.0
    %1640 = vmatprep.subr.mxu0 0.0
    %1641 = vmatpush1.msra.mxu0 0.0
    %1642 = vmatprep.subr.mxu0 0.0
    %1643 = vmatpush1.msra.mxu0 0.0
    %1644 = vmatprep.subr.mxu0 0.0
    %1645 = vmatpush1.msra.mxu0 0.0
    %1646 = vmatprep.subr.mxu0 0.0
    %1647 = vmatpush1.msra.mxu0 0.0
    %1648 = vmatprep.subr.mxu0 0.0
    %1649 = vmatpush1.msra.mxu0 0.0
    %1650 = vmatprep.subr.mxu0 0.0
    %1651 = vmatpush1.msra.mxu0 0.0
    %1652 = vmatprep.subr.mxu0 0.0
    %1653 = vmatpush1.msra.mxu0 0.0
    %1654 = vmatprep.subr.mxu0 0.0
    %1655 = vmatpush1.msra.mxu0 0.0
    %1656 = vmatprep.subr.mxu0 0.0
    %1657 = vmatpush1.msra.mxu0 0.0
    %1658 = vmatprep.subr.mxu0 0.0
    %1659 = vmatpush1.msra.mxu0 0.0
    %1660 = vmatprep.subr.mxu0 0.0
    %1661 = vmatpush1.msra.mxu0 0.0
    %1662 = vmatprep.subr.mxu0 0.0
    %1663 = vmatpush1.msra.mxu0 0.0
    %1664 = vmatprep.subr.mxu0 0.0
    %1665 = vmatpush1.msra.mxu0 0.0
    %1666 = vmatprep.subr.mxu0 0.0
    %1667 = vmatpush1.msra.mxu0 0.0
    %1668 = vmatprep.subr.mxu0 0.0
    %1669 = vmatpush1.msra.mxu0 0.0
    %1670 = vmatprep.subr.mxu0 0.0
    %1671 = vmatpush1.msra.mxu0 0.0
    %1672 = vmatprep.subr.mxu0 0.0
    %1673 = vmatpush1.msra.mxu0 0.0
    %1674 = vmatprep.subr.mxu0 0.0
    %1675 = vmatpush1.msra.mxu0 0.0
    %1676 = vmatprep.subr.mxu0 0.0
    %1677 = vmatpush1.msra.mxu0 0.0
    %1678 = vmatprep.subr.mxu0 0.0
    %1679 = vmatpush1.msra.mxu0 0.0
    %1680 = vmatprep.subr.mxu0 0.0
    %1681 = vmatpush1.msra.mxu0 0.0
    %1682 = vmatprep.mubr.f32.mxu0 0.0
    %1683 = vmatmul.mubr.f32.gmra.mrb[0].mxu0 %v1616
    %v1684 = vpop.f32.mrb[0].mxu0
    %v1685 = vadd.f32 0.0, %v1684
    %v1686 = vpop.f32.mrb[0].mxu0
    %1687 = vdwg.mxu0
    %v1688 = vrcp.pop %v1611
    %v1689 = vmul.f32 %v1685, %v1688
    %v1690 = vadd.f32 %v1590, %v1689
    %1691 = vset.pattern.permute.xlu0 3
    %1692 = vperm.xlu0 %1691, %v176
    %v1693 = vpop.permute.xlu0 %1692
    %v1695 = vlaneseq
    %v1696 = vshrl.u32 %v1695, 7
    %v1697 = vsub.s32 3, %v1696
    %v1698 = vrot.slane %v172, %v1697
    %v1699 = vadd.f32 %v1693, %v1698
    %v1700 = vmul.f32 %v1699, 0.2
    %v1701 = vmax.f32 %v1699, %v1700
    %v1702 = vadd.f32 %v1701, %v168
    %v1703 = vsel %vm195, %v1702, -inf
    %1704 = vmax.xlane.f32.xlu0 %v1703
    %v1705 = vpop.xlane.xlu0 %1704
    %v1706 = vsub.f32 %v1702, %v1705
    %v1707 = vmul.f32 %v1706, 1.442695
    %v1708 = vpow.pop %v1707
    %v1709 = vsel %vm195, %v1708, 0.0
    %1710 = vadd.xlane.f32.xlu0 %v1709
    %v1711 = vpop.xlane.xlu0 %1710
    %1712 = vrot.lane.b32.xlu0 %v141, 32
    %v1713 = vpop.permute.xlu0 %1712
    %v1716 = vsel %vm195, %v1708, 0
    %1718 = vmatprep.subr.mxu0 0.0
    %1719 = vmatpush1.msra.mxu0 %v1713
    %1720 = vmatprep.subr.mxu0 0.0
    %1721 = vmatpush1.msra.mxu0 0.0
    %1722 = vmatprep.subr.mxu0 0.0
    %1723 = vmatpush1.msra.mxu0 0.0
    %1724 = vmatprep.subr.mxu0 0.0
    %1725 = vmatpush1.msra.mxu0 0.0
    %1726 = vmatprep.subr.mxu0 0.0
    %1727 = vmatpush1.msra.mxu0 0.0
    %1728 = vmatprep.subr.mxu0 0.0
    %1729 = vmatpush1.msra.mxu0 0.0
    %1730 = vmatprep.subr.mxu0 0.0
    %1731 = vmatpush1.msra.mxu0 0.0
    %1732 = vmatprep.subr.mxu0 0.0
    %1733 = vmatpush1.msra.mxu0 0.0
    %1734 = vmatprep.subr.mxu0 0.0
    %1735 = vmatpush1.msra.mxu0 0.0
    %1736 = vmatprep.subr.mxu0 0.0
    %1737 = vmatpush1.msra.mxu0 0.0
    %1738 = vmatprep.subr.mxu0 0.0
    %1739 = vmatpush1.msra.mxu0 0.0
    %1740 = vmatprep.subr.mxu0 0.0
    %1741 = vmatpush1.msra.mxu0 0.0
    %1742 = vmatprep.subr.mxu0 0.0
    %1743 = vmatpush1.msra.mxu0 0.0
    %1744 = vmatprep.subr.mxu0 0.0
    %1745 = vmatpush1.msra.mxu0 0.0
    %1746 = vmatprep.subr.mxu0 0.0
    %1747 = vmatpush1.msra.mxu0 0.0
    %1748 = vmatprep.subr.mxu0 0.0
    %1749 = vmatpush1.msra.mxu0 0.0
    %1750 = vmatprep.subr.mxu0 0.0
    %1751 = vmatpush1.msra.mxu0 0.0
    %1752 = vmatprep.subr.mxu0 0.0
    %1753 = vmatpush1.msra.mxu0 0.0
    %1754 = vmatprep.subr.mxu0 0.0
    %1755 = vmatpush1.msra.mxu0 0.0
    %1756 = vmatprep.subr.mxu0 0.0
    %1757 = vmatpush1.msra.mxu0 0.0
    %1758 = vmatprep.subr.mxu0 0.0
    %1759 = vmatpush1.msra.mxu0 0.0
    %1760 = vmatprep.subr.mxu0 0.0
    %1761 = vmatpush1.msra.mxu0 0.0
    %1762 = vmatprep.subr.mxu0 0.0
    %1763 = vmatpush1.msra.mxu0 0.0
    %1764 = vmatprep.subr.mxu0 0.0
    %1765 = vmatpush1.msra.mxu0 0.0
    %1766 = vmatprep.subr.mxu0 0.0
    %1767 = vmatpush1.msra.mxu0 0.0
    %1768 = vmatprep.subr.mxu0 0.0
    %1769 = vmatpush1.msra.mxu0 0.0
    %1770 = vmatprep.subr.mxu0 0.0
    %1771 = vmatpush1.msra.mxu0 0.0
    %1772 = vmatprep.subr.mxu0 0.0
    %1773 = vmatpush1.msra.mxu0 0.0
    %1774 = vmatprep.subr.mxu0 0.0
    %1775 = vmatpush1.msra.mxu0 0.0
    %1776 = vmatprep.subr.mxu0 0.0
    %1777 = vmatpush1.msra.mxu0 0.0
    %1778 = vmatprep.subr.mxu0 0.0
    %1779 = vmatpush1.msra.mxu0 0.0
    %1780 = vmatprep.subr.mxu0 0.0
    %1781 = vmatpush1.msra.mxu0 0.0
    %1782 = vmatprep.mubr.f32.mxu0 0.0
    %1783 = vmatmul.mubr.f32.gmra.mrb[0].mxu0 %v1716
    %v1784 = vpop.f32.mrb[0].mxu0
    %v1785 = vadd.f32 0.0, %v1784
    %v1786 = vpop.f32.mrb[0].mxu0
    %1787 = vdwg.mxu0
    %v1788 = vrcp.pop %v1711
    %v1789 = vmul.f32 %v1785, %v1788
    %v1790 = vadd.f32 %v1690, %v1789
    %v1791 = vmul.f32 %v1790, 0.25
    %v1792 = vadd.f32 %v1791, %v587
    %1794 = vset.pattern.permute.xlu0 0
    %1795 = vperm.xlu0 %1794, %v177
    %v1796 = vpop.permute.xlu0 %1795
    %v1798 = vlaneseq
    %v1799 = vshrl.u32 %v1798, 7
    %v1800 = vsub.s32 4, %v1799
    %v1801 = vrot.slane %v169, %v1800
    %v1802 = vadd.f32 %v1796, %v1801
    %v1803 = vmul.f32 %v1802, 0.2
    %v1804 = vmax.f32 %v1802, %v1803
    %v1805 = vadd.f32 %v1804, %v168
    %v1806 = vsel %vm195, %v1805, -inf
    %1807 = vmax.xlane.f32.xlu0 %v1806
    %v1808 = vpop.xlane.xlu0 %1807
    %v1809 = vsub.f32 %v1805, %v1808
    %v1810 = vmul.f32 %v1809, 1.442695
    %v1811 = vpow.pop %v1810
    %v1812 = vsel %vm195, %v1811, 0.0
    %1813 = vadd.xlane.f32.xlu0 %v1812
    %v1814 = vpop.xlane.xlu0 %1813
    %v1816 = vsel %vm195, %v1811, 0
    %1818 = vmatprep.subr.mxu0 0.0
    %1819 = vmatpush1.msra.mxu0 %v146
    %1820 = vmatprep.subr.mxu0 0.0
    %1821 = vmatpush1.msra.mxu0 0.0
    %1822 = vmatprep.subr.mxu0 0.0
    %1823 = vmatpush1.msra.mxu0 0.0
    %1824 = vmatprep.subr.mxu0 0.0
    %1825 = vmatpush1.msra.mxu0 0.0
    %1826 = vmatprep.subr.mxu0 0.0
    %1827 = vmatpush1.msra.mxu0 0.0
    %1828 = vmatprep.subr.mxu0 0.0
    %1829 = vmatpush1.msra.mxu0 0.0
    %1830 = vmatprep.subr.mxu0 0.0
    %1831 = vmatpush1.msra.mxu0 0.0
    %1832 = vmatprep.subr.mxu0 0.0
    %1833 = vmatpush1.msra.mxu0 0.0
    %1834 = vmatprep.subr.mxu0 0.0
    %1835 = vmatpush1.msra.mxu0 0.0
    %1836 = vmatprep.subr.mxu0 0.0
    %1837 = vmatpush1.msra.mxu0 0.0
    %1838 = vmatprep.subr.mxu0 0.0
    %1839 = vmatpush1.msra.mxu0 0.0
    %1840 = vmatprep.subr.mxu0 0.0
    %1841 = vmatpush1.msra.mxu0 0.0
    %1842 = vmatprep.subr.mxu0 0.0
    %1843 = vmatpush1.msra.mxu0 0.0
    %1844 = vmatprep.subr.mxu0 0.0
    %1845 = vmatpush1.msra.mxu0 0.0
    %1846 = vmatprep.subr.mxu0 0.0
    %1847 = vmatpush1.msra.mxu0 0.0
    %1848 = vmatprep.subr.mxu0 0.0
    %1849 = vmatpush1.msra.mxu0 0.0
    %1850 = vmatprep.subr.mxu0 0.0
    %1851 = vmatpush1.msra.mxu0 0.0
    %1852 = vmatprep.subr.mxu0 0.0
    %1853 = vmatpush1.msra.mxu0 0.0
    %1854 = vmatprep.subr.mxu0 0.0
    %1855 = vmatpush1.msra.mxu0 0.0
    %1856 = vmatprep.subr.mxu0 0.0
    %1857 = vmatpush1.msra.mxu0 0.0
    %1858 = vmatprep.subr.mxu0 0.0
    %1859 = vmatpush1.msra.mxu0 0.0
    %1860 = vmatprep.subr.mxu0 0.0
    %1861 = vmatpush1.msra.mxu0 0.0
    %1862 = vmatprep.subr.mxu0 0.0
    %1863 = vmatpush1.msra.mxu0 0.0
    %1864 = vmatprep.subr.mxu0 0.0
    %1865 = vmatpush1.msra.mxu0 0.0
    %1866 = vmatprep.subr.mxu0 0.0
    %1867 = vmatpush1.msra.mxu0 0.0
    %1868 = vmatprep.subr.mxu0 0.0
    %1869 = vmatpush1.msra.mxu0 0.0
    %1870 = vmatprep.subr.mxu0 0.0
    %1871 = vmatpush1.msra.mxu0 0.0
    %1872 = vmatprep.subr.mxu0 0.0
    %1873 = vmatpush1.msra.mxu0 0.0
    %1874 = vmatprep.subr.mxu0 0.0
    %1875 = vmatpush1.msra.mxu0 0.0
    %1876 = vmatprep.subr.mxu0 0.0
    %1877 = vmatpush1.msra.mxu0 0.0
    %1878 = vmatprep.subr.mxu0 0.0
    %1879 = vmatpush1.msra.mxu0 0.0
    %1880 = vmatprep.subr.mxu0 0.0
    %1881 = vmatpush1.msra.mxu0 0.0
    %1882 = vmatprep.mubr.f32.mxu0 0.0
    %1883 = vmatmul.mubr.f32.gmra.mrb[0].mxu0 %v1816
    %v1884 = vpop.f32.mrb[0].mxu0
    %v1885 = vadd.f32 0.0, %v1884
    %v1886 = vpop.f32.mrb[0].mxu0
    %1887 = vdwg.mxu0
    %v1888 = vrcp.pop %v1814
    %v1889 = vmul.f32 %v1885, %v1888
    %v1890 = vadd.f32 %v1889, 0.0
    %1891 = vset.pattern.permute.xlu0 1
    %1892 = vperm.xlu0 %1891, %v177
    %v1893 = vpop.permute.xlu0 %1892
    %v1895 = vlaneseq
    %v1896 = vshrl.u32 %v1895, 7
    %v1897 = vsub.s32 4, %v1896
    %v1898 = vrot.slane %v170, %v1897
    %v1899 = vadd.f32 %v1893, %v1898
    %v1900 = vmul.f32 %v1899, 0.2
    %v1901 = vmax.f32 %v1899, %v1900
    %v1902 = vadd.f32 %v1901, %v168
    %v1903 = vsel %vm195, %v1902, -inf
    %1904 = vmax.xlane.f32.xlu0 %v1903
    %v1905 = vpop.xlane.xlu0 %1904
    %v1906 = vsub.f32 %v1902, %v1905
    %v1907 = vmul.f32 %v1906, 1.442695
    %v1908 = vpow.pop %v1907
    %v1909 = vsel %vm195, %v1908, 0.0
    %1910 = vadd.xlane.f32.xlu0 %v1909
    %v1911 = vpop.xlane.xlu0 %1910
    %1913 = vrot.lane.b32.xlu0 %v146, 96
    %v1914 = vpop.permute.xlu0 %1913
    %v1917 = vsel %vm195, %v1908, 0
    %1919 = vmatprep.subr.mxu0 0.0
    %1920 = vmatpush1.msra.mxu0 %v1914
    %1921 = vmatprep.subr.mxu0 0.0
    %1922 = vmatpush1.msra.mxu0 0.0
    %1923 = vmatprep.subr.mxu0 0.0
    %1924 = vmatpush1.msra.mxu0 0.0
    %1925 = vmatprep.subr.mxu0 0.0
    %1926 = vmatpush1.msra.mxu0 0.0
    %1927 = vmatprep.subr.mxu0 0.0
    %1928 = vmatpush1.msra.mxu0 0.0
    %1929 = vmatprep.subr.mxu0 0.0
    %1930 = vmatpush1.msra.mxu0 0.0
    %1931 = vmatprep.subr.mxu0 0.0
    %1932 = vmatpush1.msra.mxu0 0.0
    %1933 = vmatprep.subr.mxu0 0.0
    %1934 = vmatpush1.msra.mxu0 0.0
    %1935 = vmatprep.subr.mxu0 0.0
    %1936 = vmatpush1.msra.mxu0 0.0
    %1937 = vmatprep.subr.mxu0 0.0
    %1938 = vmatpush1.msra.mxu0 0.0
    %1939 = vmatprep.subr.mxu0 0.0
    %1940 = vmatpush1.msra.mxu0 0.0
    %1941 = vmatprep.subr.mxu0 0.0
    %1942 = vmatpush1.msra.mxu0 0.0
    %1943 = vmatprep.subr.mxu0 0.0
    %1944 = vmatpush1.msra.mxu0 0.0
    %1945 = vmatprep.subr.mxu0 0.0
    %1946 = vmatpush1.msra.mxu0 0.0
    %1947 = vmatprep.subr.mxu0 0.0
    %1948 = vmatpush1.msra.mxu0 0.0
    %1949 = vmatprep.subr.mxu0 0.0
    %1950 = vmatpush1.msra.mxu0 0.0
    %1951 = vmatprep.subr.mxu0 0.0
    %1952 = vmatpush1.msra.mxu0 0.0
    %1953 = vmatprep.subr.mxu0 0.0
    %1954 = vmatpush1.msra.mxu0 0.0
    %1955 = vmatprep.subr.mxu0 0.0
    %1956 = vmatpush1.msra.mxu0 0.0
    %1957 = vmatprep.subr.mxu0 0.0
    %1958 = vmatpush1.msra.mxu0 0.0
    %1959 = vmatprep.subr.mxu0 0.0
    %1960 = vmatpush1.msra.mxu0 0.0
    %1961 = vmatprep.subr.mxu0 0.0
    %1962 = vmatpush1.msra.mxu0 0.0
    %1963 = vmatprep.subr.mxu0 0.0
    %1964 = vmatpush1.msra.mxu0 0.0
    %1965 = vmatprep.subr.mxu0 0.0
    %1966 = vmatpush1.msra.mxu0 0.0
    %1967 = vmatprep.subr.mxu0 0.0
    %1968 = vmatpush1.msra.mxu0 0.0
    %1969 = vmatprep.subr.mxu0 0.0
    %1970 = vmatpush1.msra.mxu0 0.0
    %1971 = vmatprep.subr.mxu0 0.0
    %1972 = vmatpush1.msra.mxu0 0.0
    %1973 = vmatprep.subr.mxu0 0.0
    %1974 = vmatpush1.msra.mxu0 0.0
    %1975 = vmatprep.subr.mxu0 0.0
    %1976 = vmatpush1.msra.mxu0 0.0
    %1977 = vmatprep.subr.mxu0 0.0
    %1978 = vmatpush1.msra.mxu0 0.0
    %1979 = vmatprep.subr.mxu0 0.0
    %1980 = vmatpush1.msra.mxu0 0.0
    %1981 = vmatprep.subr.mxu0 0.0
    %1982 = vmatpush1.msra.mxu0 0.0
    %1983 = vmatprep.mubr.f32.mxu0 0.0
    %1984 = vmatmul.mubr.f32.gmra.mrb[0].mxu0 %v1917
    %v1985 = vpop.f32.mrb[0].mxu0
    %v1986 = vadd.f32 0.0, %v1985
    %v1987 = vpop.f32.mrb[0].mxu0
    %1988 = vdwg.mxu0
    %v1989 = vrcp.pop %v1911
    %v1990 = vmul.f32 %v1986, %v1989
    %v1991 = vadd.f32 %v1890, %v1990
    %1992 = vset.pattern.permute.xlu0 2
    %1993 = vperm.xlu0 %1992, %v177
    %v1994 = vpop.permute.xlu0 %1993
    %v1996 = vlaneseq
    %v1997 = vshrl.u32 %v1996, 7
    %v1998 = vsub.s32 4, %v1997
    %v1999 = vrot.slane %v171, %v1998
    %v2000 = vadd.f32 %v1994, %v1999
    %v2001 = vmul.f32 %v2000, 0.2
    %v2002 = vmax.f32 %v2000, %v2001
    %v2003 = vadd.f32 %v2002, %v168
    %v2004 = vsel %vm195, %v2003, -inf
    %2005 = vmax.xlane.f32.xlu0 %v2004
    %v2006 = vpop.xlane.xlu0 %2005
    %v2007 = vsub.f32 %v2003, %v2006
    %v2008 = vmul.f32 %v2007, 1.442695
    %v2009 = vpow.pop %v2008
    %v2010 = vsel %vm195, %v2009, 0.0
    %2011 = vadd.xlane.f32.xlu0 %v2010
    %v2012 = vpop.xlane.xlu0 %2011
    %2013 = vrot.lane.b32.xlu0 %v146, 64
    %v2014 = vpop.permute.xlu0 %2013
    %v2017 = vsel %vm195, %v2009, 0
    %2019 = vmatprep.subr.mxu0 0.0
    %2020 = vmatpush1.msra.mxu0 %v2014
    %2021 = vmatprep.subr.mxu0 0.0
    %2022 = vmatpush1.msra.mxu0 0.0
    %2023 = vmatprep.subr.mxu0 0.0
    %2024 = vmatpush1.msra.mxu0 0.0
    %2025 = vmatprep.subr.mxu0 0.0
    %2026 = vmatpush1.msra.mxu0 0.0
    %2027 = vmatprep.subr.mxu0 0.0
    %2028 = vmatpush1.msra.mxu0 0.0
    %2029 = vmatprep.subr.mxu0 0.0
    %2030 = vmatpush1.msra.mxu0 0.0
    %2031 = vmatprep.subr.mxu0 0.0
    %2032 = vmatpush1.msra.mxu0 0.0
    %2033 = vmatprep.subr.mxu0 0.0
    %2034 = vmatpush1.msra.mxu0 0.0
    %2035 = vmatprep.subr.mxu0 0.0
    %2036 = vmatpush1.msra.mxu0 0.0
    %2037 = vmatprep.subr.mxu0 0.0
    %2038 = vmatpush1.msra.mxu0 0.0
    %2039 = vmatprep.subr.mxu0 0.0
    %2040 = vmatpush1.msra.mxu0 0.0
    %2041 = vmatprep.subr.mxu0 0.0
    %2042 = vmatpush1.msra.mxu0 0.0
    %2043 = vmatprep.subr.mxu0 0.0
    %2044 = vmatpush1.msra.mxu0 0.0
    %2045 = vmatprep.subr.mxu0 0.0
    %2046 = vmatpush1.msra.mxu0 0.0
    %2047 = vmatprep.subr.mxu0 0.0
    %2048 = vmatpush1.msra.mxu0 0.0
    %2049 = vmatprep.subr.mxu0 0.0
    %2050 = vmatpush1.msra.mxu0 0.0
    %2051 = vmatprep.subr.mxu0 0.0
    %2052 = vmatpush1.msra.mxu0 0.0
    %2053 = vmatprep.subr.mxu0 0.0
    %2054 = vmatpush1.msra.mxu0 0.0
    %2055 = vmatprep.subr.mxu0 0.0
    %2056 = vmatpush1.msra.mxu0 0.0
    %2057 = vmatprep.subr.mxu0 0.0
    %2058 = vmatpush1.msra.mxu0 0.0
    %2059 = vmatprep.subr.mxu0 0.0
    %2060 = vmatpush1.msra.mxu0 0.0
    %2061 = vmatprep.subr.mxu0 0.0
    %2062 = vmatpush1.msra.mxu0 0.0
    %2063 = vmatprep.subr.mxu0 0.0
    %2064 = vmatpush1.msra.mxu0 0.0
    %2065 = vmatprep.subr.mxu0 0.0
    %2066 = vmatpush1.msra.mxu0 0.0
    %2067 = vmatprep.subr.mxu0 0.0
    %2068 = vmatpush1.msra.mxu0 0.0
    %2069 = vmatprep.subr.mxu0 0.0
    %2070 = vmatpush1.msra.mxu0 0.0
    %2071 = vmatprep.subr.mxu0 0.0
    %2072 = vmatpush1.msra.mxu0 0.0
    %2073 = vmatprep.subr.mxu0 0.0
    %2074 = vmatpush1.msra.mxu0 0.0
    %2075 = vmatprep.subr.mxu0 0.0
    %2076 = vmatpush1.msra.mxu0 0.0
    %2077 = vmatprep.subr.mxu0 0.0
    %2078 = vmatpush1.msra.mxu0 0.0
    %2079 = vmatprep.subr.mxu0 0.0
    %2080 = vmatpush1.msra.mxu0 0.0
    %2081 = vmatprep.subr.mxu0 0.0
    %2082 = vmatpush1.msra.mxu0 0.0
    %2083 = vmatprep.mubr.f32.mxu0 0.0
    %2084 = vmatmul.mubr.f32.gmra.mrb[0].mxu0 %v2017
    %v2085 = vpop.f32.mrb[0].mxu0
    %v2086 = vadd.f32 0.0, %v2085
    %v2087 = vpop.f32.mrb[0].mxu0
    %2088 = vdwg.mxu0
    %v2089 = vrcp.pop %v2012
    %v2090 = vmul.f32 %v2086, %v2089
    %v2091 = vadd.f32 %v1991, %v2090
    %2092 = vset.pattern.permute.xlu0 3
    %2093 = vperm.xlu0 %2092, %v177
    %v2094 = vpop.permute.xlu0 %2093
    %v2096 = vlaneseq
    %v2097 = vshrl.u32 %v2096, 7
    %v2098 = vsub.s32 4, %v2097
    %v2099 = vrot.slane %v172, %v2098
    %v2100 = vadd.f32 %v2094, %v2099
    %v2101 = vmul.f32 %v2100, 0.2
    %v2102 = vmax.f32 %v2100, %v2101
    %v2103 = vadd.f32 %v2102, %v168
    %v2104 = vsel %vm195, %v2103, -inf
    %2105 = vmax.xlane.f32.xlu0 %v2104
    %v2106 = vpop.xlane.xlu0 %2105
    %v2107 = vsub.f32 %v2103, %v2106
    %v2108 = vmul.f32 %v2107, 1.442695
    %v2109 = vpow.pop %v2108
    %v2110 = vsel %vm195, %v2109, 0.0
    %2111 = vadd.xlane.f32.xlu0 %v2110
    %v2112 = vpop.xlane.xlu0 %2111
    %2113 = vrot.lane.b32.xlu0 %v146, 32
    %v2114 = vpop.permute.xlu0 %2113
    %v2117 = vsel %vm195, %v2109, 0
    %2119 = vmatprep.subr.mxu0 0.0
    %2120 = vmatpush1.msra.mxu0 %v2114
    %2121 = vmatprep.subr.mxu0 0.0
    %2122 = vmatpush1.msra.mxu0 0.0
    %2123 = vmatprep.subr.mxu0 0.0
    %2124 = vmatpush1.msra.mxu0 0.0
    %2125 = vmatprep.subr.mxu0 0.0
    %2126 = vmatpush1.msra.mxu0 0.0
    %2127 = vmatprep.subr.mxu0 0.0
    %2128 = vmatpush1.msra.mxu0 0.0
    %2129 = vmatprep.subr.mxu0 0.0
    %2130 = vmatpush1.msra.mxu0 0.0
    %2131 = vmatprep.subr.mxu0 0.0
    %2132 = vmatpush1.msra.mxu0 0.0
    %2133 = vmatprep.subr.mxu0 0.0
    %2134 = vmatpush1.msra.mxu0 0.0
    %2135 = vmatprep.subr.mxu0 0.0
    %2136 = vmatpush1.msra.mxu0 0.0
    %2137 = vmatprep.subr.mxu0 0.0
    %2138 = vmatpush1.msra.mxu0 0.0
    %2139 = vmatprep.subr.mxu0 0.0
    %2140 = vmatpush1.msra.mxu0 0.0
    %2141 = vmatprep.subr.mxu0 0.0
    %2142 = vmatpush1.msra.mxu0 0.0
    %2143 = vmatprep.subr.mxu0 0.0
    %2144 = vmatpush1.msra.mxu0 0.0
    %2145 = vmatprep.subr.mxu0 0.0
    %2146 = vmatpush1.msra.mxu0 0.0
    %2147 = vmatprep.subr.mxu0 0.0
    %2148 = vmatpush1.msra.mxu0 0.0
    %2149 = vmatprep.subr.mxu0 0.0
    %2150 = vmatpush1.msra.mxu0 0.0
    %2151 = vmatprep.subr.mxu0 0.0
    %2152 = vmatpush1.msra.mxu0 0.0
    %2153 = vmatprep.subr.mxu0 0.0
    %2154 = vmatpush1.msra.mxu0 0.0
    %2155 = vmatprep.subr.mxu0 0.0
    %2156 = vmatpush1.msra.mxu0 0.0
    %2157 = vmatprep.subr.mxu0 0.0
    %2158 = vmatpush1.msra.mxu0 0.0
    %2159 = vmatprep.subr.mxu0 0.0
    %2160 = vmatpush1.msra.mxu0 0.0
    %2161 = vmatprep.subr.mxu0 0.0
    %2162 = vmatpush1.msra.mxu0 0.0
    %2163 = vmatprep.subr.mxu0 0.0
    %2164 = vmatpush1.msra.mxu0 0.0
    %2165 = vmatprep.subr.mxu0 0.0
    %2166 = vmatpush1.msra.mxu0 0.0
    %2167 = vmatprep.subr.mxu0 0.0
    %2168 = vmatpush1.msra.mxu0 0.0
    %2169 = vmatprep.subr.mxu0 0.0
    %2170 = vmatpush1.msra.mxu0 0.0
    %2171 = vmatprep.subr.mxu0 0.0
    %2172 = vmatpush1.msra.mxu0 0.0
    %2173 = vmatprep.subr.mxu0 0.0
    %2174 = vmatpush1.msra.mxu0 0.0
    %2175 = vmatprep.subr.mxu0 0.0
    %2176 = vmatpush1.msra.mxu0 0.0
    %2177 = vmatprep.subr.mxu0 0.0
    %2178 = vmatpush1.msra.mxu0 0.0
    %2179 = vmatprep.subr.mxu0 0.0
    %2180 = vmatpush1.msra.mxu0 0.0
    %2181 = vmatprep.subr.mxu0 0.0
    %2182 = vmatpush1.msra.mxu0 0.0
    %2183 = vmatprep.mubr.f32.mxu0 0.0
    %2184 = vmatmul.mubr.f32.gmra.mrb[0].mxu0 %v2117
    %v2185 = vpop.f32.mrb[0].mxu0
    %v2186 = vadd.f32 0.0, %v2185
    %v2187 = vpop.f32.mrb[0].mxu0
    %2188 = vdwg.mxu0
    %v2189 = vrcp.pop %v2112
    %v2190 = vmul.f32 %v2186, %v2189
    %v2191 = vadd.f32 %v2091, %v2190
    %v2192 = vmul.f32 %v2191, 0.25
    %v2193 = vadd.f32 %v2192, %v587
    %2195 = vset.pattern.permute.xlu0 0
    %2196 = vperm.xlu0 %2195, %v178
    %v2197 = vpop.permute.xlu0 %2196
    %v2199 = vlaneseq
    %v2200 = vshrl.u32 %v2199, 7
    %v2201 = vsub.s32 5, %v2200
    %v2202 = vrot.slane %v169, %v2201
    %v2203 = vadd.f32 %v2197, %v2202
    %v2204 = vmul.f32 %v2203, 0.2
    %v2205 = vmax.f32 %v2203, %v2204
    %v2206 = vadd.f32 %v2205, %v168
    %v2207 = vsel %vm195, %v2206, -inf
    %2208 = vmax.xlane.f32.xlu0 %v2207
    %v2209 = vpop.xlane.xlu0 %2208
    %v2210 = vsub.f32 %v2206, %v2209
    %v2211 = vmul.f32 %v2210, 1.442695
    %v2212 = vpow.pop %v2211
    %v2213 = vsel %vm195, %v2212, 0.0
    %2214 = vadd.xlane.f32.xlu0 %v2213
    %v2215 = vpop.xlane.xlu0 %2214
    %v2217 = vsel %vm195, %v2212, 0
    %2219 = vmatprep.subr.mxu0 0.0
    %2220 = vmatpush1.msra.mxu0 %v151
    %2221 = vmatprep.subr.mxu0 0.0
    %2222 = vmatpush1.msra.mxu0 0.0
    %2223 = vmatprep.subr.mxu0 0.0
    %2224 = vmatpush1.msra.mxu0 0.0
    %2225 = vmatprep.subr.mxu0 0.0
    %2226 = vmatpush1.msra.mxu0 0.0
    %2227 = vmatprep.subr.mxu0 0.0
    %2228 = vmatpush1.msra.mxu0 0.0
    %2229 = vmatprep.subr.mxu0 0.0
    %2230 = vmatpush1.msra.mxu0 0.0
    %2231 = vmatprep.subr.mxu0 0.0
    %2232 = vmatpush1.msra.mxu0 0.0
    %2233 = vmatprep.subr.mxu0 0.0
    %2234 = vmatpush1.msra.mxu0 0.0
    %2235 = vmatprep.subr.mxu0 0.0
    %2236 = vmatpush1.msra.mxu0 0.0
    %2237 = vmatprep.subr.mxu0 0.0
    %2238 = vmatpush1.msra.mxu0 0.0
    %2239 = vmatprep.subr.mxu0 0.0
    %2240 = vmatpush1.msra.mxu0 0.0
    %2241 = vmatprep.subr.mxu0 0.0
    %2242 = vmatpush1.msra.mxu0 0.0
    %2243 = vmatprep.subr.mxu0 0.0
    %2244 = vmatpush1.msra.mxu0 0.0
    %2245 = vmatprep.subr.mxu0 0.0
    %2246 = vmatpush1.msra.mxu0 0.0
    %2247 = vmatprep.subr.mxu0 0.0
    %2248 = vmatpush1.msra.mxu0 0.0
    %2249 = vmatprep.subr.mxu0 0.0
    %2250 = vmatpush1.msra.mxu0 0.0
    %2251 = vmatprep.subr.mxu0 0.0
    %2252 = vmatpush1.msra.mxu0 0.0
    %2253 = vmatprep.subr.mxu0 0.0
    %2254 = vmatpush1.msra.mxu0 0.0
    %2255 = vmatprep.subr.mxu0 0.0
    %2256 = vmatpush1.msra.mxu0 0.0
    %2257 = vmatprep.subr.mxu0 0.0
    %2258 = vmatpush1.msra.mxu0 0.0
    %2259 = vmatprep.subr.mxu0 0.0
    %2260 = vmatpush1.msra.mxu0 0.0
    %2261 = vmatprep.subr.mxu0 0.0
    %2262 = vmatpush1.msra.mxu0 0.0
    %2263 = vmatprep.subr.mxu0 0.0
    %2264 = vmatpush1.msra.mxu0 0.0
    %2265 = vmatprep.subr.mxu0 0.0
    %2266 = vmatpush1.msra.mxu0 0.0
    %2267 = vmatprep.subr.mxu0 0.0
    %2268 = vmatpush1.msra.mxu0 0.0
    %2269 = vmatprep.subr.mxu0 0.0
    %2270 = vmatpush1.msra.mxu0 0.0
    %2271 = vmatprep.subr.mxu0 0.0
    %2272 = vmatpush1.msra.mxu0 0.0
    %2273 = vmatprep.subr.mxu0 0.0
    %2274 = vmatpush1.msra.mxu0 0.0
    %2275 = vmatprep.subr.mxu0 0.0
    %2276 = vmatpush1.msra.mxu0 0.0
    %2277 = vmatprep.subr.mxu0 0.0
    %2278 = vmatpush1.msra.mxu0 0.0
    %2279 = vmatprep.subr.mxu0 0.0
    %2280 = vmatpush1.msra.mxu0 0.0
    %2281 = vmatprep.subr.mxu0 0.0
    %2282 = vmatpush1.msra.mxu0 0.0
    %2283 = vmatprep.mubr.f32.mxu0 0.0
    %2284 = vmatmul.mubr.f32.gmra.mrb[0].mxu0 %v2217
    %v2285 = vpop.f32.mrb[0].mxu0
    %v2286 = vadd.f32 0.0, %v2285
    %v2287 = vpop.f32.mrb[0].mxu0
    %2288 = vdwg.mxu0
    %v2289 = vrcp.pop %v2215
    %v2290 = vmul.f32 %v2286, %v2289
    %v2291 = vadd.f32 %v2290, 0.0
    %2292 = vset.pattern.permute.xlu0 1
    %2293 = vperm.xlu0 %2292, %v178
    %v2294 = vpop.permute.xlu0 %2293
    %v2296 = vlaneseq
    %v2297 = vshrl.u32 %v2296, 7
    %v2298 = vsub.s32 5, %v2297
    %v2299 = vrot.slane %v170, %v2298
    %v2300 = vadd.f32 %v2294, %v2299
    %v2301 = vmul.f32 %v2300, 0.2
    %v2302 = vmax.f32 %v2300, %v2301
    %v2303 = vadd.f32 %v2302, %v168
    %v2304 = vsel %vm195, %v2303, -inf
    %2305 = vmax.xlane.f32.xlu0 %v2304
    %v2306 = vpop.xlane.xlu0 %2305
    %v2307 = vsub.f32 %v2303, %v2306
    %v2308 = vmul.f32 %v2307, 1.442695
    %v2309 = vpow.pop %v2308
    %v2310 = vsel %vm195, %v2309, 0.0
    %2311 = vadd.xlane.f32.xlu0 %v2310
    %v2312 = vpop.xlane.xlu0 %2311
    %2314 = vrot.lane.b32.xlu0 %v151, 96
    %v2315 = vpop.permute.xlu0 %2314
    %v2318 = vsel %vm195, %v2309, 0
    %2320 = vmatprep.subr.mxu0 0.0
    %2321 = vmatpush1.msra.mxu0 %v2315
    %2322 = vmatprep.subr.mxu0 0.0
    %2323 = vmatpush1.msra.mxu0 0.0
    %2324 = vmatprep.subr.mxu0 0.0
    %2325 = vmatpush1.msra.mxu0 0.0
    %2326 = vmatprep.subr.mxu0 0.0
    %2327 = vmatpush1.msra.mxu0 0.0
    %2328 = vmatprep.subr.mxu0 0.0
    %2329 = vmatpush1.msra.mxu0 0.0
    %2330 = vmatprep.subr.mxu0 0.0
    %2331 = vmatpush1.msra.mxu0 0.0
    %2332 = vmatprep.subr.mxu0 0.0
    %2333 = vmatpush1.msra.mxu0 0.0
    %2334 = vmatprep.subr.mxu0 0.0
    %2335 = vmatpush1.msra.mxu0 0.0
    %2336 = vmatprep.subr.mxu0 0.0
    %2337 = vmatpush1.msra.mxu0 0.0
    %2338 = vmatprep.subr.mxu0 0.0
    %2339 = vmatpush1.msra.mxu0 0.0
    %2340 = vmatprep.subr.mxu0 0.0
    %2341 = vmatpush1.msra.mxu0 0.0
    %2342 = vmatprep.subr.mxu0 0.0
    %2343 = vmatpush1.msra.mxu0 0.0
    %2344 = vmatprep.subr.mxu0 0.0
    %2345 = vmatpush1.msra.mxu0 0.0
    %2346 = vmatprep.subr.mxu0 0.0
    %2347 = vmatpush1.msra.mxu0 0.0
    %2348 = vmatprep.subr.mxu0 0.0
    %2349 = vmatpush1.msra.mxu0 0.0
    %2350 = vmatprep.subr.mxu0 0.0
    %2351 = vmatpush1.msra.mxu0 0.0
    %2352 = vmatprep.subr.mxu0 0.0
    %2353 = vmatpush1.msra.mxu0 0.0
    %2354 = vmatprep.subr.mxu0 0.0
    %2355 = vmatpush1.msra.mxu0 0.0
    %2356 = vmatprep.subr.mxu0 0.0
    %2357 = vmatpush1.msra.mxu0 0.0
    %2358 = vmatprep.subr.mxu0 0.0
    %2359 = vmatpush1.msra.mxu0 0.0
    %2360 = vmatprep.subr.mxu0 0.0
    %2361 = vmatpush1.msra.mxu0 0.0
    %2362 = vmatprep.subr.mxu0 0.0
    %2363 = vmatpush1.msra.mxu0 0.0
    %2364 = vmatprep.subr.mxu0 0.0
    %2365 = vmatpush1.msra.mxu0 0.0
    %2366 = vmatprep.subr.mxu0 0.0
    %2367 = vmatpush1.msra.mxu0 0.0
    %2368 = vmatprep.subr.mxu0 0.0
    %2369 = vmatpush1.msra.mxu0 0.0
    %2370 = vmatprep.subr.mxu0 0.0
    %2371 = vmatpush1.msra.mxu0 0.0
    %2372 = vmatprep.subr.mxu0 0.0
    %2373 = vmatpush1.msra.mxu0 0.0
    %2374 = vmatprep.subr.mxu0 0.0
    %2375 = vmatpush1.msra.mxu0 0.0
    %2376 = vmatprep.subr.mxu0 0.0
    %2377 = vmatpush1.msra.mxu0 0.0
    %2378 = vmatprep.subr.mxu0 0.0
    %2379 = vmatpush1.msra.mxu0 0.0
    %2380 = vmatprep.subr.mxu0 0.0
    %2381 = vmatpush1.msra.mxu0 0.0
    %2382 = vmatprep.subr.mxu0 0.0
    %2383 = vmatpush1.msra.mxu0 0.0
    %2384 = vmatprep.mubr.f32.mxu0 0.0
    %2385 = vmatmul.mubr.f32.gmra.mrb[0].mxu0 %v2318
    %v2386 = vpop.f32.mrb[0].mxu0
    %v2387 = vadd.f32 0.0, %v2386
    %v2388 = vpop.f32.mrb[0].mxu0
    %2389 = vdwg.mxu0
    %v2390 = vrcp.pop %v2312
    %v2391 = vmul.f32 %v2387, %v2390
    %v2392 = vadd.f32 %v2291, %v2391
    %2393 = vset.pattern.permute.xlu0 2
    %2394 = vperm.xlu0 %2393, %v178
    %v2395 = vpop.permute.xlu0 %2394
    %v2397 = vlaneseq
    %v2398 = vshrl.u32 %v2397, 7
    %v2399 = vsub.s32 5, %v2398
    %v2400 = vrot.slane %v171, %v2399
    %v2401 = vadd.f32 %v2395, %v2400
    %v2402 = vmul.f32 %v2401, 0.2
    %v2403 = vmax.f32 %v2401, %v2402
    %v2404 = vadd.f32 %v2403, %v168
    %v2405 = vsel %vm195, %v2404, -inf
    %2406 = vmax.xlane.f32.xlu0 %v2405
    %v2407 = vpop.xlane.xlu0 %2406
    %v2408 = vsub.f32 %v2404, %v2407
    %v2409 = vmul.f32 %v2408, 1.442695
    %v2410 = vpow.pop %v2409
    %v2411 = vsel %vm195, %v2410, 0.0
    %2412 = vadd.xlane.f32.xlu0 %v2411
    %v2413 = vpop.xlane.xlu0 %2412
    %2414 = vrot.lane.b32.xlu0 %v151, 64
    %v2415 = vpop.permute.xlu0 %2414
    %v2418 = vsel %vm195, %v2410, 0
    %2420 = vmatprep.subr.mxu0 0.0
    %2421 = vmatpush1.msra.mxu0 %v2415
    %2422 = vmatprep.subr.mxu0 0.0
    %2423 = vmatpush1.msra.mxu0 0.0
    %2424 = vmatprep.subr.mxu0 0.0
    %2425 = vmatpush1.msra.mxu0 0.0
    %2426 = vmatprep.subr.mxu0 0.0
    %2427 = vmatpush1.msra.mxu0 0.0
    %2428 = vmatprep.subr.mxu0 0.0
    %2429 = vmatpush1.msra.mxu0 0.0
    %2430 = vmatprep.subr.mxu0 0.0
    %2431 = vmatpush1.msra.mxu0 0.0
    %2432 = vmatprep.subr.mxu0 0.0
    %2433 = vmatpush1.msra.mxu0 0.0
    %2434 = vmatprep.subr.mxu0 0.0
    %2435 = vmatpush1.msra.mxu0 0.0
    %2436 = vmatprep.subr.mxu0 0.0
    %2437 = vmatpush1.msra.mxu0 0.0
    %2438 = vmatprep.subr.mxu0 0.0
    %2439 = vmatpush1.msra.mxu0 0.0
    %2440 = vmatprep.subr.mxu0 0.0
    %2441 = vmatpush1.msra.mxu0 0.0
    %2442 = vmatprep.subr.mxu0 0.0
    %2443 = vmatpush1.msra.mxu0 0.0
    %2444 = vmatprep.subr.mxu0 0.0
    %2445 = vmatpush1.msra.mxu0 0.0
    %2446 = vmatprep.subr.mxu0 0.0
    %2447 = vmatpush1.msra.mxu0 0.0
    %2448 = vmatprep.subr.mxu0 0.0
    %2449 = vmatpush1.msra.mxu0 0.0
    %2450 = vmatprep.subr.mxu0 0.0
    %2451 = vmatpush1.msra.mxu0 0.0
    %2452 = vmatprep.subr.mxu0 0.0
    %2453 = vmatpush1.msra.mxu0 0.0
    %2454 = vmatprep.subr.mxu0 0.0
    %2455 = vmatpush1.msra.mxu0 0.0
    %2456 = vmatprep.subr.mxu0 0.0
    %2457 = vmatpush1.msra.mxu0 0.0
    %2458 = vmatprep.subr.mxu0 0.0
    %2459 = vmatpush1.msra.mxu0 0.0
    %2460 = vmatprep.subr.mxu0 0.0
    %2461 = vmatpush1.msra.mxu0 0.0
    %2462 = vmatprep.subr.mxu0 0.0
    %2463 = vmatpush1.msra.mxu0 0.0
    %2464 = vmatprep.subr.mxu0 0.0
    %2465 = vmatpush1.msra.mxu0 0.0
    %2466 = vmatprep.subr.mxu0 0.0
    %2467 = vmatpush1.msra.mxu0 0.0
    %2468 = vmatprep.subr.mxu0 0.0
    %2469 = vmatpush1.msra.mxu0 0.0
    %2470 = vmatprep.subr.mxu0 0.0
    %2471 = vmatpush1.msra.mxu0 0.0
    %2472 = vmatprep.subr.mxu0 0.0
    %2473 = vmatpush1.msra.mxu0 0.0
    %2474 = vmatprep.subr.mxu0 0.0
    %2475 = vmatpush1.msra.mxu0 0.0
    %2476 = vmatprep.subr.mxu0 0.0
    %2477 = vmatpush1.msra.mxu0 0.0
    %2478 = vmatprep.subr.mxu0 0.0
    %2479 = vmatpush1.msra.mxu0 0.0
    %2480 = vmatprep.subr.mxu0 0.0
    %2481 = vmatpush1.msra.mxu0 0.0
    %2482 = vmatprep.subr.mxu0 0.0
    %2483 = vmatpush1.msra.mxu0 0.0
    %2484 = vmatprep.mubr.f32.mxu0 0.0
    %2485 = vmatmul.mubr.f32.gmra.mrb[0].mxu0 %v2418
    %v2486 = vpop.f32.mrb[0].mxu0
    %v2487 = vadd.f32 0.0, %v2486
    %v2488 = vpop.f32.mrb[0].mxu0
    %2489 = vdwg.mxu0
    %v2490 = vrcp.pop %v2413
    %v2491 = vmul.f32 %v2487, %v2490
    %v2492 = vadd.f32 %v2392, %v2491
    %2493 = vset.pattern.permute.xlu0 3
    %2494 = vperm.xlu0 %2493, %v178
    %v2495 = vpop.permute.xlu0 %2494
    %v2497 = vlaneseq
    %v2498 = vshrl.u32 %v2497, 7
    %v2499 = vsub.s32 5, %v2498
    %v2500 = vrot.slane %v172, %v2499
    %v2501 = vadd.f32 %v2495, %v2500
    %v2502 = vmul.f32 %v2501, 0.2
    %v2503 = vmax.f32 %v2501, %v2502
    %v2504 = vadd.f32 %v2503, %v168
    %v2505 = vsel %vm195, %v2504, -inf
    %2506 = vmax.xlane.f32.xlu0 %v2505
    %v2507 = vpop.xlane.xlu0 %2506
    %v2508 = vsub.f32 %v2504, %v2507
    %v2509 = vmul.f32 %v2508, 1.442695
    %v2510 = vpow.pop %v2509
    %v2511 = vsel %vm195, %v2510, 0.0
    %2512 = vadd.xlane.f32.xlu0 %v2511
    %v2513 = vpop.xlane.xlu0 %2512
    %2514 = vrot.lane.b32.xlu0 %v151, 32
    %v2515 = vpop.permute.xlu0 %2514
    %v2518 = vsel %vm195, %v2510, 0
    %2520 = vmatprep.subr.mxu0 0.0
    %2521 = vmatpush1.msra.mxu0 %v2515
    %2522 = vmatprep.subr.mxu0 0.0
    %2523 = vmatpush1.msra.mxu0 0.0
    %2524 = vmatprep.subr.mxu0 0.0
    %2525 = vmatpush1.msra.mxu0 0.0
    %2526 = vmatprep.subr.mxu0 0.0
    %2527 = vmatpush1.msra.mxu0 0.0
    %2528 = vmatprep.subr.mxu0 0.0
    %2529 = vmatpush1.msra.mxu0 0.0
    %2530 = vmatprep.subr.mxu0 0.0
    %2531 = vmatpush1.msra.mxu0 0.0
    %2532 = vmatprep.subr.mxu0 0.0
    %2533 = vmatpush1.msra.mxu0 0.0
    %2534 = vmatprep.subr.mxu0 0.0
    %2535 = vmatpush1.msra.mxu0 0.0
    %2536 = vmatprep.subr.mxu0 0.0
    %2537 = vmatpush1.msra.mxu0 0.0
    %2538 = vmatprep.subr.mxu0 0.0
    %2539 = vmatpush1.msra.mxu0 0.0
    %2540 = vmatprep.subr.mxu0 0.0
    %2541 = vmatpush1.msra.mxu0 0.0
    %2542 = vmatprep.subr.mxu0 0.0
    %2543 = vmatpush1.msra.mxu0 0.0
    %2544 = vmatprep.subr.mxu0 0.0
    %2545 = vmatpush1.msra.mxu0 0.0
    %2546 = vmatprep.subr.mxu0 0.0
    %2547 = vmatpush1.msra.mxu0 0.0
    %2548 = vmatprep.subr.mxu0 0.0
    %2549 = vmatpush1.msra.mxu0 0.0
    %2550 = vmatprep.subr.mxu0 0.0
    %2551 = vmatpush1.msra.mxu0 0.0
    %2552 = vmatprep.subr.mxu0 0.0
    %2553 = vmatpush1.msra.mxu0 0.0
    %2554 = vmatprep.subr.mxu0 0.0
    %2555 = vmatpush1.msra.mxu0 0.0
    %2556 = vmatprep.subr.mxu0 0.0
    %2557 = vmatpush1.msra.mxu0 0.0
    %2558 = vmatprep.subr.mxu0 0.0
    %2559 = vmatpush1.msra.mxu0 0.0
    %2560 = vmatprep.subr.mxu0 0.0
    %2561 = vmatpush1.msra.mxu0 0.0
    %2562 = vmatprep.subr.mxu0 0.0
    %2563 = vmatpush1.msra.mxu0 0.0
    %2564 = vmatprep.subr.mxu0 0.0
    %2565 = vmatpush1.msra.mxu0 0.0
    %2566 = vmatprep.subr.mxu0 0.0
    %2567 = vmatpush1.msra.mxu0 0.0
    %2568 = vmatprep.subr.mxu0 0.0
    %2569 = vmatpush1.msra.mxu0 0.0
    %2570 = vmatprep.subr.mxu0 0.0
    %2571 = vmatpush1.msra.mxu0 0.0
    %2572 = vmatprep.subr.mxu0 0.0
    %2573 = vmatpush1.msra.mxu0 0.0
    %2574 = vmatprep.subr.mxu0 0.0
    %2575 = vmatpush1.msra.mxu0 0.0
    %2576 = vmatprep.subr.mxu0 0.0
    %2577 = vmatpush1.msra.mxu0 0.0
    %2578 = vmatprep.subr.mxu0 0.0
    %2579 = vmatpush1.msra.mxu0 0.0
    %2580 = vmatprep.subr.mxu0 0.0
    %2581 = vmatpush1.msra.mxu0 0.0
    %2582 = vmatprep.subr.mxu0 0.0
    %2583 = vmatpush1.msra.mxu0 0.0
    %2584 = vmatprep.mubr.f32.mxu0 0.0
    %2585 = vmatmul.mubr.f32.gmra.mrb[0].mxu0 %v2518
    %v2586 = vpop.f32.mrb[0].mxu0
    %v2587 = vadd.f32 0.0, %v2586
    %v2588 = vpop.f32.mrb[0].mxu0
    %2589 = vdwg.mxu0
    %v2590 = vrcp.pop %v2513
    %v2591 = vmul.f32 %v2587, %v2590
    %v2592 = vadd.f32 %v2492, %v2591
    %v2593 = vmul.f32 %v2592, 0.25
    %v2594 = vadd.f32 %v2593, %v587
    %2596 = vset.pattern.permute.xlu0 0
    %2597 = vperm.xlu0 %2596, %v179
    %v2598 = vpop.permute.xlu0 %2597
    %v2600 = vlaneseq
    %v2601 = vshrl.u32 %v2600, 7
    %v2602 = vsub.s32 6, %v2601
    %v2603 = vrot.slane %v169, %v2602
    %v2604 = vadd.f32 %v2598, %v2603
    %v2605 = vmul.f32 %v2604, 0.2
    %v2606 = vmax.f32 %v2604, %v2605
    %v2607 = vadd.f32 %v2606, %v168
    %v2608 = vsel %vm195, %v2607, -inf
    %2609 = vmax.xlane.f32.xlu0 %v2608
    %v2610 = vpop.xlane.xlu0 %2609
    %v2611 = vsub.f32 %v2607, %v2610
    %v2612 = vmul.f32 %v2611, 1.442695
    %v2613 = vpow.pop %v2612
    %v2614 = vsel %vm195, %v2613, 0.0
    %2615 = vadd.xlane.f32.xlu0 %v2614
    %v2616 = vpop.xlane.xlu0 %2615
    %v2618 = vsel %vm195, %v2613, 0
    %2620 = vmatprep.subr.mxu0 0.0
    %2621 = vmatpush1.msra.mxu0 %v156
    %2622 = vmatprep.subr.mxu0 0.0
    %2623 = vmatpush1.msra.mxu0 0.0
    %2624 = vmatprep.subr.mxu0 0.0
    %2625 = vmatpush1.msra.mxu0 0.0
    %2626 = vmatprep.subr.mxu0 0.0
    %2627 = vmatpush1.msra.mxu0 0.0
    %2628 = vmatprep.subr.mxu0 0.0
    %2629 = vmatpush1.msra.mxu0 0.0
    %2630 = vmatprep.subr.mxu0 0.0
    %2631 = vmatpush1.msra.mxu0 0.0
    %2632 = vmatprep.subr.mxu0 0.0
    %2633 = vmatpush1.msra.mxu0 0.0
    %2634 = vmatprep.subr.mxu0 0.0
    %2635 = vmatpush1.msra.mxu0 0.0
    %2636 = vmatprep.subr.mxu0 0.0
    %2637 = vmatpush1.msra.mxu0 0.0
    %2638 = vmatprep.subr.mxu0 0.0
    %2639 = vmatpush1.msra.mxu0 0.0
    %2640 = vmatprep.subr.mxu0 0.0
    %2641 = vmatpush1.msra.mxu0 0.0
    %2642 = vmatprep.subr.mxu0 0.0
    %2643 = vmatpush1.msra.mxu0 0.0
    %2644 = vmatprep.subr.mxu0 0.0
    %2645 = vmatpush1.msra.mxu0 0.0
    %2646 = vmatprep.subr.mxu0 0.0
    %2647 = vmatpush1.msra.mxu0 0.0
    %2648 = vmatprep.subr.mxu0 0.0
    %2649 = vmatpush1.msra.mxu0 0.0
    %2650 = vmatprep.subr.mxu0 0.0
    %2651 = vmatpush1.msra.mxu0 0.0
    %2652 = vmatprep.subr.mxu0 0.0
    %2653 = vmatpush1.msra.mxu0 0.0
    %2654 = vmatprep.subr.mxu0 0.0
    %2655 = vmatpush1.msra.mxu0 0.0
    %2656 = vmatprep.subr.mxu0 0.0
    %2657 = vmatpush1.msra.mxu0 0.0
    %2658 = vmatprep.subr.mxu0 0.0
    %2659 = vmatpush1.msra.mxu0 0.0
    %2660 = vmatprep.subr.mxu0 0.0
    %2661 = vmatpush1.msra.mxu0 0.0
    %2662 = vmatprep.subr.mxu0 0.0
    %2663 = vmatpush1.msra.mxu0 0.0
    %2664 = vmatprep.subr.mxu0 0.0
    %2665 = vmatpush1.msra.mxu0 0.0
    %2666 = vmatprep.subr.mxu0 0.0
    %2667 = vmatpush1.msra.mxu0 0.0
    %2668 = vmatprep.subr.mxu0 0.0
    %2669 = vmatpush1.msra.mxu0 0.0
    %2670 = vmatprep.subr.mxu0 0.0
    %2671 = vmatpush1.msra.mxu0 0.0
    %2672 = vmatprep.subr.mxu0 0.0
    %2673 = vmatpush1.msra.mxu0 0.0
    %2674 = vmatprep.subr.mxu0 0.0
    %2675 = vmatpush1.msra.mxu0 0.0
    %2676 = vmatprep.subr.mxu0 0.0
    %2677 = vmatpush1.msra.mxu0 0.0
    %2678 = vmatprep.subr.mxu0 0.0
    %2679 = vmatpush1.msra.mxu0 0.0
    %2680 = vmatprep.subr.mxu0 0.0
    %2681 = vmatpush1.msra.mxu0 0.0
    %2682 = vmatprep.subr.mxu0 0.0
    %2683 = vmatpush1.msra.mxu0 0.0
    %2684 = vmatprep.mubr.f32.mxu0 0.0
    %2685 = vmatmul.mubr.f32.gmra.mrb[0].mxu0 %v2618
    %v2686 = vpop.f32.mrb[0].mxu0
    %v2687 = vadd.f32 0.0, %v2686
    %v2688 = vpop.f32.mrb[0].mxu0
    %2689 = vdwg.mxu0
    %v2690 = vrcp.pop %v2616
    %v2691 = vmul.f32 %v2687, %v2690
    %v2692 = vadd.f32 %v2691, 0.0
    %2693 = vset.pattern.permute.xlu0 1
    %2694 = vperm.xlu0 %2693, %v179
    %v2695 = vpop.permute.xlu0 %2694
    %v2697 = vlaneseq
    %v2698 = vshrl.u32 %v2697, 7
    %v2699 = vsub.s32 6, %v2698
    %v2700 = vrot.slane %v170, %v2699
    %v2701 = vadd.f32 %v2695, %v2700
    %v2702 = vmul.f32 %v2701, 0.2
    %v2703 = vmax.f32 %v2701, %v2702
    %v2704 = vadd.f32 %v2703, %v168
    %v2705 = vsel %vm195, %v2704, -inf
    %2706 = vmax.xlane.f32.xlu0 %v2705
    %v2707 = vpop.xlane.xlu0 %2706
    %v2708 = vsub.f32 %v2704, %v2707
    %v2709 = vmul.f32 %v2708, 1.442695
    %v2710 = vpow.pop %v2709
    %v2711 = vsel %vm195, %v2710, 0.0
    %2712 = vadd.xlane.f32.xlu0 %v2711
    %v2713 = vpop.xlane.xlu0 %2712
    %2715 = vrot.lane.b32.xlu0 %v156, 96
    %v2716 = vpop.permute.xlu0 %2715
    %v2719 = vsel %vm195, %v2710, 0
    %2721 = vmatprep.subr.mxu0 0.0
    %2722 = vmatpush1.msra.mxu0 %v2716
    %2723 = vmatprep.subr.mxu0 0.0
    %2724 = vmatpush1.msra.mxu0 0.0
    %2725 = vmatprep.subr.mxu0 0.0
    %2726 = vmatpush1.msra.mxu0 0.0
    %2727 = vmatprep.subr.mxu0 0.0
    %2728 = vmatpush1.msra.mxu0 0.0
    %2729 = vmatprep.subr.mxu0 0.0
    %2730 = vmatpush1.msra.mxu0 0.0
    %2731 = vmatprep.subr.mxu0 0.0
    %2732 = vmatpush1.msra.mxu0 0.0
    %2733 = vmatprep.subr.mxu0 0.0
    %2734 = vmatpush1.msra.mxu0 0.0
    %2735 = vmatprep.subr.mxu0 0.0
    %2736 = vmatpush1.msra.mxu0 0.0
    %2737 = vmatprep.subr.mxu0 0.0
    %2738 = vmatpush1.msra.mxu0 0.0
    %2739 = vmatprep.subr.mxu0 0.0
    %2740 = vmatpush1.msra.mxu0 0.0
    %2741 = vmatprep.subr.mxu0 0.0
    %2742 = vmatpush1.msra.mxu0 0.0
    %2743 = vmatprep.subr.mxu0 0.0
    %2744 = vmatpush1.msra.mxu0 0.0
    %2745 = vmatprep.subr.mxu0 0.0
    %2746 = vmatpush1.msra.mxu0 0.0
    %2747 = vmatprep.subr.mxu0 0.0
    %2748 = vmatpush1.msra.mxu0 0.0
    %2749 = vmatprep.subr.mxu0 0.0
    %2750 = vmatpush1.msra.mxu0 0.0
    %2751 = vmatprep.subr.mxu0 0.0
    %2752 = vmatpush1.msra.mxu0 0.0
    %2753 = vmatprep.subr.mxu0 0.0
    %2754 = vmatpush1.msra.mxu0 0.0
    %2755 = vmatprep.subr.mxu0 0.0
    %2756 = vmatpush1.msra.mxu0 0.0
    %2757 = vmatprep.subr.mxu0 0.0
    %2758 = vmatpush1.msra.mxu0 0.0
    %2759 = vmatprep.subr.mxu0 0.0
    %2760 = vmatpush1.msra.mxu0 0.0
    %2761 = vmatprep.subr.mxu0 0.0
    %2762 = vmatpush1.msra.mxu0 0.0
    %2763 = vmatprep.subr.mxu0 0.0
    %2764 = vmatpush1.msra.mxu0 0.0
    %2765 = vmatprep.subr.mxu0 0.0
    %2766 = vmatpush1.msra.mxu0 0.0
    %2767 = vmatprep.subr.mxu0 0.0
    %2768 = vmatpush1.msra.mxu0 0.0
    %2769 = vmatprep.subr.mxu0 0.0
    %2770 = vmatpush1.msra.mxu0 0.0
    %2771 = vmatprep.subr.mxu0 0.0
    %2772 = vmatpush1.msra.mxu0 0.0
    %2773 = vmatprep.subr.mxu0 0.0
    %2774 = vmatpush1.msra.mxu0 0.0
    %2775 = vmatprep.subr.mxu0 0.0
    %2776 = vmatpush1.msra.mxu0 0.0
    %2777 = vmatprep.subr.mxu0 0.0
    %2778 = vmatpush1.msra.mxu0 0.0
    %2779 = vmatprep.subr.mxu0 0.0
    %2780 = vmatpush1.msra.mxu0 0.0
    %2781 = vmatprep.subr.mxu0 0.0
    %2782 = vmatpush1.msra.mxu0 0.0
    %2783 = vmatprep.subr.mxu0 0.0
    %2784 = vmatpush1.msra.mxu0 0.0
    %2785 = vmatprep.mubr.f32.mxu0 0.0
    %2786 = vmatmul.mubr.f32.gmra.mrb[0].mxu0 %v2719
    %v2787 = vpop.f32.mrb[0].mxu0
    %v2788 = vadd.f32 0.0, %v2787
    %v2789 = vpop.f32.mrb[0].mxu0
    %2790 = vdwg.mxu0
    %v2791 = vrcp.pop %v2713
    %v2792 = vmul.f32 %v2788, %v2791
    %v2793 = vadd.f32 %v2692, %v2792
    %2794 = vset.pattern.permute.xlu0 2
    %2795 = vperm.xlu0 %2794, %v179
    %v2796 = vpop.permute.xlu0 %2795
    %v2798 = vlaneseq
    %v2799 = vshrl.u32 %v2798, 7
    %v2800 = vsub.s32 6, %v2799
    %v2801 = vrot.slane %v171, %v2800
    %v2802 = vadd.f32 %v2796, %v2801
    %v2803 = vmul.f32 %v2802, 0.2
    %v2804 = vmax.f32 %v2802, %v2803
    %v2805 = vadd.f32 %v2804, %v168
    %v2806 = vsel %vm195, %v2805, -inf
    %2807 = vmax.xlane.f32.xlu0 %v2806
    %v2808 = vpop.xlane.xlu0 %2807
    %v2809 = vsub.f32 %v2805, %v2808
    %v2810 = vmul.f32 %v2809, 1.442695
    %v2811 = vpow.pop %v2810
    %v2812 = vsel %vm195, %v2811, 0.0
    %2813 = vadd.xlane.f32.xlu0 %v2812
    %v2814 = vpop.xlane.xlu0 %2813
    %2815 = vrot.lane.b32.xlu0 %v156, 64
    %v2816 = vpop.permute.xlu0 %2815
    %v2819 = vsel %vm195, %v2811, 0
    %2821 = vmatprep.subr.mxu0 0.0
    %2822 = vmatpush1.msra.mxu0 %v2816
    %2823 = vmatprep.subr.mxu0 0.0
    %2824 = vmatpush1.msra.mxu0 0.0
    %2825 = vmatprep.subr.mxu0 0.0
    %2826 = vmatpush1.msra.mxu0 0.0
    %2827 = vmatprep.subr.mxu0 0.0
    %2828 = vmatpush1.msra.mxu0 0.0
    %2829 = vmatprep.subr.mxu0 0.0
    %2830 = vmatpush1.msra.mxu0 0.0
    %2831 = vmatprep.subr.mxu0 0.0
    %2832 = vmatpush1.msra.mxu0 0.0
    %2833 = vmatprep.subr.mxu0 0.0
    %2834 = vmatpush1.msra.mxu0 0.0
    %2835 = vmatprep.subr.mxu0 0.0
    %2836 = vmatpush1.msra.mxu0 0.0
    %2837 = vmatprep.subr.mxu0 0.0
    %2838 = vmatpush1.msra.mxu0 0.0
    %2839 = vmatprep.subr.mxu0 0.0
    %2840 = vmatpush1.msra.mxu0 0.0
    %2841 = vmatprep.subr.mxu0 0.0
    %2842 = vmatpush1.msra.mxu0 0.0
    %2843 = vmatprep.subr.mxu0 0.0
    %2844 = vmatpush1.msra.mxu0 0.0
    %2845 = vmatprep.subr.mxu0 0.0
    %2846 = vmatpush1.msra.mxu0 0.0
    %2847 = vmatprep.subr.mxu0 0.0
    %2848 = vmatpush1.msra.mxu0 0.0
    %2849 = vmatprep.subr.mxu0 0.0
    %2850 = vmatpush1.msra.mxu0 0.0
    %2851 = vmatprep.subr.mxu0 0.0
    %2852 = vmatpush1.msra.mxu0 0.0
    %2853 = vmatprep.subr.mxu0 0.0
    %2854 = vmatpush1.msra.mxu0 0.0
    %2855 = vmatprep.subr.mxu0 0.0
    %2856 = vmatpush1.msra.mxu0 0.0
    %2857 = vmatprep.subr.mxu0 0.0
    %2858 = vmatpush1.msra.mxu0 0.0
    %2859 = vmatprep.subr.mxu0 0.0
    %2860 = vmatpush1.msra.mxu0 0.0
    %2861 = vmatprep.subr.mxu0 0.0
    %2862 = vmatpush1.msra.mxu0 0.0
    %2863 = vmatprep.subr.mxu0 0.0
    %2864 = vmatpush1.msra.mxu0 0.0
    %2865 = vmatprep.subr.mxu0 0.0
    %2866 = vmatpush1.msra.mxu0 0.0
    %2867 = vmatprep.subr.mxu0 0.0
    %2868 = vmatpush1.msra.mxu0 0.0
    %2869 = vmatprep.subr.mxu0 0.0
    %2870 = vmatpush1.msra.mxu0 0.0
    %2871 = vmatprep.subr.mxu0 0.0
    %2872 = vmatpush1.msra.mxu0 0.0
    %2873 = vmatprep.subr.mxu0 0.0
    %2874 = vmatpush1.msra.mxu0 0.0
    %2875 = vmatprep.subr.mxu0 0.0
    %2876 = vmatpush1.msra.mxu0 0.0
    %2877 = vmatprep.subr.mxu0 0.0
    %2878 = vmatpush1.msra.mxu0 0.0
    %2879 = vmatprep.subr.mxu0 0.0
    %2880 = vmatpush1.msra.mxu0 0.0
    %2881 = vmatprep.subr.mxu0 0.0
    %2882 = vmatpush1.msra.mxu0 0.0
    %2883 = vmatprep.subr.mxu0 0.0
    %2884 = vmatpush1.msra.mxu0 0.0
    %2885 = vmatprep.mubr.f32.mxu0 0.0
    %2886 = vmatmul.mubr.f32.gmra.mrb[0].mxu0 %v2819
    %v2887 = vpop.f32.mrb[0].mxu0
    %v2888 = vadd.f32 0.0, %v2887
    %v2889 = vpop.f32.mrb[0].mxu0
    %2890 = vdwg.mxu0
    %v2891 = vrcp.pop %v2814
    %v2892 = vmul.f32 %v2888, %v2891
    %v2893 = vadd.f32 %v2793, %v2892
    %2894 = vset.pattern.permute.xlu0 3
    %2895 = vperm.xlu0 %2894, %v179
    %v2896 = vpop.permute.xlu0 %2895
    %v2898 = vlaneseq
    %v2899 = vshrl.u32 %v2898, 7
    %v2900 = vsub.s32 6, %v2899
    %v2901 = vrot.slane %v172, %v2900
    %v2902 = vadd.f32 %v2896, %v2901
    %v2903 = vmul.f32 %v2902, 0.2
    %v2904 = vmax.f32 %v2902, %v2903
    %v2905 = vadd.f32 %v2904, %v168
    %v2906 = vsel %vm195, %v2905, -inf
    %2907 = vmax.xlane.f32.xlu0 %v2906
    %v2908 = vpop.xlane.xlu0 %2907
    %v2909 = vsub.f32 %v2905, %v2908
    %v2910 = vmul.f32 %v2909, 1.442695
    %v2911 = vpow.pop %v2910
    %v2912 = vsel %vm195, %v2911, 0.0
    %2913 = vadd.xlane.f32.xlu0 %v2912
    %v2914 = vpop.xlane.xlu0 %2913
    %2915 = vrot.lane.b32.xlu0 %v156, 32
    %v2916 = vpop.permute.xlu0 %2915
    %v2919 = vsel %vm195, %v2911, 0
    %2921 = vmatprep.subr.mxu0 0.0
    %2922 = vmatpush1.msra.mxu0 %v2916
    %2923 = vmatprep.subr.mxu0 0.0
    %2924 = vmatpush1.msra.mxu0 0.0
    %2925 = vmatprep.subr.mxu0 0.0
    %2926 = vmatpush1.msra.mxu0 0.0
    %2927 = vmatprep.subr.mxu0 0.0
    %2928 = vmatpush1.msra.mxu0 0.0
    %2929 = vmatprep.subr.mxu0 0.0
    %2930 = vmatpush1.msra.mxu0 0.0
    %2931 = vmatprep.subr.mxu0 0.0
    %2932 = vmatpush1.msra.mxu0 0.0
    %2933 = vmatprep.subr.mxu0 0.0
    %2934 = vmatpush1.msra.mxu0 0.0
    %2935 = vmatprep.subr.mxu0 0.0
    %2936 = vmatpush1.msra.mxu0 0.0
    %2937 = vmatprep.subr.mxu0 0.0
    %2938 = vmatpush1.msra.mxu0 0.0
    %2939 = vmatprep.subr.mxu0 0.0
    %2940 = vmatpush1.msra.mxu0 0.0
    %2941 = vmatprep.subr.mxu0 0.0
    %2942 = vmatpush1.msra.mxu0 0.0
    %2943 = vmatprep.subr.mxu0 0.0
    %2944 = vmatpush1.msra.mxu0 0.0
    %2945 = vmatprep.subr.mxu0 0.0
    %2946 = vmatpush1.msra.mxu0 0.0
    %2947 = vmatprep.subr.mxu0 0.0
    %2948 = vmatpush1.msra.mxu0 0.0
    %2949 = vmatprep.subr.mxu0 0.0
    %2950 = vmatpush1.msra.mxu0 0.0
    %2951 = vmatprep.subr.mxu0 0.0
    %2952 = vmatpush1.msra.mxu0 0.0
    %2953 = vmatprep.subr.mxu0 0.0
    %2954 = vmatpush1.msra.mxu0 0.0
    %2955 = vmatprep.subr.mxu0 0.0
    %2956 = vmatpush1.msra.mxu0 0.0
    %2957 = vmatprep.subr.mxu0 0.0
    %2958 = vmatpush1.msra.mxu0 0.0
    %2959 = vmatprep.subr.mxu0 0.0
    %2960 = vmatpush1.msra.mxu0 0.0
    %2961 = vmatprep.subr.mxu0 0.0
    %2962 = vmatpush1.msra.mxu0 0.0
    %2963 = vmatprep.subr.mxu0 0.0
    %2964 = vmatpush1.msra.mxu0 0.0
    %2965 = vmatprep.subr.mxu0 0.0
    %2966 = vmatpush1.msra.mxu0 0.0
    %2967 = vmatprep.subr.mxu0 0.0
    %2968 = vmatpush1.msra.mxu0 0.0
    %2969 = vmatprep.subr.mxu0 0.0
    %2970 = vmatpush1.msra.mxu0 0.0
    %2971 = vmatprep.subr.mxu0 0.0
    %2972 = vmatpush1.msra.mxu0 0.0
    %2973 = vmatprep.subr.mxu0 0.0
    %2974 = vmatpush1.msra.mxu0 0.0
    %2975 = vmatprep.subr.mxu0 0.0
    %2976 = vmatpush1.msra.mxu0 0.0
    %2977 = vmatprep.subr.mxu0 0.0
    %2978 = vmatpush1.msra.mxu0 0.0
    %2979 = vmatprep.subr.mxu0 0.0
    %2980 = vmatpush1.msra.mxu0 0.0
    %2981 = vmatprep.subr.mxu0 0.0
    %2982 = vmatpush1.msra.mxu0 0.0
    %2983 = vmatprep.subr.mxu0 0.0
    %2984 = vmatpush1.msra.mxu0 0.0
    %2985 = vmatprep.mubr.f32.mxu0 0.0
    %2986 = vmatmul.mubr.f32.gmra.mrb[0].mxu0 %v2919
    %v2987 = vpop.f32.mrb[0].mxu0
    %v2988 = vadd.f32 0.0, %v2987
    %v2989 = vpop.f32.mrb[0].mxu0
    %2990 = vdwg.mxu0
    %v2991 = vrcp.pop %v2914
    %v2992 = vmul.f32 %v2988, %v2991
    %v2993 = vadd.f32 %v2893, %v2992
    %v2994 = vmul.f32 %v2993, 0.25
    %v2995 = vadd.f32 %v2994, %v587
    %2997 = vset.pattern.permute.xlu0 0
    %2998 = vperm.xlu0 %2997, %v180
    %v2999 = vpop.permute.xlu0 %2998
    %v3001 = vlaneseq
    %v3002 = vshrl.u32 %v3001, 7
    %v3003 = vsub.s32 7, %v3002
    %v3004 = vrot.slane %v169, %v3003
    %v3005 = vadd.f32 %v2999, %v3004
    %v3006 = vmul.f32 %v3005, 0.2
    %v3007 = vmax.f32 %v3005, %v3006
    %v3008 = vadd.f32 %v3007, %v168
    %v3009 = vsel %vm195, %v3008, -inf
    %3010 = vmax.xlane.f32.xlu0 %v3009
    %v3011 = vpop.xlane.xlu0 %3010
    %v3012 = vsub.f32 %v3008, %v3011
    %v3013 = vmul.f32 %v3012, 1.442695
    %v3014 = vpow.pop %v3013
    %v3015 = vsel %vm195, %v3014, 0.0
    %3016 = vadd.xlane.f32.xlu0 %v3015
    %v3017 = vpop.xlane.xlu0 %3016
    %v3019 = vsel %vm195, %v3014, 0
    %3021 = vmatprep.subr.mxu0 0.0
    %3022 = vmatpush1.msra.mxu0 %v161
    %3023 = vmatprep.subr.mxu0 0.0
    %3024 = vmatpush1.msra.mxu0 0.0
    %3025 = vmatprep.subr.mxu0 0.0
    %3026 = vmatpush1.msra.mxu0 0.0
    %3027 = vmatprep.subr.mxu0 0.0
    %3028 = vmatpush1.msra.mxu0 0.0
    %3029 = vmatprep.subr.mxu0 0.0
    %3030 = vmatpush1.msra.mxu0 0.0
    %3031 = vmatprep.subr.mxu0 0.0
    %3032 = vmatpush1.msra.mxu0 0.0
    %3033 = vmatprep.subr.mxu0 0.0
    %3034 = vmatpush1.msra.mxu0 0.0
    %3035 = vmatprep.subr.mxu0 0.0
    %3036 = vmatpush1.msra.mxu0 0.0
    %3037 = vmatprep.subr.mxu0 0.0
    %3038 = vmatpush1.msra.mxu0 0.0
    %3039 = vmatprep.subr.mxu0 0.0
    %3040 = vmatpush1.msra.mxu0 0.0
    %3041 = vmatprep.subr.mxu0 0.0
    %3042 = vmatpush1.msra.mxu0 0.0
    %3043 = vmatprep.subr.mxu0 0.0
    %3044 = vmatpush1.msra.mxu0 0.0
    %3045 = vmatprep.subr.mxu0 0.0
    %3046 = vmatpush1.msra.mxu0 0.0
    %3047 = vmatprep.subr.mxu0 0.0
    %3048 = vmatpush1.msra.mxu0 0.0
    %3049 = vmatprep.subr.mxu0 0.0
    %3050 = vmatpush1.msra.mxu0 0.0
    %3051 = vmatprep.subr.mxu0 0.0
    %3052 = vmatpush1.msra.mxu0 0.0
    %3053 = vmatprep.subr.mxu0 0.0
    %3054 = vmatpush1.msra.mxu0 0.0
    %3055 = vmatprep.subr.mxu0 0.0
    %3056 = vmatpush1.msra.mxu0 0.0
    %3057 = vmatprep.subr.mxu0 0.0
    %3058 = vmatpush1.msra.mxu0 0.0
    %3059 = vmatprep.subr.mxu0 0.0
    %3060 = vmatpush1.msra.mxu0 0.0
    %3061 = vmatprep.subr.mxu0 0.0
    %3062 = vmatpush1.msra.mxu0 0.0
    %3063 = vmatprep.subr.mxu0 0.0
    %3064 = vmatpush1.msra.mxu0 0.0
    %3065 = vmatprep.subr.mxu0 0.0
    %3066 = vmatpush1.msra.mxu0 0.0
    %3067 = vmatprep.subr.mxu0 0.0
    %3068 = vmatpush1.msra.mxu0 0.0
    %3069 = vmatprep.subr.mxu0 0.0
    %3070 = vmatpush1.msra.mxu0 0.0
    %3071 = vmatprep.subr.mxu0 0.0
    %3072 = vmatpush1.msra.mxu0 0.0
    %3073 = vmatprep.subr.mxu0 0.0
    %3074 = vmatpush1.msra.mxu0 0.0
    %3075 = vmatprep.subr.mxu0 0.0
    %3076 = vmatpush1.msra.mxu0 0.0
    %3077 = vmatprep.subr.mxu0 0.0
    %3078 = vmatpush1.msra.mxu0 0.0
    %3079 = vmatprep.subr.mxu0 0.0
    %3080 = vmatpush1.msra.mxu0 0.0
    %3081 = vmatprep.subr.mxu0 0.0
    %3082 = vmatpush1.msra.mxu0 0.0
    %3083 = vmatprep.subr.mxu0 0.0
    %3084 = vmatpush1.msra.mxu0 0.0
    %3085 = vmatprep.mubr.f32.mxu0 0.0
    %3086 = vmatmul.mubr.f32.gmra.mrb[0].mxu0 %v3019
    %v3087 = vpop.f32.mrb[0].mxu0
    %v3088 = vadd.f32 0.0, %v3087
    %v3089 = vpop.f32.mrb[0].mxu0
    %3090 = vdwg.mxu0
    %v3091 = vrcp.pop %v3017
    %v3092 = vmul.f32 %v3088, %v3091
    %v3093 = vadd.f32 %v3092, 0.0
    %3094 = vset.pattern.permute.xlu0 1
    %3095 = vperm.xlu0 %3094, %v180
    %v3096 = vpop.permute.xlu0 %3095
    %v3098 = vlaneseq
    %v3099 = vshrl.u32 %v3098, 7
    %v3100 = vsub.s32 7, %v3099
    %v3101 = vrot.slane %v170, %v3100
    %v3102 = vadd.f32 %v3096, %v3101
    %v3103 = vmul.f32 %v3102, 0.2
    %v3104 = vmax.f32 %v3102, %v3103
    %v3105 = vadd.f32 %v3104, %v168
    %v3106 = vsel %vm195, %v3105, -inf
    %3107 = vmax.xlane.f32.xlu0 %v3106
    %v3108 = vpop.xlane.xlu0 %3107
    %v3109 = vsub.f32 %v3105, %v3108
    %v3110 = vmul.f32 %v3109, 1.442695
    %v3111 = vpow.pop %v3110
    %v3112 = vsel %vm195, %v3111, 0.0
    %3113 = vadd.xlane.f32.xlu0 %v3112
    %v3114 = vpop.xlane.xlu0 %3113
    %3116 = vrot.lane.b32.xlu0 %v161, 96
    %v3117 = vpop.permute.xlu0 %3116
    %v3120 = vsel %vm195, %v3111, 0
    %3122 = vmatprep.subr.mxu0 0.0
    %3123 = vmatpush1.msra.mxu0 %v3117
    %3124 = vmatprep.subr.mxu0 0.0
    %3125 = vmatpush1.msra.mxu0 0.0
    %3126 = vmatprep.subr.mxu0 0.0
    %3127 = vmatpush1.msra.mxu0 0.0
    %3128 = vmatprep.subr.mxu0 0.0
    %3129 = vmatpush1.msra.mxu0 0.0
    %3130 = vmatprep.subr.mxu0 0.0
    %3131 = vmatpush1.msra.mxu0 0.0
    %3132 = vmatprep.subr.mxu0 0.0
    %3133 = vmatpush1.msra.mxu0 0.0
    %3134 = vmatprep.subr.mxu0 0.0
    %3135 = vmatpush1.msra.mxu0 0.0
    %3136 = vmatprep.subr.mxu0 0.0
    %3137 = vmatpush1.msra.mxu0 0.0
    %3138 = vmatprep.subr.mxu0 0.0
    %3139 = vmatpush1.msra.mxu0 0.0
    %3140 = vmatprep.subr.mxu0 0.0
    %3141 = vmatpush1.msra.mxu0 0.0
    %3142 = vmatprep.subr.mxu0 0.0
    %3143 = vmatpush1.msra.mxu0 0.0
    %3144 = vmatprep.subr.mxu0 0.0
    %3145 = vmatpush1.msra.mxu0 0.0
    %3146 = vmatprep.subr.mxu0 0.0
    %3147 = vmatpush1.msra.mxu0 0.0
    %3148 = vmatprep.subr.mxu0 0.0
    %3149 = vmatpush1.msra.mxu0 0.0
    %3150 = vmatprep.subr.mxu0 0.0
    %3151 = vmatpush1.msra.mxu0 0.0
    %3152 = vmatprep.subr.mxu0 0.0
    %3153 = vmatpush1.msra.mxu0 0.0
    %3154 = vmatprep.subr.mxu0 0.0
    %3155 = vmatpush1.msra.mxu0 0.0
    %3156 = vmatprep.subr.mxu0 0.0
    %3157 = vmatpush1.msra.mxu0 0.0
    %3158 = vmatprep.subr.mxu0 0.0
    %3159 = vmatpush1.msra.mxu0 0.0
    %3160 = vmatprep.subr.mxu0 0.0
    %3161 = vmatpush1.msra.mxu0 0.0
    %3162 = vmatprep.subr.mxu0 0.0
    %3163 = vmatpush1.msra.mxu0 0.0
    %3164 = vmatprep.subr.mxu0 0.0
    %3165 = vmatpush1.msra.mxu0 0.0
    %3166 = vmatprep.subr.mxu0 0.0
    %3167 = vmatpush1.msra.mxu0 0.0
    %3168 = vmatprep.subr.mxu0 0.0
    %3169 = vmatpush1.msra.mxu0 0.0
    %3170 = vmatprep.subr.mxu0 0.0
    %3171 = vmatpush1.msra.mxu0 0.0
    %3172 = vmatprep.subr.mxu0 0.0
    %3173 = vmatpush1.msra.mxu0 0.0
    %3174 = vmatprep.subr.mxu0 0.0
    %3175 = vmatpush1.msra.mxu0 0.0
    %3176 = vmatprep.subr.mxu0 0.0
    %3177 = vmatpush1.msra.mxu0 0.0
    %3178 = vmatprep.subr.mxu0 0.0
    %3179 = vmatpush1.msra.mxu0 0.0
    %3180 = vmatprep.subr.mxu0 0.0
    %3181 = vmatpush1.msra.mxu0 0.0
    %3182 = vmatprep.subr.mxu0 0.0
    %3183 = vmatpush1.msra.mxu0 0.0
    %3184 = vmatprep.subr.mxu0 0.0
    %3185 = vmatpush1.msra.mxu0 0.0
    %3186 = vmatprep.mubr.f32.mxu0 0.0
    %3187 = vmatmul.mubr.f32.gmra.mrb[0].mxu0 %v3120
    %v3188 = vpop.f32.mrb[0].mxu0
    %v3189 = vadd.f32 0.0, %v3188
    %v3190 = vpop.f32.mrb[0].mxu0
    %3191 = vdwg.mxu0
    %v3192 = vrcp.pop %v3114
    %v3193 = vmul.f32 %v3189, %v3192
    %v3194 = vadd.f32 %v3093, %v3193
    %3195 = vset.pattern.permute.xlu0 2
    %3196 = vperm.xlu0 %3195, %v180
    %v3197 = vpop.permute.xlu0 %3196
    %v3199 = vlaneseq
    %v3200 = vshrl.u32 %v3199, 7
    %v3201 = vsub.s32 7, %v3200
    %v3202 = vrot.slane %v171, %v3201
    %v3203 = vadd.f32 %v3197, %v3202
    %v3204 = vmul.f32 %v3203, 0.2
    %v3205 = vmax.f32 %v3203, %v3204
    %v3206 = vadd.f32 %v3205, %v168
    %v3207 = vsel %vm195, %v3206, -inf
    %3208 = vmax.xlane.f32.xlu0 %v3207
    %v3209 = vpop.xlane.xlu0 %3208
    %v3210 = vsub.f32 %v3206, %v3209
    %v3211 = vmul.f32 %v3210, 1.442695
    %v3212 = vpow.pop %v3211
    %v3213 = vsel %vm195, %v3212, 0.0
    %3214 = vadd.xlane.f32.xlu0 %v3213
    %v3215 = vpop.xlane.xlu0 %3214
    %3216 = vrot.lane.b32.xlu0 %v161, 64
    %v3217 = vpop.permute.xlu0 %3216
    %v3220 = vsel %vm195, %v3212, 0
    %3222 = vmatprep.subr.mxu0 0.0
    %3223 = vmatpush1.msra.mxu0 %v3217
    %3224 = vmatprep.subr.mxu0 0.0
    %3225 = vmatpush1.msra.mxu0 0.0
    %3226 = vmatprep.subr.mxu0 0.0
    %3227 = vmatpush1.msra.mxu0 0.0
    %3228 = vmatprep.subr.mxu0 0.0
    %3229 = vmatpush1.msra.mxu0 0.0
    %3230 = vmatprep.subr.mxu0 0.0
    %3231 = vmatpush1.msra.mxu0 0.0
    %3232 = vmatprep.subr.mxu0 0.0
    %3233 = vmatpush1.msra.mxu0 0.0
    %3234 = vmatprep.subr.mxu0 0.0
    %3235 = vmatpush1.msra.mxu0 0.0
    %3236 = vmatprep.subr.mxu0 0.0
    %3237 = vmatpush1.msra.mxu0 0.0
    %3238 = vmatprep.subr.mxu0 0.0
    %3239 = vmatpush1.msra.mxu0 0.0
    %3240 = vmatprep.subr.mxu0 0.0
    %3241 = vmatpush1.msra.mxu0 0.0
    %3242 = vmatprep.subr.mxu0 0.0
    %3243 = vmatpush1.msra.mxu0 0.0
    %3244 = vmatprep.subr.mxu0 0.0
    %3245 = vmatpush1.msra.mxu0 0.0
    %3246 = vmatprep.subr.mxu0 0.0
    %3247 = vmatpush1.msra.mxu0 0.0
    %3248 = vmatprep.subr.mxu0 0.0
    %3249 = vmatpush1.msra.mxu0 0.0
    %3250 = vmatprep.subr.mxu0 0.0
    %3251 = vmatpush1.msra.mxu0 0.0
    %3252 = vmatprep.subr.mxu0 0.0
    %3253 = vmatpush1.msra.mxu0 0.0
    %3254 = vmatprep.subr.mxu0 0.0
    %3255 = vmatpush1.msra.mxu0 0.0
    %3256 = vmatprep.subr.mxu0 0.0
    %3257 = vmatpush1.msra.mxu0 0.0
    %3258 = vmatprep.subr.mxu0 0.0
    %3259 = vmatpush1.msra.mxu0 0.0
    %3260 = vmatprep.subr.mxu0 0.0
    %3261 = vmatpush1.msra.mxu0 0.0
    %3262 = vmatprep.subr.mxu0 0.0
    %3263 = vmatpush1.msra.mxu0 0.0
    %3264 = vmatprep.subr.mxu0 0.0
    %3265 = vmatpush1.msra.mxu0 0.0
    %3266 = vmatprep.subr.mxu0 0.0
    %3267 = vmatpush1.msra.mxu0 0.0
    %3268 = vmatprep.subr.mxu0 0.0
    %3269 = vmatpush1.msra.mxu0 0.0
    %3270 = vmatprep.subr.mxu0 0.0
    %3271 = vmatpush1.msra.mxu0 0.0
    %3272 = vmatprep.subr.mxu0 0.0
    %3273 = vmatpush1.msra.mxu0 0.0
    %3274 = vmatprep.subr.mxu0 0.0
    %3275 = vmatpush1.msra.mxu0 0.0
    %3276 = vmatprep.subr.mxu0 0.0
    %3277 = vmatpush1.msra.mxu0 0.0
    %3278 = vmatprep.subr.mxu0 0.0
    %3279 = vmatpush1.msra.mxu0 0.0
    %3280 = vmatprep.subr.mxu0 0.0
    %3281 = vmatpush1.msra.mxu0 0.0
    %3282 = vmatprep.subr.mxu0 0.0
    %3283 = vmatpush1.msra.mxu0 0.0
    %3284 = vmatprep.subr.mxu0 0.0
    %3285 = vmatpush1.msra.mxu0 0.0
    %3286 = vmatprep.mubr.f32.mxu0 0.0
    %3287 = vmatmul.mubr.f32.gmra.mrb[0].mxu0 %v3220
    %v3288 = vpop.f32.mrb[0].mxu0
    %v3289 = vadd.f32 0.0, %v3288
    %v3290 = vpop.f32.mrb[0].mxu0
    %3291 = vdwg.mxu0
    %v3292 = vrcp.pop %v3215
    %v3293 = vmul.f32 %v3289, %v3292
    %v3294 = vadd.f32 %v3194, %v3293
    %3295 = vset.pattern.permute.xlu0 3
    %3296 = vperm.xlu0 %3295, %v180
    %v3297 = vpop.permute.xlu0 %3296
    %v3299 = vlaneseq
    %v3300 = vshrl.u32 %v3299, 7
    %v3301 = vsub.s32 7, %v3300
    %v3302 = vrot.slane %v172, %v3301
    %v3303 = vadd.f32 %v3297, %v3302
    %v3304 = vmul.f32 %v3303, 0.2
    %v3305 = vmax.f32 %v3303, %v3304
    %v3306 = vadd.f32 %v3305, %v168
    %v3307 = vsel %vm195, %v3306, -inf
    %3308 = vmax.xlane.f32.xlu0 %v3307
    %v3309 = vpop.xlane.xlu0 %3308
    %v3310 = vsub.f32 %v3306, %v3309
    %v3311 = vmul.f32 %v3310, 1.442695
    %v3312 = vpow.pop %v3311
    %v3313 = vsel %vm195, %v3312, 0.0
    %3314 = vadd.xlane.f32.xlu0 %v3313
    %v3315 = vpop.xlane.xlu0 %3314
    %3316 = vrot.lane.b32.xlu0 %v161, 32
    %v3317 = vpop.permute.xlu0 %3316
    %v3320 = vsel %vm195, %v3312, 0
    %3322 = vmatprep.subr.mxu0 0.0
    %3323 = vmatpush1.msra.mxu0 %v3317
    %3324 = vmatprep.subr.mxu0 0.0
    %3325 = vmatpush1.msra.mxu0 0.0
    %3326 = vmatprep.subr.mxu0 0.0
    %3327 = vmatpush1.msra.mxu0 0.0
    %3328 = vmatprep.subr.mxu0 0.0
    %3329 = vmatpush1.msra.mxu0 0.0
    %3330 = vmatprep.subr.mxu0 0.0
    %3331 = vmatpush1.msra.mxu0 0.0
    %3332 = vmatprep.subr.mxu0 0.0
    %3333 = vmatpush1.msra.mxu0 0.0
    %3334 = vmatprep.subr.mxu0 0.0
    %3335 = vmatpush1.msra.mxu0 0.0
    %3336 = vmatprep.subr.mxu0 0.0
    %3337 = vmatpush1.msra.mxu0 0.0
    %3338 = vmatprep.subr.mxu0 0.0
    %3339 = vmatpush1.msra.mxu0 0.0
    %3340 = vmatprep.subr.mxu0 0.0
    %3341 = vmatpush1.msra.mxu0 0.0
    %3342 = vmatprep.subr.mxu0 0.0
    %3343 = vmatpush1.msra.mxu0 0.0
    %3344 = vmatprep.subr.mxu0 0.0
    %3345 = vmatpush1.msra.mxu0 0.0
    %3346 = vmatprep.subr.mxu0 0.0
    %3347 = vmatpush1.msra.mxu0 0.0
    %3348 = vmatprep.subr.mxu0 0.0
    %3349 = vmatpush1.msra.mxu0 0.0
    %3350 = vmatprep.subr.mxu0 0.0
    %3351 = vmatpush1.msra.mxu0 0.0
    %3352 = vmatprep.subr.mxu0 0.0
    %3353 = vmatpush1.msra.mxu0 0.0
    %3354 = vmatprep.subr.mxu0 0.0
    %3355 = vmatpush1.msra.mxu0 0.0
    %3356 = vmatprep.subr.mxu0 0.0
    %3357 = vmatpush1.msra.mxu0 0.0
    %3358 = vmatprep.subr.mxu0 0.0
    %3359 = vmatpush1.msra.mxu0 0.0
    %3360 = vmatprep.subr.mxu0 0.0
    %3361 = vmatpush1.msra.mxu0 0.0
    %3362 = vmatprep.subr.mxu0 0.0
    %3363 = vmatpush1.msra.mxu0 0.0
    %3364 = vmatprep.subr.mxu0 0.0
    %3365 = vmatpush1.msra.mxu0 0.0
    %3366 = vmatprep.subr.mxu0 0.0
    %3367 = vmatpush1.msra.mxu0 0.0
    %3368 = vmatprep.subr.mxu0 0.0
    %3369 = vmatpush1.msra.mxu0 0.0
    %3370 = vmatprep.subr.mxu0 0.0
    %3371 = vmatpush1.msra.mxu0 0.0
    %3372 = vmatprep.subr.mxu0 0.0
    %3373 = vmatpush1.msra.mxu0 0.0
    %3374 = vmatprep.subr.mxu0 0.0
    %3375 = vmatpush1.msra.mxu0 0.0
    %3376 = vmatprep.subr.mxu0 0.0
    %3377 = vmatpush1.msra.mxu0 0.0
    %3378 = vmatprep.subr.mxu0 0.0
    %3379 = vmatpush1.msra.mxu0 0.0
    %3380 = vmatprep.subr.mxu0 0.0
    %3381 = vmatpush1.msra.mxu0 0.0
    %3382 = vmatprep.subr.mxu0 0.0
    %3383 = vmatpush1.msra.mxu0 0.0
    %3384 = vmatprep.subr.mxu0 0.0
    %3385 = vmatpush1.msra.mxu0 0.0
    %3386 = vmatprep.mubr.f32.mxu0 0.0
    %3387 = vmatmul.mubr.f32.gmra.mrb[0].mxu0 %v3320
    %v3388 = vpop.f32.mrb[0].mxu0
    %v3389 = vadd.f32 0.0, %v3388
    %v3390 = vpop.f32.mrb[0].mxu0
    %3391 = vdwg.mxu0
    %v3392 = vrcp.pop %v3315
    %v3393 = vmul.f32 %v3389, %v3392
    %v3394 = vadd.f32 %v3294, %v3393
    %v3395 = vmul.f32 %v3394, 0.25
    %v3396 = vadd.f32 %v3395, %v587
    %3398 = vrot.lane.b32.xlu0 %v990, 32
    %v3399 = vpop.permute.xlu0 %3398
    %3402 = vrot.lane.b32.xlu0 %v1391, 64
    %v3403 = vpop.permute.xlu0 %3402
    %3406 = vrot.lane.b32.xlu0 %v1792, 96
    %v3407 = vpop.permute.xlu0 %3406
    %3410 = vrot.lane.b32.xlu0 %v2594, 32
    %v3411 = vpop.permute.xlu0 %3410
    %3414 = vrot.lane.b32.xlu0 %v2995, 64
    %v3415 = vpop.permute.xlu0 %3414
    %3418 = vrot.lane.b32.xlu0 %v3396, 96
    %v3419 = vpop.permute.xlu0 %3418
    %vm3421 = vcmask 261120
    %v3422 = vsel %vm3421, %v589, %v3399
    %vm3423 = vcmask 523264
    %v3424 = vsel %vm3423, %v3422, %v3403
    %vm3425 = vcmask 785408
    %v3426 = vsel %vm3425, %v3424, %v3407
    %v3427 = vsel %vm3421, %v2193, %v3411
    %v3428 = vsel %vm3423, %v3427, %v3415
    %v3429 = vsel %vm3425, %v3428, %v3419
    %3430 = vst [vmem:[#allocation2] sm:$0xff] %v3426
    %3431 = vst [vmem:[#allocation2 + $0x8] sm:$0xff] %v3429
    // Predicated region
    $region26: #{tpu_custom_call.1} parent=1 // pred_check
      _
    $region27: #{tpu_custom_call.1} parent=1 // pred_check_branch
      %3433 = sbr.rel (0) target = $region29
    $region28: #{tpu_custom_call.1} parent=1 // pred_region
      %s3435 = ssub.s32 256, 256
      %3436 = vsyncadd [#allocation3], %s3435
      %s3438 = sshll.u32 [#allocation2], 4
      %s3439 = int_to_ptr.vmem [resolvable:$true] %s3438
      %3441 = dma.vmem_to_hbm [thread:$0]  %s3439, 256, %s6, [#allocation3]
    $region29: #{tpu_custom_call.1} parent=1 // pred_fallthru
      _
    // Predicated region
    $region30: #{tpu_custom_call.1} parent=1 // pred_check
      _
    $region31: #{tpu_custom_call.1} parent=1 // pred_check_branch
      %3443 = sbr.rel (0) target = $region33
    $region32: #{tpu_custom_call.1} parent=1 // pred_region
      %3444 = dma.done [#allocation3], 256
    $region33: #{tpu_custom_call.1} parent=1 // pred_fallthru
      _
    %3445 = vsyncpa [#allocation3], 1

</llo_original>
